<compile_context>
chip_gen: v7x
topology: tpu7x:2x2x1
jax: 0.10.0
libtpu: 0.0.40
codegen_flags: <defaults>
</compile_context>

<pallas_src>
import functools

import numpy as np

import jax
import jax.numpy as jnp
from jax.experimental import pallas as pl
from jax.experimental.pallas import tpu as pltpu

HIDDEN = 128          # LSTM hidden size (fixed by the module)
BN_EPS = 1e-5
MAX_BATCH_TILE = 256  # rows per grid step once batches get large


def _round_up(x, m):
    return ((x + m - 1) // m) * m


def _default_recurrent_bf16():
    """bf16 recurrent operands on v6e/v7x; plain f32 on v5e (no bf16 VALU and
    the recurrence is latency-bound, so bf16 only adds cast work there)."""
    try:
        kind = jax.devices()[0].device_kind.lower()
        return not ("v5 lite" in kind or "v5e" in kind)
    except Exception:  # pragma: no cover - be permissive off-TPU
        return True


# --------------------------------------------------------------------------
# Parameter folding + slab packing (runs ONCE, at build_forward time)
# --------------------------------------------------------------------------
def _pack_slab(entries, width):
    """Stack 2-D params row-wise into one (rows, width) f32 slab.  Each entry's
    row block starts at a multiple of 8 (sublane aligned) so in-kernel static
    slices never cross a (8,128) tile boundary."""
    offs, r = {}, 0
    for name, arr in entries:
        offs[name] = (r, int(arr.shape[0]), int(arr.shape[1]))
        r += _round_up(int(arr.shape[0]), 8)
    slab = jnp.zeros((_round_up(r, 8), width), jnp.float32)
    for name, arr in entries:
        r0, nr, nc = offs[name]
        slab = slab.at[r0:r0 + nr, :nc].set(arr.astype(jnp.float32))
    return slab, offs


def pack_params(params, recurrent_bf16):
    """Fold BN into the next Linear, collapse the degenerate attention,
    build the fused recurrent block matrix and pack two dense slabs."""
    H = HIDDEN
    E = int(params["w_out"].shape[0])        # fusion_input_dim (= 192)
    fusion_dim = int(params["wf1"].shape[1])
    out_dim = int(params["wf3"].shape[1])
    tab_dim = int(params["wt1"].shape[0])
    tab_out = int(params["wt2"].shape[1])    # 64

    # Only the text_dim == 0 layout (combined = [ts(128) | tab(64)]).
    # TODO(synk): optional text branch (text_dim > 0) not implemented.
    assert E == H + tab_out, "text branch (text_dim > 0) not supported"

    # ---- BatchNorm1d (eval) sits AFTER a ReLU -> fold into the NEXT Linear:
    #      BN(y) = y*a + c  =>  BN(y)@W + b = y@(a[:,None]*W) + (c@W + b).
    a1 = params["bn1_g"] * jax.lax.rsqrt(params["bn1_v"] + BN_EPS)
    c1 = params["bn1_b"] - params["bn1_m"] * a1
    wt2_f = params["wt2"] * a1.reshape(-1, 1)
    bt2_f = c1 @ params["wt2"] + params["bt2"]

    a2 = params["bn2_g"] * jax.lax.rsqrt(params["bn2_v"] + BN_EPS)
    c2 = params["bn2_b"] - params["bn2_m"] * a2
    wf2_f = params["wf2"] * a2.reshape(-1, 1)
    bf2_f = c2 @ params["wf2"] + params["bf2"]

    # ---- Length-1-sequence MultiheadAttention: softmax over a single key is
    #      1 for every head, so attended = out_proj(V).  Pre-multiply Wv@Wout
    #      and split its rows into ts/tab halves (no lane concat in-kernel).
    w_v = params["w_in"][:, 2 * E:3 * E]
    b_v = params["b_in"][:, 2 * E:3 * E]
    w_vo = w_v @ params["w_out"]
    b_vo = b_v @ params["w_out"] + params["b_out"]

    def pad_to(x, rows, cols):
        x = jnp.asarray(x, jnp.float32)
        return jnp.zeros((rows, cols), jnp.float32).at[:x.shape[0], :x.shape[1]].set(x)

    Ep = _round_up(E, 128)                   # 256
    Fp = _round_up(fusion_dim, 128)          # 256
    F2p = _round_up(fusion_dim // 2, 128)    # 128
    Op = _round_up(out_dim, 128)             # 128
    TAB_H = _round_up(int(params["wt1"].shape[1]), 128)   # 128
    TAB_O = _round_up(tab_out, 128)          # 128

    # ---- Fused recurrent block: [h0 | h1] @ [[W_hh0, W_ih1], [0, W_hh1]].
    w_rec = jnp.zeros((2 * H, 8 * H), jnp.float32)
    w_rec = w_rec.at[:H, :4 * H].set(params["w_hh0"].astype(jnp.float32))
    w_rec = w_rec.at[:H, 4 * H:].set(params["w_ih1"].astype(jnp.float32))
    w_rec = w_rec.at[H:, 4 * H:].set(params["w_hh1"].astype(jnp.float32))
    if recurrent_bf16:
        w_rec = w_rec.astype(jnp.bfloat16)   # pre-cast ONCE (no per-call casts)

    # ---- slab A: layer-0 input projection pieces (width 4H = 512) ----
    slab_a, offs_a = _pack_slab(
        [("w_ih0", params["w_ih0"]),
         ("b0", params["b0"]),
         ("b1", params["b1"])],
        width=4 * H)

    # ---- slab B: all dense weights, lane-padded to multiples of 128 ----
    entries_b = [
        ("wt1", pad_to(params["wt1"], tab_dim, TAB_H)),
        ("bt1", pad_to(params["bt1"], 1, TAB_H)),
        ("wt2", pad_to(wt2_f, TAB_H, TAB_O)),
        ("bt2", pad_to(bt2_f, 1, TAB_O)),
        ("w_vo_ts", pad_to(w_vo[:H, :], H, Ep)),
        ("w_vo_tab", pad_to(w_vo[H:, :], TAB_O, Ep)),
        ("b_vo", pad_to(b_vo, 1, Ep)),
        ("wf1", pad_to(params["wf1"], Ep, Fp)),
        ("bf1", pad_to(params["bf1"], 1, Fp)),
        ("wf2", pad_to(wf2_f, Fp, F2p)),
        ("bf2", pad_to(bf2_f, 1, F2p)),
        ("wf3", pad_to(params["wf3"], F2p, Op)),
        ("bf3", pad_to(params["bf3"], 1, Op)),
    ]
    slab_b, offs_b = _pack_slab(entries_b, width=max(Ep, Fp))

    packed = {"w_rec": w_rec, "slab_a": slab_a, "slab_b": slab_b}
    meta = {
        "offs_a": offs_a, "offs_b": offs_b,
        "out_dim": out_dim, "out_pad": Op,
        "dims": {"E_pad": Ep, "F_pad": Fp, "F2_pad": F2p, "O_pad": Op,
                 "tab_h": TAB_H, "tab_o": TAB_O},
    }
    return packed, meta


# --------------------------------------------------------------------------
# Kernel
# --------------------------------------------------------------------------
def _fusion_kernel(offs_a, offs_b, T, TB, recurrent_bf16,
                   ts_ref, tab_ref, wrec_ref, a_ref, b_ref, out_ref):
    H = HIDDEN

    def pa(name):                                    # static slice of slab A
        r0, nr, nc = offs_a[name]
        return a_ref[r0:r0 + nr, :nc]

    def pb(name):                                    # static slice of slab B
        r0, nr, nc = offs_b[name]
        return b_ref[r0:r0 + nr, :nc]

    def gates_to_hc(gates, c):
        # PyTorch gate order: i, f, g, o (all slices 128-lane aligned).
        i = jax.nn.sigmoid(gates[:, 0 * H:1 * H])
        f = jax.nn.sigmoid(gates[:, 1 * H:2 * H])
        g = jnp.tanh(gates[:, 2 * H:3 * H])
        o = jax.nn.sigmoid(gates[:, 3 * H:4 * H])
        c_new = f * c + i * g
        return o * jnp.tanh(c_new), c_new

    w_ih0 = pa("w_ih0")
    b0 = pa("b0")
    b1 = pa("b1")

    zeros = jnp.zeros((TB, H), jnp.float32)
    h0, c0 = zeros, zeros
    h1, c1 = zeros, zeros

    # Interleaved two-layer LSTM: combined step s advances layer 0 to time s
    # and layer 1 to time s-1 from ONE (TB, 2H) @ (2H, 8H) recurrent matmul
    # against [[W_hh0, W_ih1], [0, W_hh1]].  Serial chain ~T+1 matmuls.
    # T is small and static here; switch to lax.fori_loop with (h,c) carries
    # if T ever grows large (TODO(synk)).
    for s in range(T + 1):
        last = (s == T)
        if s > 0:
            h01 = jnp.concatenate([h0, h1], axis=1)            # (TB, 2H)
            if recurrent_bf16:
                h01 = h01.astype(jnp.bfloat16)                 # weights pre-cast
            w_rec = wrec_ref[:, 4 * H:] if last else wrec_ref[...]
            g = jnp.dot(h01, w_rec, preferred_element_type=jnp.float32)
            h1, c1 = gates_to_hc(g[:, -4 * H:] + b1, c1)       # layer 1, time s-1
        if not last:
            # Layer-0 input projection is independent of the recurrence, so it
            # overlaps with the wait on the previous recurrent matmul.
            gates0 = jnp.dot(ts_ref[s], w_ih0,
                             preferred_element_type=jnp.float32) + b0
            if s > 0:
                gates0 = gates0 + g[:, :4 * H]
            h0, c0 = gates_to_hc(gates0, c0)                   # layer 0, time s

    ts_features = h1                                           # h_n[-1], (TB, 128)

    # ---- Tabular encoder: Linear->ReLU->(BN folded into next Linear)->ReLU.
    #      Padded columns (64:128) stay exactly zero.
    t1 = jnp.maximum(
        jnp.dot(tab_ref[...], pb("wt1"),
                preferred_element_type=jnp.float32) + pb("bt1"), 0.0)
    tab_features = jnp.maximum(
        jnp.dot(t1, pb("wt2"),
                preferred_element_type=jnp.float32) + pb("bt2"), 0.0)   # (TB, 128)

    # ---- Degenerate length-1 self-attention: attended = out_proj(V);
    #      Wv@Wout pre-multiplied and split, all operands 128-lane aligned.
    attended = (jnp.dot(ts_features, pb("w_vo_ts"),
                        preferred_element_type=jnp.float32)
                + jnp.dot(tab_features, pb("w_vo_tab"),
                          preferred_element_type=jnp.float32)
                + pb("b_vo"))                                           # (TB, 256)

    # ---- Fusion MLP (BN2 folded into wf2/bf2; dropouts identity in eval) ----
    f1 = jnp.maximum(
        jnp.dot(attended, pb("wf1"),
                preferred_element_type=jnp.float32) + pb("bf1"), 0.0)
    f2 = jnp.maximum(
        jnp.dot(f1, pb("wf2"),
                preferred_element_type=jnp.float32) + pb("bf2"), 0.0)
    out = jnp.dot(f2, pb("wf3"),
                  preferred_element_type=jnp.float32) + pb("bf3")       # (TB, 128)
    out_ref[...] = out.astype(out_ref.dtype)                  # lane-dense store


# --------------------------------------------------------------------------
# Forward wrapper (jitted; parameter packing already done in build_forward)
# --------------------------------------------------------------------------
def _forward_impl(time_series, tabular, packed, *, meta, recurrent_bf16):
    H = HIDDEN
    B, T, D_ts = time_series.shape
    tab_dim = tabular.shape[1]
    Op = meta["out_pad"]
    dims = meta["dims"]

    # Batch tile: multiple of 8 sublanes, capped so per-tile VMEM stays small.
    TB = min(MAX_BATCH_TILE, max(_round_up(B, 8), 8))
    Bp = _round_up(B, TB)

    ts_p = jnp.zeros((Bp, T, D_ts), jnp.float32).at[:B].set(
        time_series.astype(jnp.float32))
    ts_tbd = jnp.transpose(ts_p, (1, 0, 2))          # (T, Bp, D_ts), t-major rows
    tab_p = jnp.zeros((Bp, tab_dim), jnp.float32).at[:B].set(
        tabular.astype(jnp.float32))

    kernel = functools.partial(_fusion_kernel, meta["offs_a"], meta["offs_b"],
                               T, TB, recurrent_bf16)

    flops = int(2 * Bp * (
        T * D_ts * 4 * H                       # layer-0 input projections
        + T * (2 * H) * (8 * H)                # fused recurrent matmuls
        + tab_dim * dims["tab_h"] + dims["tab_h"] * dims["tab_o"]
        + H * dims["E_pad"] + dims["tab_o"] * dims["E_pad"]
        + dims["E_pad"] * dims["F_pad"] + dims["F_pad"] * dims["F2_pad"]
        + dims["F2_pad"] * dims["O_pad"]))
    transcendentals = int(2 * T * Bp * 5 * H)  # 3 sigmoid + 2 tanh per cell/step
    bytes_accessed = int(
        ts_tbd.size * 4 + tab_p.size * 4 + Bp * Op * 4
        + sum(int(v.size) * v.dtype.itemsize for v in packed.values()))

    out = pl.pallas_call(
        kernel,
        out_shape=jax.ShapeDtypeStruct((Bp, Op), jnp.float32),
        grid_spec=pltpu.PrefetchScalarGridSpec(
            num_scalar_prefetch=0,
            grid=(Bp // TB,),
            in_specs=[
                pl.BlockSpec((T, TB, D_ts), lambda i: (0, i, 0)),
                pl.BlockSpec((TB, tab_dim), lambda i: (i, 0)),
                # Weights: constant block index -> DMA'd once, kept resident.
                pl.BlockSpec(packed["w_rec"].shape, lambda i: (0, 0)),
                pl.BlockSpec(packed["slab_a"].shape, lambda i: (0, 0)),
                pl.BlockSpec(packed["slab_b"].shape, lambda i: (0, 0)),
            ],
            out_specs=pl.BlockSpec((TB, Op), lambda i: (i, 0)),
        ),
        compiler_params=pltpu.CompilerParams(
            dimension_semantics=("parallel",),
            vmem_limit_bytes=32 * 1024 * 1024),
        cost_estimate=pl.CostEstimate(flops=flops,
                                      transcendentals=transcendentals,
                                      bytes_accessed=bytes_accessed),
    )(ts_tbd, tab_p, packed["w_rec"], packed["slab_a"], packed["slab_b"])
    return out[:B, :meta["out_dim"]]


def build_forward(params, recurrent_bf16=None):
    """Fold/pack parameters ONCE and return a jitted forward(ts, tab)."""
    if recurrent_bf16 is None:
        recurrent_bf16 = _default_recurrent_bf16()
    packed, meta = pack_params(params, recurrent_bf16)
    packed = jax.block_until_ready(packed)       # materialize packing now
    fwd = jax.jit(functools.partial(_forward_impl, meta=meta,
                                    recurrent_bf16=recurrent_bf16))
    return lambda time_series, tabular: fwd(time_series, tabular, packed)


# --------------------------------------------------------------------------
# Pure-JAX eval-mode reference (PyTorch module semantics) for validation
# --------------------------------------------------------------------------
def reference_forward(time_series, tabular, params):
    H = HIDDEN

    def lstm_layer(x, w_ih, w_hh, b):
        Bb = x.shape[0]
        h = jnp.zeros((Bb, H), jnp.float32)
        c = jnp.zeros((Bb, H), jnp.float32)
        hs = []
        for t in range(x.shape[1]):
            gates = x[:, t] @ w_ih + h @ w_hh + b
            i = jax.nn.sigmoid(gates[:, :H])
            f = jax.nn.sigmoid(gates[:, H:2 * H])
            g = jnp.tanh(gates[:, 2 * H:3 * H])
            o = jax.nn.sigmoid(gates[:, 3 * H:])
            c = f * c + i * g
            h = o * jnp.tanh(c)
            hs.append(h)
        return jnp.stack(hs, axis=1), h

    out0, _ = lstm_layer(time_series.astype(jnp.float32),
                         params["w_ih0"], params["w_hh0"], params["b0"])
    _, ts_features = lstm_layer(out0, params["w_ih1"], params["w_hh1"], params["b1"])

    def bn(y, g, b, m, v):
        return (y - m) * jax.lax.rsqrt(v + BN_EPS) * g + b

    t1 = jax.nn.relu(tabular @ params["wt1"] + params["bt1"])
    t1 = bn(t1, params["bn1_g"], params["bn1_b"], params["bn1_m"], params["bn1_v"])
    tab_features = jax.nn.relu(t1 @ params["wt2"] + params["bt2"])

    combined = jnp.concatenate([ts_features, tab_features], axis=1)
    E = combined.shape[1]
    # seq_len == 1: softmax over a single key is 1 per head -> out_proj(V).
    v = combined @ params["w_in"][:, 2 * E:] + params["b_in"][:, 2 * E:]
    attended = v @ params["w_out"] + params["b_out"]

    f1 = jax.nn.relu(attended @ params["wf1"] + params["bf1"])
    f1 = bn(f1, params["bn2_g"], params["bn2_b"], params["bn2_m"], params["bn2_v"])
    f2 = jax.nn.relu(f1 @ params["wf2"] + params["bf2"])
    return f2 @ params["wf3"] + params["bf3"]


# --------------------------------------------------------------------------
# Synthetic parameters matching the PyTorch module's shapes (stored (in, out))
# --------------------------------------------------------------------------
def _uniform(key, shape, fan_in):
    bound = 1.0 / jnp.sqrt(jnp.float32(fan_in))
    return jax.random.uniform(key, shape, jnp.float32, -bound, bound)


def init_params(key, ts_dim, tab_dim, fusion_dim=256, output_dim=1):
    H = HIDDEN
    E = H + 64                                  # fusion_input_dim (text_dim == 0)
    keys = iter(jax.random.split(key, 64))
    p = {}

    # LSTM layers 0 / 1 (biases pre-summed: b_ih + b_hh)
    p["w_ih0"] = _uniform(next(keys), (ts_dim, 4 * H), H)
    p["w_hh0"] = _uniform(next(keys), (H, 4 * H), H)
    p["b0"] = _uniform(next(keys), (1, 4 * H), H) + _uniform(next(keys), (1, 4 * H), H)
    p["w_ih1"] = _uniform(next(keys), (H, 4 * H), H)
    p["w_hh1"] = _uniform(next(keys), (H, 4 * H), H)
    p["b1"] = _uniform(next(keys), (1, 4 * H), H) + _uniform(next(keys), (1, 4 * H), H)

    # Tabular encoder
    p["wt1"] = _uniform(next(keys), (tab_dim, H), tab_dim)
    p["bt1"] = _uniform(next(keys), (1, H), tab_dim)
    p["bn1_g"] = jnp.ones((1, H), jnp.float32)
    p["bn1_b"] = jnp.zeros((1, H), jnp.float32)
    p["bn1_m"] = jnp.zeros((1, H), jnp.float32)
    p["bn1_v"] = jnp.ones((1, H), jnp.float32)
    p["wt2"] = _uniform(next(keys), (H, 64), H)
    p["bt2"] = _uniform(next(keys), (1, 64), H)

    # MultiheadAttention (embed_dim=192, 8 heads); in_proj is [Wq | Wk | Wv]
    p["w_in"] = _uniform(next(keys), (E, 3 * E), E)
    p["b_in"] = jnp.zeros((1, 3 * E), jnp.float32)
    p["w_out"] = _uniform(next(keys), (E, E), E)
    p["b_out"] = jnp.zeros((1, E), jnp.float32)

    # Fusion network
    p["wf1"] = _uniform(next(keys), (E, fusion_dim), E)
    p["bf1"] = _uniform(next(keys), (1, fusion_dim), E)
    p["bn2_g"] = jnp.ones((1, fusion_dim), jnp.float32)
    p["bn2_b"] = jnp.zeros((1, fusion_dim), jnp.float32)
    p["bn2_m"] = jnp.zeros((1, fusion_dim), jnp.float32)
    p["bn2_v"] = jnp.ones((1, fusion_dim), jnp.float32)
    p["wf2"] = _uniform(next(keys), (fusion_dim, fusion_dim // 2), fusion_dim)
    p["bf2"] = _uniform(next(keys), (1, fusion_dim // 2), fusion_dim)
    p["wf3"] = _uniform(next(keys), (fusion_dim // 2, output_dim), fusion_dim // 2)
    p["bf3"] = _uniform(next(keys), (1, output_dim), fusion_dim // 2)
    return p


if __name__ == "__main__":
    B, T = 4, 8
    TS_DIM, TAB_DIM = 16, 8
    FUSION_DIM, OUT_DIM = 256, 1

    key = jax.random.PRNGKey(0)
    k_ts, k_tab, k_params = jax.random.split(key, 3)
    time_series = jax.random.normal(k_ts, (B, T, TS_DIM), jnp.float32)
    tabular = jax.random.normal(k_tab, (B, TAB_DIM), jnp.float32)
    params = init_params(k_params, TS_DIM, TAB_DIM, FUSION_DIM, OUT_DIM)

    forward = build_forward(params)       # fold + pack parameters ONCE
    out = jax.block_until_ready(forward(time_series, tabular))
    assert out.shape == (B, OUT_DIM), out.shape
    assert bool(jnp.all(jnp.isfinite(out)))

    # Loose tolerance: bf16 recurrent operands (on v6e/v7x) and MXU matmul
    # precision differ slightly from the pure-JAX reference.
    ref = reference_forward(time_series, tabular, params)
    np.testing.assert_allclose(np.asarray(out), np.asarray(ref),
                               rtol=0.1, atol=0.1)
    print("KERNEL_OK")
</pallas_src>

<mosaic_0001>
module attributes {stable_mosaic.version = 11 : i64} {
  func.func @_fusion_kernel(%arg0: i32, %arg1: memref<8x8x16xf32, #tpu.memory_space<vmem>>, %arg2: memref<8x8xf32, #tpu.memory_space<vmem>>, %arg3: memref<256x1024xbf16, #tpu.memory_space<vmem>>, %arg4: memref<32x512xf32, #tpu.memory_space<vmem>>, %arg5: memref<1080x256xf32, #tpu.memory_space<vmem>>, %arg6: memref<8x128xf32, #tpu.memory_space<vmem>>) attributes {dimension_semantics = [#tpu.dimension_semantics<parallel>], iteration_bounds = array<i64: 1>, scalar_prefetch = 0 : i64, scratch_operands = 0 : i64, tpu.core_type = #tpu.core_type<tc>, window_params = [{transform_indices = @transform_0, window_bounds = array<i64: 8, 8, 16>}, {transform_indices = @transform_1, window_bounds = array<i64: 8, 8>}, {pipeline_mode = #tpu.pipeline_mode<synchronous>, transform_indices = @transform_2, window_bounds = array<i64: 256, 1024>}, {pipeline_mode = #tpu.pipeline_mode<synchronous>, transform_indices = @transform_3, window_bounds = array<i64: 32, 512>}, {pipeline_mode = #tpu.pipeline_mode<synchronous>, transform_indices = @transform_4, window_bounds = array<i64: 1080, 256>}, {transform_indices = @transform_5, window_bounds = array<i64: 8, 128>}]} {
    %c0 = arith.constant 0 : index
    %c0_0 = arith.constant 0 : index
    %0 = vector.load %arg4[%c0, %c0_0] : memref<32x512xf32, #tpu.memory_space<vmem>>, vector<16x512xf32>
    %c16 = arith.constant 16 : index
    %c0_1 = arith.constant 0 : index
    %1 = vector.load %arg4[%c16, %c0_1] : memref<32x512xf32, #tpu.memory_space<vmem>>, vector<1x512xf32>
    %c24 = arith.constant 24 : index
    %c0_2 = arith.constant 0 : index
    %2 = vector.load %arg4[%c24, %c0_2] : memref<32x512xf32, #tpu.memory_space<vmem>>, vector<1x512xf32>
    %cst = arith.constant 0.000000e+00 : f32
    %3 = vector.broadcast %cst : f32 to vector<8x128xf32>
    %c0_3 = arith.constant 0 : index
    %c0_4 = arith.constant 0 : index
    %c0_5 = arith.constant 0 : index
    %4 = vector.load %arg1[%c0_3, %c0_4, %c0_5] : memref<8x8x16xf32, #tpu.memory_space<vmem>>, vector<1x8x16xf32>
    %5 = vector.shape_cast %4 : vector<1x8x16xf32> to vector<8x16xf32>
    %cst_6 = arith.constant dense<0.000000e+00> : vector<8x512xf32>
    %6 = tpu.matmul %5, %0, %cst_6 {dimension_numbers = #tpu.dot_dimension_numbers<[1], [0], [0], [1], [0, 0, 1, 1], [], []>} : vector<8x16xf32>, vector<16x512xf32>, vector<8x512xf32> -> vector<8x512xf32>
    %7 = vector.broadcast %1 : vector<1x512xf32> to vector<8x512xf32>
    %8 = arith.addf %6, %7 : vector<8x512xf32>
    %9 = vector.extract_strided_slice %8 {offsets = [0, 0], sizes = [8, 128], strides = [1, 1]} : vector<8x512xf32> to vector<8x128xf32>
    %10 = arith.negf %9 : vector<8x128xf32>
    %11 = math.exp %10 : vector<8x128xf32>
    %cst_7 = arith.constant 1.000000e+00 : f32
    %12 = vector.broadcast %cst_7 : f32 to vector<8x128xf32>
    %13 = arith.addf %12, %11 : vector<8x128xf32>
    %14 = arith.divf %12, %13 : vector<8x128xf32>
    %15 = vector.extract_strided_slice %8 {offsets = [0, 128], sizes = [8, 128], strides = [1, 1]} : vector<8x512xf32> to vector<8x128xf32>
    %16 = arith.negf %15 : vector<8x128xf32>
    %17 = math.exp %16 : vector<8x128xf32>
    %cst_8 = arith.constant 1.000000e+00 : f32
    %18 = vector.broadcast %cst_8 : f32 to vector<8x128xf32>
    %19 = arith.addf %18, %17 : vector<8x128xf32>
    %20 = arith.divf %18, %19 : vector<8x128xf32>
    %21 = vector.extract_strided_slice %8 {offsets = [0, 256], sizes = [8, 128], strides = [1, 1]} : vector<8x512xf32> to vector<8x128xf32>
    %22 = math.tanh %21 : vector<8x128xf32>
    %23 = vector.extract_strided_slice %8 {offsets = [0, 384], sizes = [8, 128], strides = [1, 1]} : vector<8x512xf32> to vector<8x128xf32>
    %24 = arith.negf %23 : vector<8x128xf32>
    %25 = math.exp %24 : vector<8x128xf32>
    %cst_9 = arith.constant 1.000000e+00 : f32
    %26 = vector.broadcast %cst_9 : f32 to vector<8x128xf32>
    %27 = arith.addf %26, %25 : vector<8x128xf32>
    %28 = arith.divf %26, %27 : vector<8x128xf32>
    %29 = arith.mulf %20, %3 : vector<8x128xf32>
    %30 = arith.mulf %14, %22 : vector<8x128xf32>
    %31 = arith.addf %29, %30 : vector<8x128xf32>
    %32 = math.tanh %31 : vector<8x128xf32>
    %33 = arith.mulf %28, %32 : vector<8x128xf32>
    %34 = tpu.concatenate %33, %3 in 1 : vector<8x128xf32>, vector<8x128xf32> -> vector<8x256xf32>
    %35 = arith.truncf %34 : vector<8x256xf32> to vector<8x256xbf16>
    %c0_10 = arith.constant 0 : index
    %c0_11 = arith.constant 0 : index
    %36 = vector.load %arg3[%c0_10, %c0_11] : memref<256x1024xbf16, #tpu.memory_space<vmem>>, vector<256x1024xbf16>
    %cst_12 = arith.constant dense<0.000000e+00> : vector<8x1024xf32>
    %37 = tpu.matmul %35, %36, %cst_12 {dimension_numbers = #tpu.dot_dimension_numbers<[1], [0], [0], [1], [0, 0, 1, 1], [], []>} : vector<8x256xbf16>, vector<256x1024xbf16>, vector<8x1024xf32> -> vector<8x1024xf32>
    %38 = vector.extract_strided_slice %37 {offsets = [0, 512], sizes = [8, 512], strides = [1, 1]} : vector<8x1024xf32> to vector<8x512xf32>
    %39 = vector.broadcast %2 : vector<1x512xf32> to vector<8x512xf32>
    %40 = arith.addf %38, %39 : vector<8x512xf32>
    %41 = vector.extract_strided_slice %40 {offsets = [0, 0], sizes = [8, 128], strides = [1, 1]} : vector<8x512xf32> to vector<8x128xf32>
    %42 = arith.negf %41 : vector<8x128xf32>
    %43 = math.exp %42 : vector<8x128xf32>
    %cst_13 = arith.constant 1.000000e+00 : f32
    %44 = vector.broadcast %cst_13 : f32 to vector<8x128xf32>
    %45 = arith.addf %44, %43 : vector<8x128xf32>
    %46 = arith.divf %44, %45 : vector<8x128xf32>
    %47 = vector.extract_strided_slice %40 {offsets = [0, 128], sizes = [8, 128], strides = [1, 1]} : vector<8x512xf32> to vector<8x128xf32>
    %48 = arith.negf %47 : vector<8x128xf32>
    %49 = math.exp %48 : vector<8x128xf32>
    %cst_14 = arith.constant 1.000000e+00 : f32
    %50 = vector.broadcast %cst_14 : f32 to vector<8x128xf32>
    %51 = arith.addf %50, %49 : vector<8x128xf32>
    %52 = arith.divf %50, %51 : vector<8x128xf32>
    %53 = vector.extract_strided_slice %40 {offsets = [0, 256], sizes = [8, 128], strides = [1, 1]} : vector<8x512xf32> to vector<8x128xf32>
    %54 = math.tanh %53 : vector<8x128xf32>
    %55 = vector.extract_strided_slice %40 {offsets = [0, 384], sizes = [8, 128], strides = [1, 1]} : vector<8x512xf32> to vector<8x128xf32>
    %56 = arith.negf %55 : vector<8x128xf32>
    %57 = math.exp %56 : vector<8x128xf32>
    %cst_15 = arith.constant 1.000000e+00 : f32
    %58 = vector.broadcast %cst_15 : f32 to vector<8x128xf32>
    %59 = arith.addf %58, %57 : vector<8x128xf32>
    %60 = arith.divf %58, %59 : vector<8x128xf32>
    %61 = arith.mulf %52, %3 : vector<8x128xf32>
    %62 = arith.mulf %46, %54 : vector<8x128xf32>
    %63 = arith.addf %61, %62 : vector<8x128xf32>
    %64 = math.tanh %63 : vector<8x128xf32>
    %65 = arith.mulf %60, %64 : vector<8x128xf32>
    %c1 = arith.constant 1 : index
    %c0_16 = arith.constant 0 : index
    %c0_17 = arith.constant 0 : index
    %66 = vector.load %arg1[%c1, %c0_16, %c0_17] : memref<8x8x16xf32, #tpu.memory_space<vmem>>, vector<1x8x16xf32>
    %67 = vector.shape_cast %66 : vector<1x8x16xf32> to vector<8x16xf32>
    %cst_18 = arith.constant dense<0.000000e+00> : vector<8x512xf32>
    %68 = tpu.matmul %67, %0, %cst_18 {dimension_numbers = #tpu.dot_dimension_numbers<[1], [0], [0], [1], [0, 0, 1, 1], [], []>} : vector<8x16xf32>, vector<16x512xf32>, vector<8x512xf32> -> vector<8x512xf32>
    %69 = vector.broadcast %1 : vector<1x512xf32> to vector<8x512xf32>
    %70 = arith.addf %68, %69 : vector<8x512xf32>
    %71 = vector.extract_strided_slice %37 {offsets = [0, 0], sizes = [8, 512], strides = [1, 1]} : vector<8x1024xf32> to vector<8x512xf32>
    %72 = arith.addf %70, %71 : vector<8x512xf32>
    %73 = vector.extract_strided_slice %72 {offsets = [0, 0], sizes = [8, 128], strides = [1, 1]} : vector<8x512xf32> to vector<8x128xf32>
    %74 = arith.negf %73 : vector<8x128xf32>
    %75 = math.exp %74 : vector<8x128xf32>
    %cst_19 = arith.constant 1.000000e+00 : f32
    %76 = vector.broadcast %cst_19 : f32 to vector<8x128xf32>
    %77 = arith.addf %76, %75 : vector<8x128xf32>
    %78 = arith.divf %76, %77 : vector<8x128xf32>
    %79 = vector.extract_strided_slice %72 {offsets = [0, 128], sizes = [8, 128], strides = [1, 1]} : vector<8x512xf32> to vector<8x128xf32>
    %80 = arith.negf %79 : vector<8x128xf32>
    %81 = math.exp %80 : vector<8x128xf32>
    %cst_20 = arith.constant 1.000000e+00 : f32
    %82 = vector.broadcast %cst_20 : f32 to vector<8x128xf32>
    %83 = arith.addf %82, %81 : vector<8x128xf32>
    %84 = arith.divf %82, %83 : vector<8x128xf32>
    %85 = vector.extract_strided_slice %72 {offsets = [0, 256], sizes = [8, 128], strides = [1, 1]} : vector<8x512xf32> to vector<8x128xf32>
    %86 = math.tanh %85 : vector<8x128xf32>
    %87 = vector.extract_strided_slice %72 {offsets = [0, 384], sizes = [8, 128], strides = [1, 1]} : vector<8x512xf32> to vector<8x128xf32>
    %88 = arith.negf %87 : vector<8x128xf32>
    %89 = math.exp %88 : vector<8x128xf32>
    %cst_21 = arith.constant 1.000000e+00 : f32
    %90 = vector.broadcast %cst_21 : f32 to vector<8x128xf32>
    %91 = arith.addf %90, %89 : vector<8x128xf32>
    %92 = arith.divf %90, %91 : vector<8x128xf32>
    %93 = arith.mulf %84, %31 : vector<8x128xf32>
    %94 = arith.mulf %78, %86 : vector<8x128xf32>
    %95 = arith.addf %93, %94 : vector<8x128xf32>
    %96 = math.tanh %95 : vector<8x128xf32>
    %97 = arith.mulf %92, %96 : vector<8x128xf32>
    %98 = tpu.concatenate %97, %65 in 1 : vector<8x128xf32>, vector<8x128xf32> -> vector<8x256xf32>
    %99 = arith.truncf %98 : vector<8x256xf32> to vector<8x256xbf16>
    %c0_22 = arith.constant 0 : index
    %c0_23 = arith.constant 0 : index
    %100 = vector.load %arg3[%c0_22, %c0_23] : memref<256x1024xbf16, #tpu.memory_space<vmem>>, vector<256x1024xbf16>
    %cst_24 = arith.constant dense<0.000000e+00> : vector<8x1024xf32>
    %101 = tpu.matmul %99, %100, %cst_24 {dimension_numbers = #tpu.dot_dimension_numbers<[1], [0], [0], [1], [0, 0, 1, 1], [], []>} : vector<8x256xbf16>, vector<256x1024xbf16>, vector<8x1024xf32> -> vector<8x1024xf32>
    %102 = vector.extract_strided_slice %101 {offsets = [0, 512], sizes = [8, 512], strides = [1, 1]} : vector<8x1024xf32> to vector<8x512xf32>
    %103 = vector.broadcast %2 : vector<1x512xf32> to vector<8x512xf32>
    %104 = arith.addf %102, %103 : vector<8x512xf32>
    %105 = vector.extract_strided_slice %104 {offsets = [0, 0], sizes = [8, 128], strides = [1, 1]} : vector<8x512xf32> to vector<8x128xf32>
    %106 = arith.negf %105 : vector<8x128xf32>
    %107 = math.exp %106 : vector<8x128xf32>
    %cst_25 = arith.constant 1.000000e+00 : f32
    %108 = vector.broadcast %cst_25 : f32 to vector<8x128xf32>
    %109 = arith.addf %108, %107 : vector<8x128xf32>
    %110 = arith.divf %108, %109 : vector<8x128xf32>
    %111 = vector.extract_strided_slice %104 {offsets = [0, 128], sizes = [8, 128], strides = [1, 1]} : vector<8x512xf32> to vector<8x128xf32>
    %112 = arith.negf %111 : vector<8x128xf32>
    %113 = math.exp %112 : vector<8x128xf32>
    %cst_26 = arith.constant 1.000000e+00 : f32
    %114 = vector.broadcast %cst_26 : f32 to vector<8x128xf32>
    %115 = arith.addf %114, %113 : vector<8x128xf32>
    %116 = arith.divf %114, %115 : vector<8x128xf32>
    %117 = vector.extract_strided_slice %104 {offsets = [0, 256], sizes = [8, 128], strides = [1, 1]} : vector<8x512xf32> to vector<8x128xf32>
    %118 = math.tanh %117 : vector<8x128xf32>
    %119 = vector.extract_strided_slice %104 {offsets = [0, 384], sizes = [8, 128], strides = [1, 1]} : vector<8x512xf32> to vector<8x128xf32>
    %120 = arith.negf %119 : vector<8x128xf32>
    %121 = math.exp %120 : vector<8x128xf32>
    %cst_27 = arith.constant 1.000000e+00 : f32
    %122 = vector.broadcast %cst_27 : f32 to vector<8x128xf32>
    %123 = arith.addf %122, %121 : vector<8x128xf32>
    %124 = arith.divf %122, %123 : vector<8x128xf32>
    %125 = arith.mulf %116, %63 : vector<8x128xf32>
    %126 = arith.mulf %110, %118 : vector<8x128xf32>
    %127 = arith.addf %125, %126 : vector<8x128xf32>
    %128 = math.tanh %127 : vector<8x128xf32>
    %129 = arith.mulf %124, %128 : vector<8x128xf32>
    %c2 = arith.constant 2 : index
    %c0_28 = arith.constant 0 : index
    %c0_29 = arith.constant 0 : index
    %130 = vector.load %arg1[%c2, %c0_28, %c0_29] : memref<8x8x16xf32, #tpu.memory_space<vmem>>, vector<1x8x16xf32>
    %131 = vector.shape_cast %130 : vector<1x8x16xf32> to vector<8x16xf32>
    %cst_30 = arith.constant dense<0.000000e+00> : vector<8x512xf32>
    %132 = tpu.matmul %131, %0, %cst_30 {dimension_numbers = #tpu.dot_dimension_numbers<[1], [0], [0], [1], [0, 0, 1, 1], [], []>} : vector<8x16xf32>, vector<16x512xf32>, vector<8x512xf32> -> vector<8x512xf32>
    %133 = vector.broadcast %1 : vector<1x512xf32> to vector<8x512xf32>
    %134 = arith.addf %132, %133 : vector<8x512xf32>
    %135 = vector.extract_strided_slice %101 {offsets = [0, 0], sizes = [8, 512], strides = [1, 1]} : vector<8x1024xf32> to vector<8x512xf32>
    %136 = arith.addf %134, %135 : vector<8x512xf32>
    %137 = vector.extract_strided_slice %136 {offsets = [0, 0], sizes = [8, 128], strides = [1, 1]} : vector<8x512xf32> to vector<8x128xf32>
    %138 = arith.negf %137 : vector<8x128xf32>
    %139 = math.exp %138 : vector<8x128xf32>
    %cst_31 = arith.constant 1.000000e+00 : f32
    %140 = vector.broadcast %cst_31 : f32 to vector<8x128xf32>
    %141 = arith.addf %140, %139 : vector<8x128xf32>
    %142 = arith.divf %140, %141 : vector<8x128xf32>
    %143 = vector.extract_strided_slice %136 {offsets = [0, 128], sizes = [8, 128], strides = [1, 1]} : vector<8x512xf32> to vector<8x128xf32>
    %144 = arith.negf %143 : vector<8x128xf32>
    %145 = math.exp %144 : vector<8x128xf32>
    %cst_32 = arith.constant 1.000000e+00 : f32
    %146 = vector.broadcast %cst_32 : f32 to vector<8x128xf32>
    %147 = arith.addf %146, %145 : vector<8x128xf32>
    %148 = arith.divf %146, %147 : vector<8x128xf32>
    %149 = vector.extract_strided_slice %136 {offsets = [0, 256], sizes = [8, 128], strides = [1, 1]} : vector<8x512xf32> to vector<8x128xf32>
    %150 = math.tanh %149 : vector<8x128xf32>
    %151 = vector.extract_strided_slice %136 {offsets = [0, 384], sizes = [8, 128], strides = [1, 1]} : vector<8x512xf32> to vector<8x128xf32>
    %152 = arith.negf %151 : vector<8x128xf32>
    %153 = math.exp %152 : vector<8x128xf32>
    %cst_33 = arith.constant 1.000000e+00 : f32
    %154 = vector.broadcast %cst_33 : f32 to vector<8x128xf32>
    %155 = arith.addf %154, %153 : vector<8x128xf32>
    %156 = arith.divf %154, %155 : vector<8x128xf32>
    %157 = arith.mulf %148, %95 : vector<8x128xf32>
    %158 = arith.mulf %142, %150 : vector<8x128xf32>
    %159 = arith.addf %157, %158 : vector<8x128xf32>
    %160 = math.tanh %159 : vector<8x128xf32>
    %161 = arith.mulf %156, %160 : vector<8x128xf32>
    %162 = tpu.concatenate %161, %129 in 1 : vector<8x128xf32>, vector<8x128xf32> -> vector<8x256xf32>
    %163 = arith.truncf %162 : vector<8x256xf32> to vector<8x256xbf16>
    %c0_34 = arith.constant 0 : index
    %c0_35 = arith.constant 0 : index
    %164 = vector.load %arg3[%c0_34, %c0_35] : memref<256x1024xbf16, #tpu.memory_space<vmem>>, vector<256x1024xbf16>
    %cst_36 = arith.constant dense<0.000000e+00> : vector<8x1024xf32>
    %165 = tpu.matmul %163, %164, %cst_36 {dimension_numbers = #tpu.dot_dimension_numbers<[1], [0], [0], [1], [0, 0, 1, 1], [], []>} : vector<8x256xbf16>, vector<256x1024xbf16>, vector<8x1024xf32> -> vector<8x1024xf32>
    %166 = vector.extract_strided_slice %165 {offsets = [0, 512], sizes = [8, 512], strides = [1, 1]} : vector<8x1024xf32> to vector<8x512xf32>
    %167 = vector.broadcast %2 : vector<1x512xf32> to vector<8x512xf32>
    %168 = arith.addf %166, %167 : vector<8x512xf32>
    %169 = vector.extract_strided_slice %168 {offsets = [0, 0], sizes = [8, 128], strides = [1, 1]} : vector<8x512xf32> to vector<8x128xf32>
    %170 = arith.negf %169 : vector<8x128xf32>
    %171 = math.exp %170 : vector<8x128xf32>
    %cst_37 = arith.constant 1.000000e+00 : f32
    %172 = vector.broadcast %cst_37 : f32 to vector<8x128xf32>
    %173 = arith.addf %172, %171 : vector<8x128xf32>
    %174 = arith.divf %172, %173 : vector<8x128xf32>
    %175 = vector.extract_strided_slice %168 {offsets = [0, 128], sizes = [8, 128], strides = [1, 1]} : vector<8x512xf32> to vector<8x128xf32>
    %176 = arith.negf %175 : vector<8x128xf32>
    %177 = math.exp %176 : vector<8x128xf32>
    %cst_38 = arith.constant 1.000000e+00 : f32
    %178 = vector.broadcast %cst_38 : f32 to vector<8x128xf32>
    %179 = arith.addf %178, %177 : vector<8x128xf32>
    %180 = arith.divf %178, %179 : vector<8x128xf32>
    %181 = vector.extract_strided_slice %168 {offsets = [0, 256], sizes = [8, 128], strides = [1, 1]} : vector<8x512xf32> to vector<8x128xf32>
    %182 = math.tanh %181 : vector<8x128xf32>
    %183 = vector.extract_strided_slice %168 {offsets = [0, 384], sizes = [8, 128], strides = [1, 1]} : vector<8x512xf32> to vector<8x128xf32>
    %184 = arith.negf %183 : vector<8x128xf32>
    %185 = math.exp %184 : vector<8x128xf32>
    %cst_39 = arith.constant 1.000000e+00 : f32
    %186 = vector.broadcast %cst_39 : f32 to vector<8x128xf32>
    %187 = arith.addf %186, %185 : vector<8x128xf32>
    %188 = arith.divf %186, %187 : vector<8x128xf32>
    %189 = arith.mulf %180, %127 : vector<8x128xf32>
    %190 = arith.mulf %174, %182 : vector<8x128xf32>
    %191 = arith.addf %189, %190 : vector<8x128xf32>
    %192 = math.tanh %191 : vector<8x128xf32>
    %193 = arith.mulf %188, %192 : vector<8x128xf32>
    %c3 = arith.constant 3 : index
    %c0_40 = arith.constant 0 : index
    %c0_41 = arith.constant 0 : index
    %194 = vector.load %arg1[%c3, %c0_40, %c0_41] : memref<8x8x16xf32, #tpu.memory_space<vmem>>, vector<1x8x16xf32>
    %195 = vector.shape_cast %194 : vector<1x8x16xf32> to vector<8x16xf32>
    %cst_42 = arith.constant dense<0.000000e+00> : vector<8x512xf32>
    %196 = tpu.matmul %195, %0, %cst_42 {dimension_numbers = #tpu.dot_dimension_numbers<[1], [0], [0], [1], [0, 0, 1, 1], [], []>} : vector<8x16xf32>, vector<16x512xf32>, vector<8x512xf32> -> vector<8x512xf32>
    %197 = vector.broadcast %1 : vector<1x512xf32> to vector<8x512xf32>
    %198 = arith.addf %196, %197 : vector<8x512xf32>
    %199 = vector.extract_strided_slice %165 {offsets = [0, 0], sizes = [8, 512], strides = [1, 1]} : vector<8x1024xf32> to vector<8x512xf32>
    %200 = arith.addf %198, %199 : vector<8x512xf32>
    %201 = vector.extract_strided_slice %200 {offsets = [0, 0], sizes = [8, 128], strides = [1, 1]} : vector<8x512xf32> to vector<8x128xf32>
    %202 = arith.negf %201 : vector<8x128xf32>
    %203 = math.exp %202 : vector<8x128xf32>
    %cst_43 = arith.constant 1.000000e+00 : f32
    %204 = vector.broadcast %cst_43 : f32 to vector<8x128xf32>
    %205 = arith.addf %204, %203 : vector<8x128xf32>
    %206 = arith.divf %204, %205 : vector<8x128xf32>
    %207 = vector.extract_strided_slice %200 {offsets = [0, 128], sizes = [8, 128], strides = [1, 1]} : vector<8x512xf32> to vector<8x128xf32>
    %208 = arith.negf %207 : vector<8x128xf32>
    %209 = math.exp %208 : vector<8x128xf32>
    %cst_44 = arith.constant 1.000000e+00 : f32
    %210 = vector.broadcast %cst_44 : f32 to vector<8x128xf32>
    %211 = arith.addf %210, %209 : vector<8x128xf32>
    %212 = arith.divf %210, %211 : vector<8x128xf32>
    %213 = vector.extract_strided_slice %200 {offsets = [0, 256], sizes = [8, 128], strides = [1, 1]} : vector<8x512xf32> to vector<8x128xf32>
    %214 = math.tanh %213 : vector<8x128xf32>
    %215 = vector.extract_strided_slice %200 {offsets = [0, 384], sizes = [8, 128], strides = [1, 1]} : vector<8x512xf32> to vector<8x128xf32>
    %216 = arith.negf %215 : vector<8x128xf32>
    %217 = math.exp %216 : vector<8x128xf32>
    %cst_45 = arith.constant 1.000000e+00 : f32
    %218 = vector.broadcast %cst_45 : f32 to vector<8x128xf32>
    %219 = arith.addf %218, %217 : vector<8x128xf32>
    %220 = arith.divf %218, %219 : vector<8x128xf32>
    %221 = arith.mulf %212, %159 : vector<8x128xf32>
    %222 = arith.mulf %206, %214 : vector<8x128xf32>
    %223 = arith.addf %221, %222 : vector<8x128xf32>
    %224 = math.tanh %223 : vector<8x128xf32>
    %225 = arith.mulf %220, %224 : vector<8x128xf32>
    %226 = tpu.concatenate %225, %193 in 1 : vector<8x128xf32>, vector<8x128xf32> -> vector<8x256xf32>
    %227 = arith.truncf %226 : vector<8x256xf32> to vector<8x256xbf16>
    %c0_46 = arith.constant 0 : index
    %c0_47 = arith.constant 0 : index
    %228 = vector.load %arg3[%c0_46, %c0_47] : memref<256x1024xbf16, #tpu.memory_space<vmem>>, vector<256x1024xbf16>
    %cst_48 = arith.constant dense<0.000000e+00> : vector<8x1024xf32>
    %229 = tpu.matmul %227, %228, %cst_48 {dimension_numbers = #tpu.dot_dimension_numbers<[1], [0], [0], [1], [0, 0, 1, 1], [], []>} : vector<8x256xbf16>, vector<256x1024xbf16>, vector<8x1024xf32> -> vector<8x1024xf32>
    %230 = vector.extract_strided_slice %229 {offsets = [0, 512], sizes = [8, 512], strides = [1, 1]} : vector<8x1024xf32> to vector<8x512xf32>
    %231 = vector.broadcast %2 : vector<1x512xf32> to vector<8x512xf32>
    %232 = arith.addf %230, %231 : vector<8x512xf32>
    %233 = vector.extract_strided_slice %232 {offsets = [0, 0], sizes = [8, 128], strides = [1, 1]} : vector<8x512xf32> to vector<8x128xf32>
    %234 = arith.negf %233 : vector<8x128xf32>
    %235 = math.exp %234 : vector<8x128xf32>
    %cst_49 = arith.constant 1.000000e+00 : f32
    %236 = vector.broadcast %cst_49 : f32 to vector<8x128xf32>
    %237 = arith.addf %236, %235 : vector<8x128xf32>
    %238 = arith.divf %236, %237 : vector<8x128xf32>
    %239 = vector.extract_strided_slice %232 {offsets = [0, 128], sizes = [8, 128], strides = [1, 1]} : vector<8x512xf32> to vector<8x128xf32>
    %240 = arith.negf %239 : vector<8x128xf32>
    %241 = math.exp %240 : vector<8x128xf32>
    %cst_50 = arith.constant 1.000000e+00 : f32
    %242 = vector.broadcast %cst_50 : f32 to vector<8x128xf32>
    %243 = arith.addf %242, %241 : vector<8x128xf32>
    %244 = arith.divf %242, %243 : vector<8x128xf32>
    %245 = vector.extract_strided_slice %232 {offsets = [0, 256], sizes = [8, 128], strides = [1, 1]} : vector<8x512xf32> to vector<8x128xf32>
    %246 = math.tanh %245 : vector<8x128xf32>
    %247 = vector.extract_strided_slice %232 {offsets = [0, 384], sizes = [8, 128], strides = [1, 1]} : vector<8x512xf32> to vector<8x128xf32>
    %248 = arith.negf %247 : vector<8x128xf32>
    %249 = math.exp %248 : vector<8x128xf32>
    %cst_51 = arith.constant 1.000000e+00 : f32
    %250 = vector.broadcast %cst_51 : f32 to vector<8x128xf32>
    %251 = arith.addf %250, %249 : vector<8x128xf32>
    %252 = arith.divf %250, %251 : vector<8x128xf32>
    %253 = arith.mulf %244, %191 : vector<8x128xf32>
    %254 = arith.mulf %238, %246 : vector<8x128xf32>
    %255 = arith.addf %253, %254 : vector<8x128xf32>
    %256 = math.tanh %255 : vector<8x128xf32>
    %257 = arith.mulf %252, %256 : vector<8x128xf32>
    %c4 = arith.constant 4 : index
    %c0_52 = arith.constant 0 : index
    %c0_53 = arith.constant 0 : index
    %258 = vector.load %arg1[%c4, %c0_52, %c0_53] : memref<8x8x16xf32, #tpu.memory_space<vmem>>, vector<1x8x16xf32>
    %259 = vector.shape_cast %258 : vector<1x8x16xf32> to vector<8x16xf32>
    %cst_54 = arith.constant dense<0.000000e+00> : vector<8x512xf32>
    %260 = tpu.matmul %259, %0, %cst_54 {dimension_numbers = #tpu.dot_dimension_numbers<[1], [0], [0], [1], [0, 0, 1, 1], [], []>} : vector<8x16xf32>, vector<16x512xf32>, vector<8x512xf32> -> vector<8x512xf32>
    %261 = vector.broadcast %1 : vector<1x512xf32> to vector<8x512xf32>
    %262 = arith.addf %260, %261 : vector<8x512xf32>
    %263 = vector.extract_strided_slice %229 {offsets = [0, 0], sizes = [8, 512], strides = [1, 1]} : vector<8x1024xf32> to vector<8x512xf32>
    %264 = arith.addf %262, %263 : vector<8x512xf32>
    %265 = vector.extract_strided_slice %264 {offsets = [0, 0], sizes = [8, 128], strides = [1, 1]} : vector<8x512xf32> to vector<8x128xf32>
    %266 = arith.negf %265 : vector<8x128xf32>
    %267 = math.exp %266 : vector<8x128xf32>
    %cst_55 = arith.constant 1.000000e+00 : f32
    %268 = vector.broadcast %cst_55 : f32 to vector<8x128xf32>
    %269 = arith.addf %268, %267 : vector<8x128xf32>
    %270 = arith.divf %268, %269 : vector<8x128xf32>
    %271 = vector.extract_strided_slice %264 {offsets = [0, 128], sizes = [8, 128], strides = [1, 1]} : vector<8x512xf32> to vector<8x128xf32>
    %272 = arith.negf %271 : vector<8x128xf32>
    %273 = math.exp %272 : vector<8x128xf32>
    %cst_56 = arith.constant 1.000000e+00 : f32
    %274 = vector.broadcast %cst_56 : f32 to vector<8x128xf32>
    %275 = arith.addf %274, %273 : vector<8x128xf32>
    %276 = arith.divf %274, %275 : vector<8x128xf32>
    %277 = vector.extract_strided_slice %264 {offsets = [0, 256], sizes = [8, 128], strides = [1, 1]} : vector<8x512xf32> to vector<8x128xf32>
    %278 = math.tanh %277 : vector<8x128xf32>
    %279 = vector.extract_strided_slice %264 {offsets = [0, 384], sizes = [8, 128], strides = [1, 1]} : vector<8x512xf32> to vector<8x128xf32>
    %280 = arith.negf %279 : vector<8x128xf32>
    %281 = math.exp %280 : vector<8x128xf32>
    %cst_57 = arith.constant 1.000000e+00 : f32
    %282 = vector.broadcast %cst_57 : f32 to vector<8x128xf32>
    %283 = arith.addf %282, %281 : vector<8x128xf32>
    %284 = arith.divf %282, %283 : vector<8x128xf32>
    %285 = arith.mulf %276, %223 : vector<8x128xf32>
    %286 = arith.mulf %270, %278 : vector<8x128xf32>
    %287 = arith.addf %285, %286 : vector<8x128xf32>
    %288 = math.tanh %287 : vector<8x128xf32>
    %289 = arith.mulf %284, %288 : vector<8x128xf32>
    %290 = tpu.concatenate %289, %257 in 1 : vector<8x128xf32>, vector<8x128xf32> -> vector<8x256xf32>
    %291 = arith.truncf %290 : vector<8x256xf32> to vector<8x256xbf16>
    %c0_58 = arith.constant 0 : index
    %c0_59 = arith.constant 0 : index
    %292 = vector.load %arg3[%c0_58, %c0_59] : memref<256x1024xbf16, #tpu.memory_space<vmem>>, vector<256x1024xbf16>
    %cst_60 = arith.constant dense<0.000000e+00> : vector<8x1024xf32>
    %293 = tpu.matmul %291, %292, %cst_60 {dimension_numbers = #tpu.dot_dimension_numbers<[1], [0], [0], [1], [0, 0, 1, 1], [], []>} : vector<8x256xbf16>, vector<256x1024xbf16>, vector<8x1024xf32> -> vector<8x1024xf32>
    %294 = vector.extract_strided_slice %293 {offsets = [0, 512], sizes = [8, 512], strides = [1, 1]} : vector<8x1024xf32> to vector<8x512xf32>
    %295 = vector.broadcast %2 : vector<1x512xf32> to vector<8x512xf32>
    %296 = arith.addf %294, %295 : vector<8x512xf32>
    %297 = vector.extract_strided_slice %296 {offsets = [0, 0], sizes = [8, 128], strides = [1, 1]} : vector<8x512xf32> to vector<8x128xf32>
    %298 = arith.negf %297 : vector<8x128xf32>
    %299 = math.exp %298 : vector<8x128xf32>
    %cst_61 = arith.constant 1.000000e+00 : f32
    %300 = vector.broadcast %cst_61 : f32 to vector<8x128xf32>
    %301 = arith.addf %300, %299 : vector<8x128xf32>
    %302 = arith.divf %300, %301 : vector<8x128xf32>
    %303 = vector.extract_strided_slice %296 {offsets = [0, 128], sizes = [8, 128], strides = [1, 1]} : vector<8x512xf32> to vector<8x128xf32>
    %304 = arith.negf %303 : vector<8x128xf32>
    %305 = math.exp %304 : vector<8x128xf32>
    %cst_62 = arith.constant 1.000000e+00 : f32
    %306 = vector.broadcast %cst_62 : f32 to vector<8x128xf32>
    %307 = arith.addf %306, %305 : vector<8x128xf32>
    %308 = arith.divf %306, %307 : vector<8x128xf32>
    %309 = vector.extract_strided_slice %296 {offsets = [0, 256], sizes = [8, 128], strides = [1, 1]} : vector<8x512xf32> to vector<8x128xf32>
    %310 = math.tanh %309 : vector<8x128xf32>
    %311 = vector.extract_strided_slice %296 {offsets = [0, 384], sizes = [8, 128], strides = [1, 1]} : vector<8x512xf32> to vector<8x128xf32>
    %312 = arith.negf %311 : vector<8x128xf32>
    %313 = math.exp %312 : vector<8x128xf32>
    %cst_63 = arith.constant 1.000000e+00 : f32
    %314 = vector.broadcast %cst_63 : f32 to vector<8x128xf32>
    %315 = arith.addf %314, %313 : vector<8x128xf32>
    %316 = arith.divf %314, %315 : vector<8x128xf32>
    %317 = arith.mulf %308, %255 : vector<8x128xf32>
    %318 = arith.mulf %302, %310 : vector<8x128xf32>
    %319 = arith.addf %317, %318 : vector<8x128xf32>
    %320 = math.tanh %319 : vector<8x128xf32>
    %321 = arith.mulf %316, %320 : vector<8x128xf32>
    %c5 = arith.constant 5 : index
    %c0_64 = arith.constant 0 : index
    %c0_65 = arith.constant 0 : index
    %322 = vector.load %arg1[%c5, %c0_64, %c0_65] : memref<8x8x16xf32, #tpu.memory_space<vmem>>, vector<1x8x16xf32>
    %323 = vector.shape_cast %322 : vector<1x8x16xf32> to vector<8x16xf32>
    %cst_66 = arith.constant dense<0.000000e+00> : vector<8x512xf32>
    %324 = tpu.matmul %323, %0, %cst_66 {dimension_numbers = #tpu.dot_dimension_numbers<[1], [0], [0], [1], [0, 0, 1, 1], [], []>} : vector<8x16xf32>, vector<16x512xf32>, vector<8x512xf32> -> vector<8x512xf32>
    %325 = vector.broadcast %1 : vector<1x512xf32> to vector<8x512xf32>
    %326 = arith.addf %324, %325 : vector<8x512xf32>
    %327 = vector.extract_strided_slice %293 {offsets = [0, 0], sizes = [8, 512], strides = [1, 1]} : vector<8x1024xf32> to vector<8x512xf32>
    %328 = arith.addf %326, %327 : vector<8x512xf32>
    %329 = vector.extract_strided_slice %328 {offsets = [0, 0], sizes = [8, 128], strides = [1, 1]} : vector<8x512xf32> to vector<8x128xf32>
    %330 = arith.negf %329 : vector<8x128xf32>
    %331 = math.exp %330 : vector<8x128xf32>
    %cst_67 = arith.constant 1.000000e+00 : f32
    %332 = vector.broadcast %cst_67 : f32 to vector<8x128xf32>
    %333 = arith.addf %332, %331 : vector<8x128xf32>
    %334 = arith.divf %332, %333 : vector<8x128xf32>
    %335 = vector.extract_strided_slice %328 {offsets = [0, 128], sizes = [8, 128], strides = [1, 1]} : vector<8x512xf32> to vector<8x128xf32>
    %336 = arith.negf %335 : vector<8x128xf32>
    %337 = math.exp %336 : vector<8x128xf32>
    %cst_68 = arith.constant 1.000000e+00 : f32
    %338 = vector.broadcast %cst_68 : f32 to vector<8x128xf32>
    %339 = arith.addf %338, %337 : vector<8x128xf32>
    %340 = arith.divf %338, %339 : vector<8x128xf32>
    %341 = vector.extract_strided_slice %328 {offsets = [0, 256], sizes = [8, 128], strides = [1, 1]} : vector<8x512xf32> to vector<8x128xf32>
    %342 = math.tanh %341 : vector<8x128xf32>
    %343 = vector.extract_strided_slice %328 {offsets = [0, 384], sizes = [8, 128], strides = [1, 1]} : vector<8x512xf32> to vector<8x128xf32>
    %344 = arith.negf %343 : vector<8x128xf32>
    %345 = math.exp %344 : vector<8x128xf32>
    %cst_69 = arith.constant 1.000000e+00 : f32
    %346 = vector.broadcast %cst_69 : f32 to vector<8x128xf32>
    %347 = arith.addf %346, %345 : vector<8x128xf32>
    %348 = arith.divf %346, %347 : vector<8x128xf32>
    %349 = arith.mulf %340, %287 : vector<8x128xf32>
    %350 = arith.mulf %334, %342 : vector<8x128xf32>
    %351 = arith.addf %349, %350 : vector<8x128xf32>
    %352 = math.tanh %351 : vector<8x128xf32>
    %353 = arith.mulf %348, %352 : vector<8x128xf32>
    %354 = tpu.concatenate %353, %321 in 1 : vector<8x128xf32>, vector<8x128xf32> -> vector<8x256xf32>
    %355 = arith.truncf %354 : vector<8x256xf32> to vector<8x256xbf16>
    %c0_70 = arith.constant 0 : index
    %c0_71 = arith.constant 0 : index
    %356 = vector.load %arg3[%c0_70, %c0_71] : memref<256x1024xbf16, #tpu.memory_space<vmem>>, vector<256x1024xbf16>
    %cst_72 = arith.constant dense<0.000000e+00> : vector<8x1024xf32>
    %357 = tpu.matmul %355, %356, %cst_72 {dimension_numbers = #tpu.dot_dimension_numbers<[1], [0], [0], [1], [0, 0, 1, 1], [], []>} : vector<8x256xbf16>, vector<256x1024xbf16>, vector<8x1024xf32> -> vector<8x1024xf32>
    %358 = vector.extract_strided_slice %357 {offsets = [0, 512], sizes = [8, 512], strides = [1, 1]} : vector<8x1024xf32> to vector<8x512xf32>
    %359 = vector.broadcast %2 : vector<1x512xf32> to vector<8x512xf32>
    %360 = arith.addf %358, %359 : vector<8x512xf32>
    %361 = vector.extract_strided_slice %360 {offsets = [0, 0], sizes = [8, 128], strides = [1, 1]} : vector<8x512xf32> to vector<8x128xf32>
    %362 = arith.negf %361 : vector<8x128xf32>
    %363 = math.exp %362 : vector<8x128xf32>
    %cst_73 = arith.constant 1.000000e+00 : f32
    %364 = vector.broadcast %cst_73 : f32 to vector<8x128xf32>
    %365 = arith.addf %364, %363 : vector<8x128xf32>
    %366 = arith.divf %364, %365 : vector<8x128xf32>
    %367 = vector.extract_strided_slice %360 {offsets = [0, 128], sizes = [8, 128], strides = [1, 1]} : vector<8x512xf32> to vector<8x128xf32>
    %368 = arith.negf %367 : vector<8x128xf32>
    %369 = math.exp %368 : vector<8x128xf32>
    %cst_74 = arith.constant 1.000000e+00 : f32
    %370 = vector.broadcast %cst_74 : f32 to vector<8x128xf32>
    %371 = arith.addf %370, %369 : vector<8x128xf32>
    %372 = arith.divf %370, %371 : vector<8x128xf32>
    %373 = vector.extract_strided_slice %360 {offsets = [0, 256], sizes = [8, 128], strides = [1, 1]} : vector<8x512xf32> to vector<8x128xf32>
    %374 = math.tanh %373 : vector<8x128xf32>
    %375 = vector.extract_strided_slice %360 {offsets = [0, 384], sizes = [8, 128], strides = [1, 1]} : vector<8x512xf32> to vector<8x128xf32>
    %376 = arith.negf %375 : vector<8x128xf32>
    %377 = math.exp %376 : vector<8x128xf32>
    %cst_75 = arith.constant 1.000000e+00 : f32
    %378 = vector.broadcast %cst_75 : f32 to vector<8x128xf32>
    %379 = arith.addf %378, %377 : vector<8x128xf32>
    %380 = arith.divf %378, %379 : vector<8x128xf32>
    %381 = arith.mulf %372, %319 : vector<8x128xf32>
    %382 = arith.mulf %366, %374 : vector<8x128xf32>
    %383 = arith.addf %381, %382 : vector<8x128xf32>
    %384 = math.tanh %383 : vector<8x128xf32>
    %385 = arith.mulf %380, %384 : vector<8x128xf32>
    %c6 = arith.constant 6 : index
    %c0_76 = arith.constant 0 : index
    %c0_77 = arith.constant 0 : index
    %386 = vector.load %arg1[%c6, %c0_76, %c0_77] : memref<8x8x16xf32, #tpu.memory_space<vmem>>, vector<1x8x16xf32>
    %387 = vector.shape_cast %386 : vector<1x8x16xf32> to vector<8x16xf32>
    %cst_78 = arith.constant dense<0.000000e+00> : vector<8x512xf32>
    %388 = tpu.matmul %387, %0, %cst_78 {dimension_numbers = #tpu.dot_dimension_numbers<[1], [0], [0], [1], [0, 0, 1, 1], [], []>} : vector<8x16xf32>, vector<16x512xf32>, vector<8x512xf32> -> vector<8x512xf32>
    %389 = vector.broadcast %1 : vector<1x512xf32> to vector<8x512xf32>
    %390 = arith.addf %388, %389 : vector<8x512xf32>
    %391 = vector.extract_strided_slice %357 {offsets = [0, 0], sizes = [8, 512], strides = [1, 1]} : vector<8x1024xf32> to vector<8x512xf32>
    %392 = arith.addf %390, %391 : vector<8x512xf32>
    %393 = vector.extract_strided_slice %392 {offsets = [0, 0], sizes = [8, 128], strides = [1, 1]} : vector<8x512xf32> to vector<8x128xf32>
    %394 = arith.negf %393 : vector<8x128xf32>
    %395 = math.exp %394 : vector<8x128xf32>
    %cst_79 = arith.constant 1.000000e+00 : f32
    %396 = vector.broadcast %cst_79 : f32 to vector<8x128xf32>
    %397 = arith.addf %396, %395 : vector<8x128xf32>
    %398 = arith.divf %396, %397 : vector<8x128xf32>
    %399 = vector.extract_strided_slice %392 {offsets = [0, 128], sizes = [8, 128], strides = [1, 1]} : vector<8x512xf32> to vector<8x128xf32>
    %400 = arith.negf %399 : vector<8x128xf32>
    %401 = math.exp %400 : vector<8x128xf32>
    %cst_80 = arith.constant 1.000000e+00 : f32
    %402 = vector.broadcast %cst_80 : f32 to vector<8x128xf32>
    %403 = arith.addf %402, %401 : vector<8x128xf32>
    %404 = arith.divf %402, %403 : vector<8x128xf32>
    %405 = vector.extract_strided_slice %392 {offsets = [0, 256], sizes = [8, 128], strides = [1, 1]} : vector<8x512xf32> to vector<8x128xf32>
    %406 = math.tanh %405 : vector<8x128xf32>
    %407 = vector.extract_strided_slice %392 {offsets = [0, 384], sizes = [8, 128], strides = [1, 1]} : vector<8x512xf32> to vector<8x128xf32>
    %408 = arith.negf %407 : vector<8x128xf32>
    %409 = math.exp %408 : vector<8x128xf32>
    %cst_81 = arith.constant 1.000000e+00 : f32
    %410 = vector.broadcast %cst_81 : f32 to vector<8x128xf32>
    %411 = arith.addf %410, %409 : vector<8x128xf32>
    %412 = arith.divf %410, %411 : vector<8x128xf32>
    %413 = arith.mulf %404, %351 : vector<8x128xf32>
    %414 = arith.mulf %398, %406 : vector<8x128xf32>
    %415 = arith.addf %413, %414 : vector<8x128xf32>
    %416 = math.tanh %415 : vector<8x128xf32>
    %417 = arith.mulf %412, %416 : vector<8x128xf32>
    %418 = tpu.concatenate %417, %385 in 1 : vector<8x128xf32>, vector<8x128xf32> -> vector<8x256xf32>
    %419 = arith.truncf %418 : vector<8x256xf32> to vector<8x256xbf16>
    %c0_82 = arith.constant 0 : index
    %c0_83 = arith.constant 0 : index
    %420 = vector.load %arg3[%c0_82, %c0_83] : memref<256x1024xbf16, #tpu.memory_space<vmem>>, vector<256x1024xbf16>
    %cst_84 = arith.constant dense<0.000000e+00> : vector<8x1024xf32>
    %421 = tpu.matmul %419, %420, %cst_84 {dimension_numbers = #tpu.dot_dimension_numbers<[1], [0], [0], [1], [0, 0, 1, 1], [], []>} : vector<8x256xbf16>, vector<256x1024xbf16>, vector<8x1024xf32> -> vector<8x1024xf32>
    %422 = vector.extract_strided_slice %421 {offsets = [0, 512], sizes = [8, 512], strides = [1, 1]} : vector<8x1024xf32> to vector<8x512xf32>
    %423 = vector.broadcast %2 : vector<1x512xf32> to vector<8x512xf32>
    %424 = arith.addf %422, %423 : vector<8x512xf32>
    %425 = vector.extract_strided_slice %424 {offsets = [0, 0], sizes = [8, 128], strides = [1, 1]} : vector<8x512xf32> to vector<8x128xf32>
    %426 = arith.negf %425 : vector<8x128xf32>
    %427 = math.exp %426 : vector<8x128xf32>
    %cst_85 = arith.constant 1.000000e+00 : f32
    %428 = vector.broadcast %cst_85 : f32 to vector<8x128xf32>
    %429 = arith.addf %428, %427 : vector<8x128xf32>
    %430 = arith.divf %428, %429 : vector<8x128xf32>
    %431 = vector.extract_strided_slice %424 {offsets = [0, 128], sizes = [8, 128], strides = [1, 1]} : vector<8x512xf32> to vector<8x128xf32>
    %432 = arith.negf %431 : vector<8x128xf32>
    %433 = math.exp %432 : vector<8x128xf32>
    %cst_86 = arith.constant 1.000000e+00 : f32
    %434 = vector.broadcast %cst_86 : f32 to vector<8x128xf32>
    %435 = arith.addf %434, %433 : vector<8x128xf32>
    %436 = arith.divf %434, %435 : vector<8x128xf32>
    %437 = vector.extract_strided_slice %424 {offsets = [0, 256], sizes = [8, 128], strides = [1, 1]} : vector<8x512xf32> to vector<8x128xf32>
    %438 = math.tanh %437 : vector<8x128xf32>
    %439 = vector.extract_strided_slice %424 {offsets = [0, 384], sizes = [8, 128], strides = [1, 1]} : vector<8x512xf32> to vector<8x128xf32>
    %440 = arith.negf %439 : vector<8x128xf32>
    %441 = math.exp %440 : vector<8x128xf32>
    %cst_87 = arith.constant 1.000000e+00 : f32
    %442 = vector.broadcast %cst_87 : f32 to vector<8x128xf32>
    %443 = arith.addf %442, %441 : vector<8x128xf32>
    %444 = arith.divf %442, %443 : vector<8x128xf32>
    %445 = arith.mulf %436, %383 : vector<8x128xf32>
    %446 = arith.mulf %430, %438 : vector<8x128xf32>
    %447 = arith.addf %445, %446 : vector<8x128xf32>
    %448 = math.tanh %447 : vector<8x128xf32>
    %449 = arith.mulf %444, %448 : vector<8x128xf32>
    %c7 = arith.constant 7 : index
    %c0_88 = arith.constant 0 : index
    %c0_89 = arith.constant 0 : index
    %450 = vector.load %arg1[%c7, %c0_88, %c0_89] : memref<8x8x16xf32, #tpu.memory_space<vmem>>, vector<1x8x16xf32>
    %451 = vector.shape_cast %450 : vector<1x8x16xf32> to vector<8x16xf32>
    %cst_90 = arith.constant dense<0.000000e+00> : vector<8x512xf32>
    %452 = tpu.matmul %451, %0, %cst_90 {dimension_numbers = #tpu.dot_dimension_numbers<[1], [0], [0], [1], [0, 0, 1, 1], [], []>} : vector<8x16xf32>, vector<16x512xf32>, vector<8x512xf32> -> vector<8x512xf32>
    %453 = vector.broadcast %1 : vector<1x512xf32> to vector<8x512xf32>
    %454 = arith.addf %452, %453 : vector<8x512xf32>
    %455 = vector.extract_strided_slice %421 {offsets = [0, 0], sizes = [8, 512], strides = [1, 1]} : vector<8x1024xf32> to vector<8x512xf32>
    %456 = arith.addf %454, %455 : vector<8x512xf32>
    %457 = vector.extract_strided_slice %456 {offsets = [0, 0], sizes = [8, 128], strides = [1, 1]} : vector<8x512xf32> to vector<8x128xf32>
    %458 = arith.negf %457 : vector<8x128xf32>
    %459 = math.exp %458 : vector<8x128xf32>
    %cst_91 = arith.constant 1.000000e+00 : f32
    %460 = vector.broadcast %cst_91 : f32 to vector<8x128xf32>
    %461 = arith.addf %460, %459 : vector<8x128xf32>
    %462 = arith.divf %460, %461 : vector<8x128xf32>
    %463 = vector.extract_strided_slice %456 {offsets = [0, 128], sizes = [8, 128], strides = [1, 1]} : vector<8x512xf32> to vector<8x128xf32>
    %464 = arith.negf %463 : vector<8x128xf32>
    %465 = math.exp %464 : vector<8x128xf32>
    %cst_92 = arith.constant 1.000000e+00 : f32
    %466 = vector.broadcast %cst_92 : f32 to vector<8x128xf32>
    %467 = arith.addf %466, %465 : vector<8x128xf32>
    %468 = arith.divf %466, %467 : vector<8x128xf32>
    %469 = vector.extract_strided_slice %456 {offsets = [0, 256], sizes = [8, 128], strides = [1, 1]} : vector<8x512xf32> to vector<8x128xf32>
    %470 = math.tanh %469 : vector<8x128xf32>
    %471 = vector.extract_strided_slice %456 {offsets = [0, 384], sizes = [8, 128], strides = [1, 1]} : vector<8x512xf32> to vector<8x128xf32>
    %472 = arith.negf %471 : vector<8x128xf32>
    %473 = math.exp %472 : vector<8x128xf32>
    %cst_93 = arith.constant 1.000000e+00 : f32
    %474 = vector.broadcast %cst_93 : f32 to vector<8x128xf32>
    %475 = arith.addf %474, %473 : vector<8x128xf32>
    %476 = arith.divf %474, %475 : vector<8x128xf32>
    %477 = arith.mulf %468, %415 : vector<8x128xf32>
    %478 = arith.mulf %462, %470 : vector<8x128xf32>
    %479 = arith.addf %477, %478 : vector<8x128xf32>
    %480 = math.tanh %479 : vector<8x128xf32>
    %481 = arith.mulf %476, %480 : vector<8x128xf32>
    %482 = tpu.concatenate %481, %449 in 1 : vector<8x128xf32>, vector<8x128xf32> -> vector<8x256xf32>
    %483 = arith.truncf %482 : vector<8x256xf32> to vector<8x256xbf16>
    %c0_94 = arith.constant 0 : index
    %c512 = arith.constant 512 : index
    %484 = vector.load %arg3[%c0_94, %c512] : memref<256x1024xbf16, #tpu.memory_space<vmem>>, vector<256x512xbf16>
    %cst_95 = arith.constant dense<0.000000e+00> : vector<8x512xf32>
    %485 = tpu.matmul %483, %484, %cst_95 {dimension_numbers = #tpu.dot_dimension_numbers<[1], [0], [0], [1], [0, 0, 1, 1], [], []>} : vector<8x256xbf16>, vector<256x512xbf16>, vector<8x512xf32> -> vector<8x512xf32>
    %486 = vector.broadcast %2 : vector<1x512xf32> to vector<8x512xf32>
    %487 = arith.addf %485, %486 : vector<8x512xf32>
    %488 = vector.extract_strided_slice %487 {offsets = [0, 0], sizes = [8, 128], strides = [1, 1]} : vector<8x512xf32> to vector<8x128xf32>
    %489 = arith.negf %488 : vector<8x128xf32>
    %490 = math.exp %489 : vector<8x128xf32>
    %cst_96 = arith.constant 1.000000e+00 : f32
    %491 = vector.broadcast %cst_96 : f32 to vector<8x128xf32>
    %492 = arith.addf %491, %490 : vector<8x128xf32>
    %493 = arith.divf %491, %492 : vector<8x128xf32>
    %494 = vector.extract_strided_slice %487 {offsets = [0, 128], sizes = [8, 128], strides = [1, 1]} : vector<8x512xf32> to vector<8x128xf32>
    %495 = arith.negf %494 : vector<8x128xf32>
    %496 = math.exp %495 : vector<8x128xf32>
    %cst_97 = arith.constant 1.000000e+00 : f32
    %497 = vector.broadcast %cst_97 : f32 to vector<8x128xf32>
    %498 = arith.addf %497, %496 : vector<8x128xf32>
    %499 = arith.divf %497, %498 : vector<8x128xf32>
    %500 = vector.extract_strided_slice %487 {offsets = [0, 256], sizes = [8, 128], strides = [1, 1]} : vector<8x512xf32> to vector<8x128xf32>
    %501 = math.tanh %500 : vector<8x128xf32>
    %502 = vector.extract_strided_slice %487 {offsets = [0, 384], sizes = [8, 128], strides = [1, 1]} : vector<8x512xf32> to vector<8x128xf32>
    %503 = arith.negf %502 : vector<8x128xf32>
    %504 = math.exp %503 : vector<8x128xf32>
    %cst_98 = arith.constant 1.000000e+00 : f32
    %505 = vector.broadcast %cst_98 : f32 to vector<8x128xf32>
    %506 = arith.addf %505, %504 : vector<8x128xf32>
    %507 = arith.divf %505, %506 : vector<8x128xf32>
    %508 = arith.mulf %499, %447 : vector<8x128xf32>
    %509 = arith.mulf %493, %501 : vector<8x128xf32>
    %510 = arith.addf %508, %509 : vector<8x128xf32>
    %511 = math.tanh %510 : vector<8x128xf32>
    %512 = arith.mulf %507, %511 : vector<8x128xf32>
    %c0_99 = arith.constant 0 : index
    %c0_100 = arith.constant 0 : index
    %513 = vector.load %arg2[%c0_99, %c0_100] : memref<8x8xf32, #tpu.memory_space<vmem>>, vector<8x8xf32>
    %c0_101 = arith.constant 0 : index
    %c0_102 = arith.constant 0 : index
    %514 = vector.load %arg5[%c0_101, %c0_102] : memref<1080x256xf32, #tpu.memory_space<vmem>>, vector<8x128xf32>
    %cst_103 = arith.constant dense<0.000000e+00> : vector<8x128xf32>
    %515 = tpu.matmul %513, %514, %cst_103 {dimension_numbers = #tpu.dot_dimension_numbers<[1], [0], [0], [1], [0, 0, 1, 1], [], []>} : vector<8x8xf32>, vector<8x128xf32>, vector<8x128xf32> -> vector<8x128xf32>
    %c8 = arith.constant 8 : index
    %c0_104 = arith.constant 0 : index
    %516 = vector.load %arg5[%c8, %c0_104] : memref<1080x256xf32, #tpu.memory_space<vmem>>, vector<1x128xf32>
    %517 = vector.broadcast %516 : vector<1x128xf32> to vector<8x128xf32>
    %518 = arith.addf %515, %517 : vector<8x128xf32>
    %cst_105 = arith.constant 0.000000e+00 : f32
    %519 = vector.broadcast %cst_105 : f32 to vector<8x128xf32>
    %520 = arith.maximumf %518, %519 : vector<8x128xf32>
    %c16_106 = arith.constant 16 : index
    %c0_107 = arith.constant 0 : index
    %521 = vector.load %arg5[%c16_106, %c0_107] : memref<1080x256xf32, #tpu.memory_space<vmem>>, vector<128x128xf32>
    %cst_108 = arith.constant dense<0.000000e+00> : vector<8x128xf32>
    %522 = tpu.matmul %520, %521, %cst_108 {dimension_numbers = #tpu.dot_dimension_numbers<[1], [0], [0], [1], [0, 0, 1, 1], [], []>} : vector<8x128xf32>, vector<128x128xf32>, vector<8x128xf32> -> vector<8x128xf32>
    %c144 = arith.constant 144 : index
    %c0_109 = arith.constant 0 : index
    %523 = vector.load %arg5[%c144, %c0_109] : memref<1080x256xf32, #tpu.memory_space<vmem>>, vector<1x128xf32>
    %524 = vector.broadcast %523 : vector<1x128xf32> to vector<8x128xf32>
    %525 = arith.addf %522, %524 : vector<8x128xf32>
    %cst_110 = arith.constant 0.000000e+00 : f32
    %526 = vector.broadcast %cst_110 : f32 to vector<8x128xf32>
    %527 = arith.maximumf %525, %526 : vector<8x128xf32>
    %c152 = arith.constant 152 : index
    %c0_111 = arith.constant 0 : index
    %528 = vector.load %arg5[%c152, %c0_111] : memref<1080x256xf32, #tpu.memory_space<vmem>>, vector<128x256xf32>
    %cst_112 = arith.constant dense<0.000000e+00> : vector<8x256xf32>
    %529 = tpu.matmul %512, %528, %cst_112 {dimension_numbers = #tpu.dot_dimension_numbers<[1], [0], [0], [1], [0, 0, 1, 1], [], []>} : vector<8x128xf32>, vector<128x256xf32>, vector<8x256xf32> -> vector<8x256xf32>
    %c280 = arith.constant 280 : index
    %c0_113 = arith.constant 0 : index
    %530 = vector.load %arg5[%c280, %c0_113] : memref<1080x256xf32, #tpu.memory_space<vmem>>, vector<128x256xf32>
    %cst_114 = arith.constant dense<0.000000e+00> : vector<8x256xf32>
    %531 = tpu.matmul %527, %530, %cst_114 {dimension_numbers = #tpu.dot_dimension_numbers<[1], [0], [0], [1], [0, 0, 1, 1], [], []>} : vector<8x128xf32>, vector<128x256xf32>, vector<8x256xf32> -> vector<8x256xf32>
    %532 = arith.addf %529, %531 : vector<8x256xf32>
    %c408 = arith.constant 408 : index
    %c0_115 = arith.constant 0 : index
    %533 = vector.load %arg5[%c408, %c0_115] : memref<1080x256xf32, #tpu.memory_space<vmem>>, vector<1x256xf32>
    %534 = vector.broadcast %533 : vector<1x256xf32> to vector<8x256xf32>
    %535 = arith.addf %532, %534 : vector<8x256xf32>
    %c416 = arith.constant 416 : index
    %c0_116 = arith.constant 0 : index
    %536 = vector.load %arg5[%c416, %c0_116] : memref<1080x256xf32, #tpu.memory_space<vmem>>, vector<256x256xf32>
    %cst_117 = arith.constant dense<0.000000e+00> : vector<8x256xf32>
    %537 = tpu.matmul %535, %536, %cst_117 {dimension_numbers = #tpu.dot_dimension_numbers<[1], [0], [0], [1], [0, 0, 1, 1], [], []>} : vector<8x256xf32>, vector<256x256xf32>, vector<8x256xf32> -> vector<8x256xf32>
    %c672 = arith.constant 672 : index
    %c0_118 = arith.constant 0 : index
    %538 = vector.load %arg5[%c672, %c0_118] : memref<1080x256xf32, #tpu.memory_space<vmem>>, vector<1x256xf32>
    %539 = vector.broadcast %538 : vector<1x256xf32> to vector<8x256xf32>
    %540 = arith.addf %537, %539 : vector<8x256xf32>
    %cst_119 = arith.constant 0.000000e+00 : f32
    %541 = vector.broadcast %cst_119 : f32 to vector<8x256xf32>
    %542 = arith.maximumf %540, %541 : vector<8x256xf32>
    %c680 = arith.constant 680 : index
    %c0_120 = arith.constant 0 : index
    %543 = vector.load %arg5[%c680, %c0_120] : memref<1080x256xf32, #tpu.memory_space<vmem>>, vector<256x128xf32>
    %cst_121 = arith.constant dense<0.000000e+00> : vector<8x128xf32>
    %544 = tpu.matmul %542, %543, %cst_121 {dimension_numbers = #tpu.dot_dimension_numbers<[1], [0], [0], [1], [0, 0, 1, 1], [], []>} : vector<8x256xf32>, vector<256x128xf32>, vector<8x128xf32> -> vector<8x128xf32>
    %c936 = arith.constant 936 : index
    %c0_122 = arith.constant 0 : index
    %545 = vector.load %arg5[%c936, %c0_122] : memref<1080x256xf32, #tpu.memory_space<vmem>>, vector<1x128xf32>
    %546 = vector.broadcast %545 : vector<1x128xf32> to vector<8x128xf32>
    %547 = arith.addf %544, %546 : vector<8x128xf32>
    %cst_123 = arith.constant 0.000000e+00 : f32
    %548 = vector.broadcast %cst_123 : f32 to vector<8x128xf32>
    %549 = arith.maximumf %547, %548 : vector<8x128xf32>
    %c944 = arith.constant 944 : index
    %c0_124 = arith.constant 0 : index
    %550 = vector.load %arg5[%c944, %c0_124] : memref<1080x256xf32, #tpu.memory_space<vmem>>, vector<128x128xf32>
    %cst_125 = arith.constant dense<0.000000e+00> : vector<8x128xf32>
    %551 = tpu.matmul %549, %550, %cst_125 {dimension_numbers = #tpu.dot_dimension_numbers<[1], [0], [0], [1], [0, 0, 1, 1], [], []>} : vector<8x128xf32>, vector<128x128xf32>, vector<8x128xf32> -> vector<8x128xf32>
    %c1072 = arith.constant 1072 : index
    %c0_126 = arith.constant 0 : index
    %552 = vector.load %arg5[%c1072, %c0_126] : memref<1080x256xf32, #tpu.memory_space<vmem>>, vector<1x128xf32>
    %553 = vector.broadcast %552 : vector<1x128xf32> to vector<8x128xf32>
    %554 = arith.addf %551, %553 : vector<8x128xf32>
    %c0_127 = arith.constant 0 : index
    %c0_128 = arith.constant 0 : index
    %555 = vector.load %arg6[%c0_127, %c0_128] : memref<8x128xf32, #tpu.memory_space<vmem>>, vector<8x128xf32>
    tpu.vector_store %arg6[%c0_127, %c0_128], %554 {strides = array<i32>} : memref<8x128xf32, #tpu.memory_space<vmem>>, vector<8x128xf32>,
    return
  }
  func.func @transform_0(%arg0: i32) -> (i32, i32, i32) {
    %c0_i32 = arith.constant 0 : i32
    %c0_i32_0 = arith.constant 0 : i32
    %c0_i32_1 = arith.constant 0 : i32
    return %c0_i32, %arg0, %c0_i32_0 : i32, i32, i32
  }
  func.func @transform_1(%arg0: i32) -> (i32, i32) {
    %c0_i32 = arith.constant 0 : i32
    %c0_i32_0 = arith.constant 0 : i32
    return %arg0, %c0_i32 : i32, i32
  }
  func.func @transform_2(%arg0: i32) -> (i32, i32) {
    %c0_i32 = arith.constant 0 : i32
    %c0_i32_0 = arith.constant 0 : i32
    %c0_i32_1 = arith.constant 0 : i32
    return %c0_i32, %c0_i32_0 : i32, i32
  }
  func.func @transform_3(%arg0: i32) -> (i32, i32) {
    %c0_i32 = arith.constant 0 : i32
    %c0_i32_0 = arith.constant 0 : i32
    %c0_i32_1 = arith.constant 0 : i32
    return %c0_i32, %c0_i32_0 : i32, i32
  }
  func.func @transform_4(%arg0: i32) -> (i32, i32) {
    %c0_i32 = arith.constant 0 : i32
    %c0_i32_0 = arith.constant 0 : i32
    %c0_i32_1 = arith.constant 0 : i32
    return %c0_i32, %c0_i32_0 : i32, i32
  }
  func.func @transform_5(%arg0: i32) -> (i32, i32) {
    %c0_i32 = arith.constant 0 : i32
    %c0_i32_0 = arith.constant 0 : i32
    return %arg0, %c0_i32 : i32, i32
  }
}

</mosaic_0001>

<llo_original>
// kernel: _forward_impl.1
$region0: #{_forward_impl.1}
  #allocation0 [shape = 'u32[]', space=smem, size = 0x4, offset = 0x4, fixed_abs, tag = 'smem constant byte address 0x4 - core index']
  #allocation1 [shape = 'u32[144,128]{1,0:T(1,128)}', space=vmem, size = 0x12000, scoped, tag = 'internal scratch']
  %s0 = inlined_call_operand.vmem [shape: f32[8,8,16], index: 0, kind: input, shape index: {}]
  %s1 = inlined_call_operand.vmem [shape: f32[8,8], index: 1, kind: input, shape index: {}]
  %s2 = inlined_call_operand.hbm [shape: bf16[256,1024], index: 2, kind: input, shape index: {}]
  %s3 = inlined_call_operand.hbm [shape: f32[32,512], index: 3, kind: input, shape index: {}]
  %s4 = inlined_call_operand.hbm [shape: f32[1080,256], index: 4, kind: input, shape index: {}]
  %s5 = inlined_call_operand.vmem [shape: f32[8,128], index: 5, kind: output, shape index: {}]
  %s6 = sld [smem:[#allocation0]]
  $region42: #{_forward_impl.1} parent=0
    _
  %s8 = ssub.s32 1, %s6
  %s9 = scalar_select 0, %s8, %s6
  $region1: #{_forward_impl.1} parent=0
    #allocation2 [shape = 'u8[524288]{0}', space=vmem, size = 0x80000, scoped, tag = 'input window, operand 2, single buffered']
    #allocation3 [shape = 's32[1]{0}', space=sflag, size = 0x4, scoped, tag = 'scoped memory for _forward_impl.1']
    #allocation4 [shape = 'u8[65536]{0}', space=vmem, size = 0x10000, scoped, tag = 'input window, operand 3, single buffered']
    #allocation5 [shape = 's32[1]{0}', space=sflag, size = 0x4, scoped, tag = 'scoped memory for _forward_impl.1']
    #allocation6 [shape = 'u8[1105920]{0}', space=vmem, size = 0x10e000, scoped, tag = 'input window, operand 4, single buffered']
    %10 = vsyncpa [#allocation3], 0
    %11 = vsyncpa [#allocation5], 0
    // Predicated region
    $region2: #{_forward_impl.1} parent=1 // pred_check
      _
    $region3: #{_forward_impl.1} parent=1 // pred_check_branch
      %13 = sbr.rel (0) target = $region5
    $region4: #{_forward_impl.1} parent=1 // pred_region
      _
    $region5: #{_forward_impl.1} parent=1 // pred_fallthru
      _
    // Predicated region
    $region6: #{_forward_impl.1} parent=1 // pred_check
      _
    $region7: #{_forward_impl.1} parent=1 // pred_check_branch
      %15 = sbr.rel (0) target = $region9
    $region8: #{_forward_impl.1} parent=1 // pred_region
      _
    $region9: #{_forward_impl.1} parent=1 // pred_fallthru
      _
    // Predicated region
    $region10: #{_forward_impl.1} parent=1 // pred_check
      _
    $region11: #{_forward_impl.1} parent=1 // pred_check_branch
      %17 = sbr.rel (0) target = $region13
    $region12: #{_forward_impl.1} parent=1 // pred_region
      %s19 = ssub.s32 16384, 16384
      %20 = vsyncadd [#allocation3], %s19
      %s21 = sshll.u32 [#allocation2], 4
      %s22 = int_to_ptr.vmem [resolvable:$true] %s21
      %27 = dma.hbm_to_vmem [thread:$0]  %s2, 16384, %s22, [#allocation3], 512, 512, 32
    $region13: #{_forward_impl.1} parent=1 // pred_fallthru
      _
    // Predicated region
    $region14: #{_forward_impl.1} parent=1 // pred_check
      _
    $region15: #{_forward_impl.1} parent=1 // pred_check_branch
      %29 = sbr.rel (0) target = $region17
    $region16: #{_forward_impl.1} parent=1 // pred_region
      %s31 = ssub.s32 2048, 2048
      %32 = vsyncadd [#allocation5], %s31
      %s33 = sshll.u32 [#allocation4], 4
      %s34 = int_to_ptr.vmem [resolvable:$true] %s33
      %39 = dma.hbm_to_vmem [thread:$0]  %s3, 2048, %s34, [#allocation5], 512, 512, 32
    $region17: #{_forward_impl.1} parent=1 // pred_fallthru
      _
    // Predicated region
    $region18: #{_forward_impl.1} parent=1 // pred_check
      _
    $region19: #{_forward_impl.1} parent=1 // pred_check_branch
      %41 = sbr.rel (0) target = $region21
    $region20: #{_forward_impl.1} parent=1 // pred_region
      %s43 = ssub.s32 34560, 34560
      %44 = vsyncadd [#allocation5], %s43
      %s45 = sshll.u32 [#allocation6], 4
      %s46 = int_to_ptr.vmem [resolvable:$true] %s45
      %51 = dma.hbm_to_vmem [thread:$0]  %s4, 34560, %s46, [#allocation5], 256, 256, 16
    $region21: #{_forward_impl.1} parent=1 // pred_fallthru
      _
    // Predicated region
    $region22: #{_forward_impl.1} parent=1 // pred_check
      _
    $region23: #{_forward_impl.1} parent=1 // pred_check_branch
      %53 = sbr.rel (0) target = $region25
    $region24: #{_forward_impl.1} parent=1 // pred_region
      %54 = dma.done [#allocation3], 16384
    $region25: #{_forward_impl.1} parent=1 // pred_fallthru
      _
    // Predicated region
    $region26: #{_forward_impl.1} parent=1 // pred_check
      _
    $region27: #{_forward_impl.1} parent=1 // pred_check_branch
      %56 = sbr.rel (0) target = $region29
    $region28: #{_forward_impl.1} parent=1 // pred_region
      %57 = dma.done [#allocation5], 2048
    $region29: #{_forward_impl.1} parent=1 // pred_fallthru
      _
    // Predicated region
    $region30: #{_forward_impl.1} parent=1 // pred_check
      _
    $region31: #{_forward_impl.1} parent=1 // pred_check_branch
      %59 = sbr.rel (0) target = $region33
    $region32: #{_forward_impl.1} parent=1 // pred_region
      %60 = dma.done [#allocation5], 34560
    $region33: #{_forward_impl.1} parent=1 // pred_fallthru
      _
    %v61 = vld [vmem:[#allocation4] sm:$0xff]
    %v62 = vld [vmem:[#allocation4 + $0x8] sm:$0xff]
    %v63 = vld [vmem:[#allocation4 + $0x10] sm:$0xff]
    %v64 = vld [vmem:[#allocation4 + $0x18] sm:$0xff]
    %v65 = vld [vmem:[#allocation4 + $0x20] sm:$0xff]
    %v66 = vld [vmem:[#allocation4 + $0x28] sm:$0xff]
    %v67 = vld [vmem:[#allocation4 + $0x30] sm:$0xff]
    %v68 = vld [vmem:[#allocation4 + $0x38] sm:$0xff]
    %s69 = scalar_lea.vmem [#allocation4], 64
    %v70 = vld [vmem:[%s69] ss:$8 sm:$0xf]
    %s71 = scalar_lea.vmem [#allocation4], 96
    %v72 = vld [vmem:[%s71] ss:$8 sm:$0xf]
    %v73 = vld [vmem:[%s0] sm:$0xff]
    %v75 = vlaneseq
    %v76 = vshrl.u32 %v75, 7
    %v77 = vsub.s32 0, %v76
    %v78 = vrot.slane %v70, %v77
    %v79 = vlaneseq
    %v80 = vshrl.u32 %v79, 7
    %v81 = vsub.s32 1, %v80
    %v82 = vrot.slane %v70, %v81
    %v83 = vlaneseq
    %v84 = vshrl.u32 %v83, 7
    %v85 = vsub.s32 2, %v84
    %v86 = vrot.slane %v70, %v85
    %v87 = vlaneseq
    %v88 = vshrl.u32 %v87, 7
    %v89 = vsub.s32 3, %v88
    %v90 = vrot.slane %v70, %v89
    %vm95 = vcmask 130048
    %v97 = vsel %vm95, %v73, 0
    %99 = vmatprep.subr.mxu0 %v62
    %100 = vmatpush1.msra.mxu0 %v61
    %101 = vmatprep.subr.mxu0 %v66
    %102 = vmatpush1.msra.mxu0 %v65
    %103 = vmatprep.subr.mxu0 0.0
    %104 = vmatpush1.msra.mxu0 0.0
    %105 = vmatprep.subr.mxu0 0.0
    %106 = vmatpush1.msra.mxu0 0.0
    %107 = vmatprep.subr.mxu0 0.0
    %108 = vmatpush1.msra.mxu0 0.0
    %109 = vmatprep.subr.mxu0 0.0
    %110 = vmatpush1.msra.mxu0 0.0
    %111 = vmatprep.subr.mxu0 0.0
    %112 = vmatpush1.msra.mxu0 0.0
    %113 = vmatprep.subr.mxu0 0.0
    %114 = vmatpush1.msra.mxu0 0.0
    %115 = vmatprep.subr.mxu0 0.0
    %116 = vmatpush1.msra.mxu0 0.0
    %117 = vmatprep.subr.mxu0 0.0
    %118 = vmatpush1.msra.mxu0 0.0
    %119 = vmatprep.subr.mxu0 0.0
    %120 = vmatpush1.msra.mxu0 0.0
    %121 = vmatprep.subr.mxu0 0.0
    %122 = vmatpush1.msra.mxu0 0.0
    %123 = vmatprep.subr.mxu0 0.0
    %124 = vmatpush1.msra.mxu0 0.0
    %125 = vmatprep.subr.mxu0 0.0
    %126 = vmatpush1.msra.mxu0 0.0
    %127 = vmatprep.subr.mxu0 0.0
    %128 = vmatpush1.msra.mxu0 0.0
    %129 = vmatprep.subr.mxu0 0.0
    %130 = vmatpush1.msra.mxu0 0.0
    %131 = vmatprep.subr.mxu0 0.0
    %132 = vmatpush1.msra.mxu0 0.0
    %133 = vmatprep.subr.mxu0 0.0
    %134 = vmatpush1.msra.mxu0 0.0
    %135 = vmatprep.subr.mxu0 0.0
    %136 = vmatpush1.msra.mxu0 0.0
    %137 = vmatprep.subr.mxu0 0.0
    %138 = vmatpush1.msra.mxu0 0.0
    %139 = vmatprep.subr.mxu0 0.0
    %140 = vmatpush1.msra.mxu0 0.0
    %141 = vmatprep.subr.mxu0 0.0
    %142 = vmatpush1.msra.mxu0 0.0
    %143 = vmatprep.subr.mxu0 0.0
    %144 = vmatpush1.msra.mxu0 0.0
    %145 = vmatprep.subr.mxu0 0.0
    %146 = vmatpush1.msra.mxu0 0.0
    %147 = vmatprep.subr.mxu0 0.0
    %148 = vmatpush1.msra.mxu0 0.0
    %149 = vmatprep.subr.mxu0 0.0
    %150 = vmatpush1.msra.mxu0 0.0
    %151 = vmatprep.subr.mxu0 0.0
    %152 = vmatpush1.msra.mxu0 0.0
    %153 = vmatprep.subr.mxu0 0.0
    %154 = vmatpush1.msra.mxu0 0.0
    %155 = vmatprep.subr.mxu0 0.0
    %156 = vmatpush1.msra.mxu0 0.0
    %157 = vmatprep.subr.mxu0 0.0
    %158 = vmatpush1.msra.mxu0 0.0
    %159 = vmatprep.subr.mxu0 0.0
    %160 = vmatpush1.msra.mxu0 0.0
    %161 = vmatprep.subr.mxu0 0.0
    %162 = vmatpush1.msra.mxu0 0.0
    %163 = vmatprep.mubr.f32.mxu0 0.0
    %164 = vmatmul.mubr.f32.gmra.mrb[0].mxu0 %v97
    %v165 = vpop.f32.mrb[0].mxu0
    %v166 = vadd.f32 %v78, %v165
    %v167 = vpop.f32.mrb[0].mxu0
    %v168 = vadd.f32 %v82, %v167
    %169 = vdwg.mxu0
    %170 = vmatprep.subr.mxu0 %v64
    %171 = vmatpush1.msra.mxu0 %v63
    %172 = vmatprep.subr.mxu0 %v68
    %173 = vmatpush1.msra.mxu0 %v67
    %174 = vmatprep.subr.mxu0 0.0
    %175 = vmatpush1.msra.mxu0 0.0
    %176 = vmatprep.subr.mxu0 0.0
    %177 = vmatpush1.msra.mxu0 0.0
    %178 = vmatprep.subr.mxu0 0.0
    %179 = vmatpush1.msra.mxu0 0.0
    %180 = vmatprep.subr.mxu0 0.0
    %181 = vmatpush1.msra.mxu0 0.0
    %182 = vmatprep.subr.mxu0 0.0
    %183 = vmatpush1.msra.mxu0 0.0
    %184 = vmatprep.subr.mxu0 0.0
    %185 = vmatpush1.msra.mxu0 0.0
    %186 = vmatprep.subr.mxu0 0.0
    %187 = vmatpush1.msra.mxu0 0.0
    %188 = vmatprep.subr.mxu0 0.0
    %189 = vmatpush1.msra.mxu0 0.0
    %190 = vmatprep.subr.mxu0 0.0
    %191 = vmatpush1.msra.mxu0 0.0
    %192 = vmatprep.subr.mxu0 0.0
    %193 = vmatpush1.msra.mxu0 0.0
    %194 = vmatprep.subr.mxu0 0.0
    %195 = vmatpush1.msra.mxu0 0.0
    %196 = vmatprep.subr.mxu0 0.0
    %197 = vmatpush1.msra.mxu0 0.0
    %198 = vmatprep.subr.mxu0 0.0
    %199 = vmatpush1.msra.mxu0 0.0
    %200 = vmatprep.subr.mxu0 0.0
    %201 = vmatpush1.msra.mxu0 0.0
    %202 = vmatprep.subr.mxu0 0.0
    %203 = vmatpush1.msra.mxu0 0.0
    %204 = vmatprep.subr.mxu0 0.0
    %205 = vmatpush1.msra.mxu0 0.0
    %206 = vmatprep.subr.mxu0 0.0
    %207 = vmatpush1.msra.mxu0 0.0
    %208 = vmatprep.subr.mxu0 0.0
    %209 = vmatpush1.msra.mxu0 0.0
    %210 = vmatprep.subr.mxu0 0.0
    %211 = vmatpush1.msra.mxu0 0.0
    %212 = vmatprep.subr.mxu0 0.0
    %213 = vmatpush1.msra.mxu0 0.0
    %214 = vmatprep.subr.mxu0 0.0
    %215 = vmatpush1.msra.mxu0 0.0
    %216 = vmatprep.subr.mxu0 0.0
    %217 = vmatpush1.msra.mxu0 0.0
    %218 = vmatprep.subr.mxu0 0.0
    %219 = vmatpush1.msra.mxu0 0.0
    %220 = vmatprep.subr.mxu0 0.0
    %221 = vmatpush1.msra.mxu0 0.0
    %222 = vmatprep.subr.mxu0 0.0
    %223 = vmatpush1.msra.mxu0 0.0
    %224 = vmatprep.subr.mxu0 0.0
    %225 = vmatpush1.msra.mxu0 0.0
    %226 = vmatprep.subr.mxu0 0.0
    %227 = vmatpush1.msra.mxu0 0.0
    %228 = vmatprep.subr.mxu0 0.0
    %229 = vmatpush1.msra.mxu0 0.0
    %230 = vmatprep.subr.mxu0 0.0
    %231 = vmatpush1.msra.mxu0 0.0
    %232 = vmatprep.subr.mxu0 0.0
    %233 = vmatpush1.msra.mxu0 0.0
    %234 = vmatprep.mubr.f32.mxu0 0.0
    %235 = vmatmul.mubr.f32.gmra.mrb[0].mxu0 %v97
    %v236 = vpop.f32.mrb[0].mxu0
    %v237 = vadd.f32 %v86, %v236
    %v238 = vpop.f32.mrb[0].mxu0
    %v239 = vadd.f32 %v90, %v238
    %240 = vdwg.mxu0
    %v241 = vxor.u32 %v166, 2147483648
    %v242 = vmul.f32 %v241, 1.442695
    %v243 = vpow.pop %v242
    %v244 = vadd.f32 %v243, 1.0
    %v245 = vrcp.pop %v244
    %v246 = vmul.f32 1.0, %v245
    %v247 = vxor.u32 %v168, 2147483648
    %v248 = vmul.f32 %v247, 1.442695
    %v249 = vpow.pop %v248
    %v250 = vadd.f32 %v249, 1.0
    %v251 = vrcp.pop %v250
    %v252 = vmul.f32 1.0, %v251
    %v253 = vtanh.pop %v237
    %v254 = vxor.u32 %v239, 2147483648
    %v255 = vmul.f32 %v254, 1.442695
    %v256 = vpow.pop %v255
    %v257 = vadd.f32 %v256, 1.0
    %v258 = vrcp.pop %v257
    %v259 = vmul.f32 1.0, %v258
    %v260 = vmul.f32 %v252, 0.0
    %v261 = vmul.f32 %v246, %v253
    %v262 = vadd.f32 %v260, %v261
    %v263 = vtanh.pop %v262
    %v264 = vmul.f32 %v259, %v263
    %v265 = vpack.c.bf16 %v264, %v264
    %v266 = vpack.c.bf16 0.0, 0.0
    %v267 = vld [vmem:[#allocation2] sm:$0xff]
    %v268 = vld [vmem:[#allocation2 + $0x8] sm:$0xff]
    %v269 = vld [vmem:[#allocation2 + $0x10] sm:$0xff]
    %v270 = vld [vmem:[#allocation2 + $0x18] sm:$0xff]
    %v271 = vld [vmem:[#allocation2 + $0x20] sm:$0xff]
    %v272 = vld [vmem:[#allocation2 + $0x28] sm:$0xff]
    %v273 = vld [vmem:[#allocation2 + $0x30] sm:$0xff]
    %v274 = vld [vmem:[#allocation2 + $0x38] sm:$0xff]
    %v275 = vld [vmem:[#allocation2 + $0x40] sm:$0xff]
    %v276 = vld [vmem:[#allocation2 + $0x48] sm:$0xff]
    %v277 = vld [vmem:[#allocation2 + $0x50] sm:$0xff]
    %v278 = vld [vmem:[#allocation2 + $0x58] sm:$0xff]
    %v279 = vld [vmem:[#allocation2 + $0x60] sm:$0xff]
    %v280 = vld [vmem:[#allocation2 + $0x68] sm:$0xff]
    %v281 = vld [vmem:[#allocation2 + $0x70] sm:$0xff]
    %v282 = vld [vmem:[#allocation2 + $0x78] sm:$0xff]
    %v283 = vld [vmem:[#allocation2 + $0x80] sm:$0xff]
    %v284 = vld [vmem:[#allocation2 + $0x88] sm:$0xff]
    %v285 = vld [vmem:[#allocation2 + $0x90] sm:$0xff]
    %v286 = vld [vmem:[#allocation2 + $0x98] sm:$0xff]
    %v287 = vld [vmem:[#allocation2 + $0xa0] sm:$0xff]
    %v288 = vld [vmem:[#allocation2 + $0xa8] sm:$0xff]
    %v289 = vld [vmem:[#allocation2 + $0xb0] sm:$0xff]
    %v290 = vld [vmem:[#allocation2 + $0xb8] sm:$0xff]
    %v291 = vld [vmem:[#allocation2 + $0xc0] sm:$0xff]
    %v292 = vld [vmem:[#allocation2 + $0xc8] sm:$0xff]
    %v293 = vld [vmem:[#allocation2 + $0xd0] sm:$0xff]
    %v294 = vld [vmem:[#allocation2 + $0xd8] sm:$0xff]
    %v295 = vld [vmem:[#allocation2 + $0xe0] sm:$0xff]
    %v296 = vld [vmem:[#allocation2 + $0xe8] sm:$0xff]
    %v297 = vld [vmem:[#allocation2 + $0xf0] sm:$0xff]
    %v298 = vld [vmem:[#allocation2 + $0xf8] sm:$0xff]
    %v299 = vld [vmem:[#allocation2 + $0x100] sm:$0xff]
    %v300 = vld [vmem:[#allocation2 + $0x108] sm:$0xff]
    %v301 = vld [vmem:[#allocation2 + $0x110] sm:$0xff]
    %v302 = vld [vmem:[#allocation2 + $0x118] sm:$0xff]
    %v303 = vld [vmem:[#allocation2 + $0x120] sm:$0xff]
    %v304 = vld [vmem:[#allocation2 + $0x128] sm:$0xff]
    %v305 = vld [vmem:[#allocation2 + $0x130] sm:$0xff]
    %v306 = vld [vmem:[#allocation2 + $0x138] sm:$0xff]
    %v307 = vld [vmem:[#allocation2 + $0x140] sm:$0xff]
    %v308 = vld [vmem:[#allocation2 + $0x148] sm:$0xff]
    %v309 = vld [vmem:[#allocation2 + $0x150] sm:$0xff]
    %v310 = vld [vmem:[#allocation2 + $0x158] sm:$0xff]
    %v311 = vld [vmem:[#allocation2 + $0x160] sm:$0xff]
    %v312 = vld [vmem:[#allocation2 + $0x168] sm:$0xff]
    %v313 = vld [vmem:[#allocation2 + $0x170] sm:$0xff]
    %v314 = vld [vmem:[#allocation2 + $0x178] sm:$0xff]
    %v315 = vld [vmem:[#allocation2 + $0x180] sm:$0xff]
    %v316 = vld [vmem:[#allocation2 + $0x188] sm:$0xff]
    %v317 = vld [vmem:[#allocation2 + $0x190] sm:$0xff]
    %v318 = vld [vmem:[#allocation2 + $0x198] sm:$0xff]
    %v319 = vld [vmem:[#allocation2 + $0x1a0] sm:$0xff]
    %v320 = vld [vmem:[#allocation2 + $0x1a8] sm:$0xff]
    %v321 = vld [vmem:[#allocation2 + $0x1b0] sm:$0xff]
    %v322 = vld [vmem:[#allocation2 + $0x1b8] sm:$0xff]
    %v323 = vld [vmem:[#allocation2 + $0x1c0] sm:$0xff]
    %v324 = vld [vmem:[#allocation2 + $0x1c8] sm:$0xff]
    %v325 = vld [vmem:[#allocation2 + $0x1d0] sm:$0xff]
    %v326 = vld [vmem:[#allocation2 + $0x1d8] sm:$0xff]
    %v327 = vld [vmem:[#allocation2 + $0x1e0] sm:$0xff]
    %v328 = vld [vmem:[#allocation2 + $0x1e8] sm:$0xff]
    %v329 = vld [vmem:[#allocation2 + $0x1f0] sm:$0xff]
    %v330 = vld [vmem:[#allocation2 + $0x1f8] sm:$0xff]
    %v331 = vld [vmem:[#allocation2 + $0x200] sm:$0xff]
    %v332 = vld [vmem:[#allocation2 + $0x208] sm:$0xff]
    %v333 = vld [vmem:[#allocation2 + $0x210] sm:$0xff]
    %v334 = vld [vmem:[#allocation2 + $0x218] sm:$0xff]
    %v335 = vld [vmem:[#allocation2 + $0x220] sm:$0xff]
    %v336 = vld [vmem:[#allocation2 + $0x228] sm:$0xff]
    %v337 = vld [vmem:[#allocation2 + $0x230] sm:$0xff]
    %v338 = vld [vmem:[#allocation2 + $0x238] sm:$0xff]
    %v339 = vld [vmem:[#allocation2 + $0x240] sm:$0xff]
    %v340 = vld [vmem:[#allocation2 + $0x248] sm:$0xff]
    %v341 = vld [vmem:[#allocation2 + $0x250] sm:$0xff]
    %v342 = vld [vmem:[#allocation2 + $0x258] sm:$0xff]
    %v343 = vld [vmem:[#allocation2 + $0x260] sm:$0xff]
    %v344 = vld [vmem:[#allocation2 + $0x268] sm:$0xff]
    %v345 = vld [vmem:[#allocation2 + $0x270] sm:$0xff]
    %v346 = vld [vmem:[#allocation2 + $0x278] sm:$0xff]
    %v347 = vld [vmem:[#allocation2 + $0x280] sm:$0xff]
    %v348 = vld [vmem:[#allocation2 + $0x288] sm:$0xff]
    %v349 = vld [vmem:[#allocation2 + $0x290] sm:$0xff]
    %v350 = vld [vmem:[#allocation2 + $0x298] sm:$0xff]
    %v351 = vld [vmem:[#allocation2 + $0x2a0] sm:$0xff]
    %v352 = vld [vmem:[#allocation2 + $0x2a8] sm:$0xff]
    %v353 = vld [vmem:[#allocation2 + $0x2b0] sm:$0xff]
    %v354 = vld [vmem:[#allocation2 + $0x2b8] sm:$0xff]
    %v355 = vld [vmem:[#allocation2 + $0x2c0] sm:$0xff]
    %v356 = vld [vmem:[#allocation2 + $0x2c8] sm:$0xff]
    %v357 = vld [vmem:[#allocation2 + $0x2d0] sm:$0xff]
    %v358 = vld [vmem:[#allocation2 + $0x2d8] sm:$0xff]
    %v359 = vld [vmem:[#allocation2 + $0x2e0] sm:$0xff]
    %v360 = vld [vmem:[#allocation2 + $0x2e8] sm:$0xff]
    %v361 = vld [vmem:[#allocation2 + $0x2f0] sm:$0xff]
    %v362 = vld [vmem:[#allocation2 + $0x2f8] sm:$0xff]
    %v363 = vld [vmem:[#allocation2 + $0x300] sm:$0xff]
    %v364 = vld [vmem:[#allocation2 + $0x308] sm:$0xff]
    %v365 = vld [vmem:[#allocation2 + $0x310] sm:$0xff]
    %v366 = vld [vmem:[#allocation2 + $0x318] sm:$0xff]
    %v367 = vld [vmem:[#allocation2 + $0x320] sm:$0xff]
    %v368 = vld [vmem:[#allocation2 + $0x328] sm:$0xff]
    %v369 = vld [vmem:[#allocation2 + $0x330] sm:$0xff]
    %v370 = vld [vmem:[#allocation2 + $0x338] sm:$0xff]
    %v371 = vld [vmem:[#allocation2 + $0x340] sm:$0xff]
    %v372 = vld [vmem:[#allocation2 + $0x348] sm:$0xff]
    %v373 = vld [vmem:[#allocation2 + $0x350] sm:$0xff]
    %v374 = vld [vmem:[#allocation2 + $0x358] sm:$0xff]
    %v375 = vld [vmem:[#allocation2 + $0x360] sm:$0xff]
    %v376 = vld [vmem:[#allocation2 + $0x368] sm:$0xff]
    %v377 = vld [vmem:[#allocation2 + $0x370] sm:$0xff]
    %v378 = vld [vmem:[#allocation2 + $0x378] sm:$0xff]
    %v379 = vld [vmem:[#allocation2 + $0x380] sm:$0xff]
    %v380 = vld [vmem:[#allocation2 + $0x388] sm:$0xff]
    %v381 = vld [vmem:[#allocation2 + $0x390] sm:$0xff]
    %v382 = vld [vmem:[#allocation2 + $0x398] sm:$0xff]
    %v383 = vld [vmem:[#allocation2 + $0x3a0] sm:$0xff]
    %v384 = vld [vmem:[#allocation2 + $0x3a8] sm:$0xff]
    %v385 = vld [vmem:[#allocation2 + $0x3b0] sm:$0xff]
    %v386 = vld [vmem:[#allocation2 + $0x3b8] sm:$0xff]
    %v387 = vld [vmem:[#allocation2 + $0x3c0] sm:$0xff]
    %v388 = vld [vmem:[#allocation2 + $0x3c8] sm:$0xff]
    %v389 = vld [vmem:[#allocation2 + $0x3d0] sm:$0xff]
    %v390 = vld [vmem:[#allocation2 + $0x3d8] sm:$0xff]
    %v391 = vld [vmem:[#allocation2 + $0x3e0] sm:$0xff]
    %v392 = vld [vmem:[#allocation2 + $0x3e8] sm:$0xff]
    %v393 = vld [vmem:[#allocation2 + $0x3f0] sm:$0xff]
    %v394 = vld [vmem:[#allocation2 + $0x3f8] sm:$0xff]
    %v523 = vunpack.c.l.b16 %v267
    %v524 = vunpack.c.h.b16 %v267
    %v525 = vunpack.c.l.b16 %v268
    %v526 = vunpack.c.h.b16 %v268
    %v527 = vunpack.c.l.b16 %v269
    %v528 = vunpack.c.h.b16 %v269
    %v529 = vunpack.c.l.b16 %v270
    %v530 = vunpack.c.h.b16 %v270
    %v531 = vunpack.c.l.b16 %v271
    %v532 = vunpack.c.h.b16 %v271
    %v533 = vunpack.c.l.b16 %v272
    %v534 = vunpack.c.h.b16 %v272
    %v535 = vunpack.c.l.b16 %v273
    %v536 = vunpack.c.h.b16 %v273
    %v537 = vunpack.c.l.b16 %v274
    %v538 = vunpack.c.h.b16 %v274
    %v539 = vunpack.c.l.b16 %v275
    %v540 = vunpack.c.h.b16 %v275
    %v541 = vunpack.c.l.b16 %v276
    %v542 = vunpack.c.h.b16 %v276
    %v543 = vunpack.c.l.b16 %v277
    %v544 = vunpack.c.h.b16 %v277
    %v545 = vunpack.c.l.b16 %v278
    %v546 = vunpack.c.h.b16 %v278
    %v547 = vunpack.c.l.b16 %v279
    %v548 = vunpack.c.h.b16 %v279
    %v549 = vunpack.c.l.b16 %v280
    %v550 = vunpack.c.h.b16 %v280
    %v551 = vunpack.c.l.b16 %v281
    %v552 = vunpack.c.h.b16 %v281
    %v553 = vunpack.c.l.b16 %v282
    %v554 = vunpack.c.h.b16 %v282
    %v555 = vunpack.c.l.b16 %v283
    %v556 = vunpack.c.h.b16 %v283
    %v557 = vunpack.c.l.b16 %v284
    %v558 = vunpack.c.h.b16 %v284
    %v559 = vunpack.c.l.b16 %v285
    %v560 = vunpack.c.h.b16 %v285
    %v561 = vunpack.c.l.b16 %v286
    %v562 = vunpack.c.h.b16 %v286
    %v563 = vunpack.c.l.b16 %v287
    %v564 = vunpack.c.h.b16 %v287
    %v565 = vunpack.c.l.b16 %v288
    %v566 = vunpack.c.h.b16 %v288
    %v567 = vunpack.c.l.b16 %v289
    %v568 = vunpack.c.h.b16 %v289
    %v569 = vunpack.c.l.b16 %v290
    %v570 = vunpack.c.h.b16 %v290
    %v571 = vunpack.c.l.b16 %v291
    %v572 = vunpack.c.h.b16 %v291
    %v573 = vunpack.c.l.b16 %v292
    %v574 = vunpack.c.h.b16 %v292
    %v575 = vunpack.c.l.b16 %v293
    %v576 = vunpack.c.h.b16 %v293
    %v577 = vunpack.c.l.b16 %v294
    %v578 = vunpack.c.h.b16 %v294
    %v579 = vunpack.c.l.b16 %v295
    %v580 = vunpack.c.h.b16 %v295
    %v581 = vunpack.c.l.b16 %v296
    %v582 = vunpack.c.h.b16 %v296
    %v583 = vunpack.c.l.b16 %v297
    %v584 = vunpack.c.h.b16 %v297
    %v585 = vunpack.c.l.b16 %v298
    %v586 = vunpack.c.h.b16 %v298
    %v587 = vunpack.c.l.b16 %v299
    %v588 = vunpack.c.h.b16 %v299
    %v589 = vunpack.c.l.b16 %v300
    %v590 = vunpack.c.h.b16 %v300
    %v591 = vunpack.c.l.b16 %v301
    %v592 = vunpack.c.h.b16 %v301
    %v593 = vunpack.c.l.b16 %v302
    %v594 = vunpack.c.h.b16 %v302
    %v595 = vunpack.c.l.b16 %v303
    %v596 = vunpack.c.h.b16 %v303
    %v597 = vunpack.c.l.b16 %v304
    %v598 = vunpack.c.h.b16 %v304
    %v599 = vunpack.c.l.b16 %v305
    %v600 = vunpack.c.h.b16 %v305
    %v601 = vunpack.c.l.b16 %v306
    %v602 = vunpack.c.h.b16 %v306
    %v603 = vunpack.c.l.b16 %v307
    %v604 = vunpack.c.h.b16 %v307
    %v605 = vunpack.c.l.b16 %v308
    %v606 = vunpack.c.h.b16 %v308
    %v607 = vunpack.c.l.b16 %v309
    %v608 = vunpack.c.h.b16 %v309
    %v609 = vunpack.c.l.b16 %v310
    %v610 = vunpack.c.h.b16 %v310
    %v611 = vunpack.c.l.b16 %v311
    %v612 = vunpack.c.h.b16 %v311
    %v613 = vunpack.c.l.b16 %v312
    %v614 = vunpack.c.h.b16 %v312
    %v615 = vunpack.c.l.b16 %v313
    %v616 = vunpack.c.h.b16 %v313
    %v617 = vunpack.c.l.b16 %v314
    %v618 = vunpack.c.h.b16 %v314
    %v619 = vunpack.c.l.b16 %v315
    %v620 = vunpack.c.h.b16 %v315
    %v621 = vunpack.c.l.b16 %v316
    %v622 = vunpack.c.h.b16 %v316
    %v623 = vunpack.c.l.b16 %v317
    %v624 = vunpack.c.h.b16 %v317
    %v625 = vunpack.c.l.b16 %v318
    %v626 = vunpack.c.h.b16 %v318
    %v627 = vunpack.c.l.b16 %v319
    %v628 = vunpack.c.h.b16 %v319
    %v629 = vunpack.c.l.b16 %v320
    %v630 = vunpack.c.h.b16 %v320
    %v631 = vunpack.c.l.b16 %v321
    %v632 = vunpack.c.h.b16 %v321
    %v633 = vunpack.c.l.b16 %v322
    %v634 = vunpack.c.h.b16 %v322
    %v635 = vunpack.c.l.b16 %v323
    %v636 = vunpack.c.h.b16 %v323
    %v637 = vunpack.c.l.b16 %v324
    %v638 = vunpack.c.h.b16 %v324
    %v639 = vunpack.c.l.b16 %v325
    %v640 = vunpack.c.h.b16 %v325
    %v641 = vunpack.c.l.b16 %v326
    %v642 = vunpack.c.h.b16 %v326
    %v643 = vunpack.c.l.b16 %v327
    %v644 = vunpack.c.h.b16 %v327
    %v645 = vunpack.c.l.b16 %v328
    %v646 = vunpack.c.h.b16 %v328
    %v647 = vunpack.c.l.b16 %v329
    %v648 = vunpack.c.h.b16 %v329
    %v649 = vunpack.c.l.b16 %v330
    %v650 = vunpack.c.h.b16 %v330
    %v651 = vunpack.c.l.b16 %v331
    %v652 = vunpack.c.h.b16 %v331
    %v653 = vunpack.c.l.b16 %v332
    %v654 = vunpack.c.h.b16 %v332
    %v655 = vunpack.c.l.b16 %v333
    %v656 = vunpack.c.h.b16 %v333
    %v657 = vunpack.c.l.b16 %v334
    %v658 = vunpack.c.h.b16 %v334
    %v659 = vunpack.c.l.b16 %v335
    %v660 = vunpack.c.h.b16 %v335
    %v661 = vunpack.c.l.b16 %v336
    %v662 = vunpack.c.h.b16 %v336
    %v663 = vunpack.c.l.b16 %v337
    %v664 = vunpack.c.h.b16 %v337
    %v665 = vunpack.c.l.b16 %v338
    %v666 = vunpack.c.h.b16 %v338
    %v667 = vunpack.c.l.b16 %v339
    %v668 = vunpack.c.h.b16 %v339
    %v669 = vunpack.c.l.b16 %v340
    %v670 = vunpack.c.h.b16 %v340
    %v671 = vunpack.c.l.b16 %v341
    %v672 = vunpack.c.h.b16 %v341
    %v673 = vunpack.c.l.b16 %v342
    %v674 = vunpack.c.h.b16 %v342
    %v675 = vunpack.c.l.b16 %v343
    %v676 = vunpack.c.h.b16 %v343
    %v677 = vunpack.c.l.b16 %v344
    %v678 = vunpack.c.h.b16 %v344
    %v679 = vunpack.c.l.b16 %v345
    %v680 = vunpack.c.h.b16 %v345
    %v681 = vunpack.c.l.b16 %v346
    %v682 = vunpack.c.h.b16 %v346
    %v683 = vunpack.c.l.b16 %v347
    %v684 = vunpack.c.h.b16 %v347
    %v685 = vunpack.c.l.b16 %v348
    %v686 = vunpack.c.h.b16 %v348
    %v687 = vunpack.c.l.b16 %v349
    %v688 = vunpack.c.h.b16 %v349
    %v689 = vunpack.c.l.b16 %v350
    %v690 = vunpack.c.h.b16 %v350
    %v691 = vunpack.c.l.b16 %v351
    %v692 = vunpack.c.h.b16 %v351
    %v693 = vunpack.c.l.b16 %v352
    %v694 = vunpack.c.h.b16 %v352
    %v695 = vunpack.c.l.b16 %v353
    %v696 = vunpack.c.h.b16 %v353
    %v697 = vunpack.c.l.b16 %v354
    %v698 = vunpack.c.h.b16 %v354
    %v699 = vunpack.c.l.b16 %v355
    %v700 = vunpack.c.h.b16 %v355
    %v701 = vunpack.c.l.b16 %v356
    %v702 = vunpack.c.h.b16 %v356
    %v703 = vunpack.c.l.b16 %v357
    %v704 = vunpack.c.h.b16 %v357
    %v705 = vunpack.c.l.b16 %v358
    %v706 = vunpack.c.h.b16 %v358
    %v707 = vunpack.c.l.b16 %v359
    %v708 = vunpack.c.h.b16 %v359
    %v709 = vunpack.c.l.b16 %v360
    %v710 = vunpack.c.h.b16 %v360
    %v711 = vunpack.c.l.b16 %v361
    %v712 = vunpack.c.h.b16 %v361
    %v713 = vunpack.c.l.b16 %v362
    %v714 = vunpack.c.h.b16 %v362
    %v715 = vunpack.c.l.b16 %v363
    %v716 = vunpack.c.h.b16 %v363
    %v717 = vunpack.c.l.b16 %v364
    %v718 = vunpack.c.h.b16 %v364
    %v719 = vunpack.c.l.b16 %v365
    %v720 = vunpack.c.h.b16 %v365
    %v721 = vunpack.c.l.b16 %v366
    %v722 = vunpack.c.h.b16 %v366
    %v723 = vunpack.c.l.b16 %v367
    %v724 = vunpack.c.h.b16 %v367
    %v725 = vunpack.c.l.b16 %v368
    %v726 = vunpack.c.h.b16 %v368
    %v727 = vunpack.c.l.b16 %v369
    %v728 = vunpack.c.h.b16 %v369
    %v729 = vunpack.c.l.b16 %v370
    %v730 = vunpack.c.h.b16 %v370
    %v731 = vunpack.c.l.b16 %v371
    %v732 = vunpack.c.h.b16 %v371
    %v733 = vunpack.c.l.b16 %v372
    %v734 = vunpack.c.h.b16 %v372
    %v735 = vunpack.c.l.b16 %v373
    %v736 = vunpack.c.h.b16 %v373
    %v737 = vunpack.c.l.b16 %v374
    %v738 = vunpack.c.h.b16 %v374
    %v739 = vunpack.c.l.b16 %v375
    %v740 = vunpack.c.h.b16 %v375
    %v741 = vunpack.c.l.b16 %v376
    %v742 = vunpack.c.h.b16 %v376
    %v743 = vunpack.c.l.b16 %v377
    %v744 = vunpack.c.h.b16 %v377
    %v745 = vunpack.c.l.b16 %v378
    %v746 = vunpack.c.h.b16 %v378
    %v747 = vunpack.c.l.b16 %v379
    %v748 = vunpack.c.h.b16 %v379
    %v749 = vunpack.c.l.b16 %v380
    %v750 = vunpack.c.h.b16 %v380
    %v751 = vunpack.c.l.b16 %v381
    %v752 = vunpack.c.h.b16 %v381
    %v753 = vunpack.c.l.b16 %v382
    %v754 = vunpack.c.h.b16 %v382
    %v755 = vunpack.c.l.b16 %v383
    %v756 = vunpack.c.h.b16 %v383
    %v757 = vunpack.c.l.b16 %v384
    %v758 = vunpack.c.h.b16 %v384
    %v759 = vunpack.c.l.b16 %v385
    %v760 = vunpack.c.h.b16 %v385
    %v761 = vunpack.c.l.b16 %v386
    %v762 = vunpack.c.h.b16 %v386
    %v763 = vunpack.c.l.b16 %v387
    %v764 = vunpack.c.h.b16 %v387
    %v765 = vunpack.c.l.b16 %v388
    %v766 = vunpack.c.h.b16 %v388
    %v767 = vunpack.c.l.b16 %v389
    %v768 = vunpack.c.h.b16 %v389
    %v769 = vunpack.c.l.b16 %v390
    %v770 = vunpack.c.h.b16 %v390
    %v771 = vunpack.c.l.b16 %v391
    %v772 = vunpack.c.h.b16 %v391
    %v773 = vunpack.c.l.b16 %v392
    %v774 = vunpack.c.h.b16 %v392
    %v775 = vunpack.c.l.b16 %v393
    %v776 = vunpack.c.h.b16 %v393
    %v777 = vunpack.c.l.b16 %v394
    %v778 = vunpack.c.h.b16 %v394
    %v779 = vpack.c.b16 %v531, %v523
    %v780 = vpack.c.b16 %v532, %v524
    %v781 = vpack.c.b16 %v533, %v525
    %v782 = vpack.c.b16 %v534, %v526
    %v783 = vpack.c.b16 %v535, %v527
    %v784 = vpack.c.b16 %v536, %v528
    %v785 = vpack.c.b16 %v537, %v529
    %v786 = vpack.c.b16 %v538, %v530
    %v787 = vpack.c.b16 %v547, %v539
    %v788 = vpack.c.b16 %v548, %v540
    %v789 = vpack.c.b16 %v549, %v541
    %v790 = vpack.c.b16 %v550, %v542
    %v791 = vpack.c.b16 %v551, %v543
    %v792 = vpack.c.b16 %v552, %v544
    %v793 = vpack.c.b16 %v553, %v545
    %v794 = vpack.c.b16 %v554, %v546
    %v795 = vpack.c.b16 %v563, %v555
    %v796 = vpack.c.b16 %v564, %v556
    %v797 = vpack.c.b16 %v565, %v557
    %v798 = vpack.c.b16 %v566, %v558
    %v799 = vpack.c.b16 %v567, %v559
    %v800 = vpack.c.b16 %v568, %v560
    %v801 = vpack.c.b16 %v569, %v561
    %v802 = vpack.c.b16 %v570, %v562
    %v803 = vpack.c.b16 %v579, %v571
    %v804 = vpack.c.b16 %v580, %v572
    %v805 = vpack.c.b16 %v581, %v573
    %v806 = vpack.c.b16 %v582, %v574
    %v807 = vpack.c.b16 %v583, %v575
    %v808 = vpack.c.b16 %v584, %v576
    %v809 = vpack.c.b16 %v585, %v577
    %v810 = vpack.c.b16 %v586, %v578
    %v811 = vpack.c.b16 %v595, %v587
    %v812 = vpack.c.b16 %v596, %v588
    %v813 = vpack.c.b16 %v597, %v589
    %v814 = vpack.c.b16 %v598, %v590
    %v815 = vpack.c.b16 %v599, %v591
    %v816 = vpack.c.b16 %v600, %v592
    %v817 = vpack.c.b16 %v601, %v593
    %v818 = vpack.c.b16 %v602, %v594
    %v819 = vpack.c.b16 %v611, %v603
    %v820 = vpack.c.b16 %v612, %v604
    %v821 = vpack.c.b16 %v613, %v605
    %v822 = vpack.c.b16 %v614, %v606
    %v823 = vpack.c.b16 %v615, %v607
    %v824 = vpack.c.b16 %v616, %v608
    %v825 = vpack.c.b16 %v617, %v609
    %v826 = vpack.c.b16 %v618, %v610
    %v827 = vpack.c.b16 %v627, %v619
    %v828 = vpack.c.b16 %v628, %v620
    %v829 = vpack.c.b16 %v629, %v621
    %v830 = vpack.c.b16 %v630, %v622
    %v831 = vpack.c.b16 %v631, %v623
    %v832 = vpack.c.b16 %v632, %v624
    %v833 = vpack.c.b16 %v633, %v625
    %v834 = vpack.c.b16 %v634, %v626
    %v835 = vpack.c.b16 %v643, %v635
    %v836 = vpack.c.b16 %v644, %v636
    %v837 = vpack.c.b16 %v645, %v637
    %v838 = vpack.c.b16 %v646, %v638
    %v839 = vpack.c.b16 %v647, %v639
    %v840 = vpack.c.b16 %v648, %v640
    %v841 = vpack.c.b16 %v649, %v641
    %v842 = vpack.c.b16 %v650, %v642
    %v843 = vpack.c.b16 %v659, %v651
    %v844 = vpack.c.b16 %v660, %v652
    %v845 = vpack.c.b16 %v661, %v653
    %v846 = vpack.c.b16 %v662, %v654
    %v847 = vpack.c.b16 %v663, %v655
    %v848 = vpack.c.b16 %v664, %v656
    %v849 = vpack.c.b16 %v665, %v657
    %v850 = vpack.c.b16 %v666, %v658
    %v851 = vpack.c.b16 %v675, %v667
    %v852 = vpack.c.b16 %v676, %v668
    %v853 = vpack.c.b16 %v677, %v669
    %v854 = vpack.c.b16 %v678, %v670
    %v855 = vpack.c.b16 %v679, %v671
    %v856 = vpack.c.b16 %v680, %v672
    %v857 = vpack.c.b16 %v681, %v673
    %v858 = vpack.c.b16 %v682, %v674
    %v859 = vpack.c.b16 %v691, %v683
    %v860 = vpack.c.b16 %v692, %v684
    %v861 = vpack.c.b16 %v693, %v685
    %v862 = vpack.c.b16 %v694, %v686
    %v863 = vpack.c.b16 %v695, %v687
    %v864 = vpack.c.b16 %v696, %v688
    %v865 = vpack.c.b16 %v697, %v689
    %v866 = vpack.c.b16 %v698, %v690
    %v867 = vpack.c.b16 %v707, %v699
    %v868 = vpack.c.b16 %v708, %v700
    %v869 = vpack.c.b16 %v709, %v701
    %v870 = vpack.c.b16 %v710, %v702
    %v871 = vpack.c.b16 %v711, %v703
    %v872 = vpack.c.b16 %v712, %v704
    %v873 = vpack.c.b16 %v713, %v705
    %v874 = vpack.c.b16 %v714, %v706
    %v875 = vpack.c.b16 %v723, %v715
    %v876 = vpack.c.b16 %v724, %v716
    %v877 = vpack.c.b16 %v725, %v717
    %v878 = vpack.c.b16 %v726, %v718
    %v879 = vpack.c.b16 %v727, %v719
    %v880 = vpack.c.b16 %v728, %v720
    %v881 = vpack.c.b16 %v729, %v721
    %v882 = vpack.c.b16 %v730, %v722
    %v883 = vpack.c.b16 %v739, %v731
    %v884 = vpack.c.b16 %v740, %v732
    %v885 = vpack.c.b16 %v741, %v733
    %v886 = vpack.c.b16 %v742, %v734
    %v887 = vpack.c.b16 %v743, %v735
    %v888 = vpack.c.b16 %v744, %v736
    %v889 = vpack.c.b16 %v745, %v737
    %v890 = vpack.c.b16 %v746, %v738
    %v891 = vpack.c.b16 %v755, %v747
    %v892 = vpack.c.b16 %v756, %v748
    %v893 = vpack.c.b16 %v757, %v749
    %v894 = vpack.c.b16 %v758, %v750
    %v895 = vpack.c.b16 %v759, %v751
    %v896 = vpack.c.b16 %v760, %v752
    %v897 = vpack.c.b16 %v761, %v753
    %v898 = vpack.c.b16 %v762, %v754
    %v899 = vpack.c.b16 %v771, %v763
    %v900 = vpack.c.b16 %v772, %v764
    %v901 = vpack.c.b16 %v773, %v765
    %v902 = vpack.c.b16 %v774, %v766
    %v903 = vpack.c.b16 %v775, %v767
    %v904 = vpack.c.b16 %v776, %v768
    %v905 = vpack.c.b16 %v777, %v769
    %v906 = vpack.c.b16 %v778, %v770
    %1035 = vmatprep.subr.bf16.mxu0 %v780
    %1036 = vmatpush1.bf16.msra.mxu0 %v779
    %1037 = vmatprep.subr.bf16.mxu0 %v788
    %1038 = vmatpush1.bf16.msra.mxu0 %v787
    %1039 = vmatprep.subr.bf16.mxu0 %v796
    %1040 = vmatpush1.bf16.msra.mxu0 %v795
    %1041 = vmatprep.subr.bf16.mxu0 %v804
    %1042 = vmatpush1.bf16.msra.mxu0 %v803
    %1043 = vmatprep.subr.bf16.mxu0 %v812
    %1044 = vmatpush1.bf16.msra.mxu0 %v811
    %1045 = vmatprep.subr.bf16.mxu0 %v820
    %1046 = vmatpush1.bf16.msra.mxu0 %v819
    %1047 = vmatprep.subr.bf16.mxu0 %v828
    %1048 = vmatpush1.bf16.msra.mxu0 %v827
    %1049 = vmatprep.subr.bf16.mxu0 %v836
    %1050 = vmatpush1.bf16.msra.mxu0 %v835
    %1051 = vmatprep.subr.bf16.mxu0 %v844
    %1052 = vmatpush1.bf16.msra.mxu0 %v843
    %1053 = vmatprep.subr.bf16.mxu0 %v852
    %1054 = vmatpush1.bf16.msra.mxu0 %v851
    %1055 = vmatprep.subr.bf16.mxu0 %v860
    %1056 = vmatpush1.bf16.msra.mxu0 %v859
    %1057 = vmatprep.subr.bf16.mxu0 %v868
    %1058 = vmatpush1.bf16.msra.mxu0 %v867
    %1059 = vmatprep.subr.bf16.mxu0 %v876
    %1060 = vmatpush1.bf16.msra.mxu0 %v875
    %1061 = vmatprep.subr.bf16.mxu0 %v884
    %1062 = vmatpush1.bf16.msra.mxu0 %v883
    %1063 = vmatprep.subr.bf16.mxu0 %v892
    %1064 = vmatpush1.bf16.msra.mxu0 %v891
    %1065 = vmatprep.subr.bf16.mxu0 %v900
    %1066 = vmatpush1.bf16.msra.mxu0 %v899
    %1067 = vmatprep.mubr.bf16.mxu0 %v266
    %1068 = vmatmul.mubr.bf16.gmra.mrb[0].mxu0 %v265
    %v1069 = vpop.f32.mrb[0].mxu0
    %v1070 = vadd.f32 0.0, %v1069
    %v1071 = vpop.f32.mrb[0].mxu0
    %v1072 = vadd.f32 0.0, %v1071
    %v1073 = vpop.f32.mrb[0].mxu0
    %v1074 = vpop.f32.mrb[0].mxu0
    %1075 = vdwg.mxu0
    %1076 = vmatprep.subr.bf16.mxu0 %v782
    %1077 = vmatpush1.bf16.msra.mxu0 %v781
    %1078 = vmatprep.subr.bf16.mxu0 %v790
    %1079 = vmatpush1.bf16.msra.mxu0 %v789
    %1080 = vmatprep.subr.bf16.mxu0 %v798
    %1081 = vmatpush1.bf16.msra.mxu0 %v797
    %1082 = vmatprep.subr.bf16.mxu0 %v806
    %1083 = vmatpush1.bf16.msra.mxu0 %v805
    %1084 = vmatprep.subr.bf16.mxu0 %v814
    %1085 = vmatpush1.bf16.msra.mxu0 %v813
    %1086 = vmatprep.subr.bf16.mxu0 %v822
    %1087 = vmatpush1.bf16.msra.mxu0 %v821
    %1088 = vmatprep.subr.bf16.mxu0 %v830
    %1089 = vmatpush1.bf16.msra.mxu0 %v829
    %1090 = vmatprep.subr.bf16.mxu0 %v838
    %1091 = vmatpush1.bf16.msra.mxu0 %v837
    %1092 = vmatprep.subr.bf16.mxu0 %v846
    %1093 = vmatpush1.bf16.msra.mxu0 %v845
    %1094 = vmatprep.subr.bf16.mxu0 %v854
    %1095 = vmatpush1.bf16.msra.mxu0 %v853
    %1096 = vmatprep.subr.bf16.mxu0 %v862
    %1097 = vmatpush1.bf16.msra.mxu0 %v861
    %1098 = vmatprep.subr.bf16.mxu0 %v870
    %1099 = vmatpush1.bf16.msra.mxu0 %v869
    %1100 = vmatprep.subr.bf16.mxu0 %v878
    %1101 = vmatpush1.bf16.msra.mxu0 %v877
    %1102 = vmatprep.subr.bf16.mxu0 %v886
    %1103 = vmatpush1.bf16.msra.mxu0 %v885
    %1104 = vmatprep.subr.bf16.mxu0 %v894
    %1105 = vmatpush1.bf16.msra.mxu0 %v893
    %1106 = vmatprep.subr.bf16.mxu0 %v902
    %1107 = vmatpush1.bf16.msra.mxu0 %v901
    %1108 = vmatprep.mubr.bf16.mxu0 %v266
    %1109 = vmatmul.mubr.bf16.gmra.mrb[0].mxu0 %v265
    %v1110 = vpop.f32.mrb[0].mxu0
    %v1111 = vadd.f32 0.0, %v1110
    %v1112 = vpop.f32.mrb[0].mxu0
    %v1113 = vadd.f32 0.0, %v1112
    %v1114 = vpop.f32.mrb[0].mxu0
    %v1115 = vpop.f32.mrb[0].mxu0
    %1116 = vdwg.mxu0
    %1117 = vmatprep.subr.bf16.mxu0 %v784
    %1118 = vmatpush1.bf16.msra.mxu0 %v783
    %1119 = vmatprep.subr.bf16.mxu0 %v792
    %1120 = vmatpush1.bf16.msra.mxu0 %v791
    %1121 = vmatprep.subr.bf16.mxu0 %v800
    %1122 = vmatpush1.bf16.msra.mxu0 %v799
    %1123 = vmatprep.subr.bf16.mxu0 %v808
    %1124 = vmatpush1.bf16.msra.mxu0 %v807
    %1125 = vmatprep.subr.bf16.mxu0 %v816
    %1126 = vmatpush1.bf16.msra.mxu0 %v815
    %1127 = vmatprep.subr.bf16.mxu0 %v824
    %1128 = vmatpush1.bf16.msra.mxu0 %v823
    %1129 = vmatprep.subr.bf16.mxu0 %v832
    %1130 = vmatpush1.bf16.msra.mxu0 %v831
    %1131 = vmatprep.subr.bf16.mxu0 %v840
    %1132 = vmatpush1.bf16.msra.mxu0 %v839
    %1133 = vmatprep.subr.bf16.mxu0 %v848
    %1134 = vmatpush1.bf16.msra.mxu0 %v847
    %1135 = vmatprep.subr.bf16.mxu0 %v856
    %1136 = vmatpush1.bf16.msra.mxu0 %v855
    %1137 = vmatprep.subr.bf16.mxu0 %v864
    %1138 = vmatpush1.bf16.msra.mxu0 %v863
    %1139 = vmatprep.subr.bf16.mxu0 %v872
    %1140 = vmatpush1.bf16.msra.mxu0 %v871
    %1141 = vmatprep.subr.bf16.mxu0 %v880
    %1142 = vmatpush1.bf16.msra.mxu0 %v879
    %1143 = vmatprep.subr.bf16.mxu0 %v888
    %1144 = vmatpush1.bf16.msra.mxu0 %v887
    %1145 = vmatprep.subr.bf16.mxu0 %v896
    %1146 = vmatpush1.bf16.msra.mxu0 %v895
    %1147 = vmatprep.subr.bf16.mxu0 %v904
    %1148 = vmatpush1.bf16.msra.mxu0 %v903
    %1149 = vmatprep.mubr.bf16.mxu0 %v266
    %1150 = vmatmul.mubr.bf16.gmra.mrb[0].mxu0 %v265
    %v1151 = vpop.f32.mrb[0].mxu0
    %v1152 = vadd.f32 0.0, %v1151
    %v1153 = vpop.f32.mrb[0].mxu0
    %v1154 = vadd.f32 0.0, %v1153
    %v1155 = vpop.f32.mrb[0].mxu0
    %v1156 = vpop.f32.mrb[0].mxu0
    %1157 = vdwg.mxu0
    %1158 = vmatprep.subr.bf16.mxu0 %v786
    %1159 = vmatpush1.bf16.msra.mxu0 %v785
    %1160 = vmatprep.subr.bf16.mxu0 %v794
    %1161 = vmatpush1.bf16.msra.mxu0 %v793
    %1162 = vmatprep.subr.bf16.mxu0 %v802
    %1163 = vmatpush1.bf16.msra.mxu0 %v801
    %1164 = vmatprep.subr.bf16.mxu0 %v810
    %1165 = vmatpush1.bf16.msra.mxu0 %v809
    %1166 = vmatprep.subr.bf16.mxu0 %v818
    %1167 = vmatpush1.bf16.msra.mxu0 %v817
    %1168 = vmatprep.subr.bf16.mxu0 %v826
    %1169 = vmatpush1.bf16.msra.mxu0 %v825
    %1170 = vmatprep.subr.bf16.mxu0 %v834
    %1171 = vmatpush1.bf16.msra.mxu0 %v833
    %1172 = vmatprep.subr.bf16.mxu0 %v842
    %1173 = vmatpush1.bf16.msra.mxu0 %v841
    %1174 = vmatprep.subr.bf16.mxu0 %v850
    %1175 = vmatpush1.bf16.msra.mxu0 %v849
    %1176 = vmatprep.subr.bf16.mxu0 %v858
    %1177 = vmatpush1.bf16.msra.mxu0 %v857
    %1178 = vmatprep.subr.bf16.mxu0 %v866
    %1179 = vmatpush1.bf16.msra.mxu0 %v865
    %1180 = vmatprep.subr.bf16.mxu0 %v874
    %1181 = vmatpush1.bf16.msra.mxu0 %v873
    %1182 = vmatprep.subr.bf16.mxu0 %v882
    %1183 = vmatpush1.bf16.msra.mxu0 %v881
    %1184 = vmatprep.subr.bf16.mxu0 %v890
    %1185 = vmatpush1.bf16.msra.mxu0 %v889
    %1186 = vmatprep.subr.bf16.mxu0 %v898
    %1187 = vmatpush1.bf16.msra.mxu0 %v897
    %1188 = vmatprep.subr.bf16.mxu0 %v906
    %1189 = vmatpush1.bf16.msra.mxu0 %v905
    %1190 = vmatprep.mubr.bf16.mxu0 %v266
    %1191 = vmatmul.mubr.bf16.gmra.mrb[0].mxu0 %v265
    %v1192 = vpop.f32.mrb[0].mxu0
    %v1193 = vadd.f32 0.0, %v1192
    %v1194 = vpop.f32.mrb[0].mxu0
    %v1195 = vadd.f32 0.0, %v1194
    %v1196 = vpop.f32.mrb[0].mxu0
    %v1197 = vpop.f32.mrb[0].mxu0
    %1198 = vdwg.mxu0
    %v1200 = vlaneseq
    %v1201 = vshrl.u32 %v1200, 7
    %v1202 = vsub.s32 0, %v1201
    %v1203 = vrot.slane %v72, %v1202
    %v1204 = vlaneseq
    %v1205 = vshrl.u32 %v1204, 7
    %v1206 = vsub.s32 1, %v1205
    %v1207 = vrot.slane %v72, %v1206
    %v1208 = vlaneseq
    %v1209 = vshrl.u32 %v1208, 7
    %v1210 = vsub.s32 2, %v1209
    %v1211 = vrot.slane %v72, %v1210
    %v1212 = vlaneseq
    %v1213 = vshrl.u32 %v1212, 7
    %v1214 = vsub.s32 3, %v1213
    %v1215 = vrot.slane %v72, %v1214
    %v1220 = vadd.f32 %v1152, %v1203
    %v1221 = vadd.f32 %v1154, %v1207
    %v1222 = vadd.f32 %v1193, %v1211
    %v1223 = vadd.f32 %v1195, %v1215
    %v1224 = vxor.u32 %v1220, 2147483648
    %v1225 = vmul.f32 %v1224, 1.442695
    %v1226 = vpow.pop %v1225
    %v1227 = vadd.f32 %v1226, 1.0
    %v1228 = vrcp.pop %v1227
    %v1229 = vmul.f32 1.0, %v1228
    %v1230 = vxor.u32 %v1221, 2147483648
    %v1231 = vmul.f32 %v1230, 1.442695
    %v1232 = vpow.pop %v1231
    %v1233 = vadd.f32 %v1232, 1.0
    %v1234 = vrcp.pop %v1233
    %v1235 = vmul.f32 1.0, %v1234
    %v1236 = vtanh.pop %v1222
    %v1237 = vxor.u32 %v1223, 2147483648
    %v1238 = vmul.f32 %v1237, 1.442695
    %v1239 = vpow.pop %v1238
    %v1240 = vadd.f32 %v1239, 1.0
    %v1241 = vrcp.pop %v1240
    %v1242 = vmul.f32 1.0, %v1241
    %v1243 = vmul.f32 %v1235, 0.0
    %v1244 = vmul.f32 %v1229, %v1236
    %v1245 = vadd.f32 %v1243, %v1244
    %v1246 = vtanh.pop %v1245
    %v1247 = vmul.f32 %v1242, %v1246
    %s1248 = scalar_lea.vmem %s0, 8
    %v1249 = vld [vmem:[%s1248] sm:$0xff]
    %v1251 = vsel %vm95, %v1249, 0
    %1253 = vmatprep.subr.mxu0 %v62
    %1254 = vmatpush1.msra.mxu0 %v61
    %1255 = vmatprep.subr.mxu0 %v66
    %1256 = vmatpush1.msra.mxu0 %v65
    %1257 = vmatprep.subr.mxu0 0.0
    %1258 = vmatpush1.msra.mxu0 0.0
    %1259 = vmatprep.subr.mxu0 0.0
    %1260 = vmatpush1.msra.mxu0 0.0
    %1261 = vmatprep.subr.mxu0 0.0
    %1262 = vmatpush1.msra.mxu0 0.0
    %1263 = vmatprep.subr.mxu0 0.0
    %1264 = vmatpush1.msra.mxu0 0.0
    %1265 = vmatprep.subr.mxu0 0.0
    %1266 = vmatpush1.msra.mxu0 0.0
    %1267 = vmatprep.subr.mxu0 0.0
    %1268 = vmatpush1.msra.mxu0 0.0
    %1269 = vmatprep.subr.mxu0 0.0
    %1270 = vmatpush1.msra.mxu0 0.0
    %1271 = vmatprep.subr.mxu0 0.0
    %1272 = vmatpush1.msra.mxu0 0.0
    %1273 = vmatprep.subr.mxu0 0.0
    %1274 = vmatpush1.msra.mxu0 0.0
    %1275 = vmatprep.subr.mxu0 0.0
    %1276 = vmatpush1.msra.mxu0 0.0
    %1277 = vmatprep.subr.mxu0 0.0
    %1278 = vmatpush1.msra.mxu0 0.0
    %1279 = vmatprep.subr.mxu0 0.0
    %1280 = vmatpush1.msra.mxu0 0.0
    %1281 = vmatprep.subr.mxu0 0.0
    %1282 = vmatpush1.msra.mxu0 0.0
    %1283 = vmatprep.subr.mxu0 0.0
    %1284 = vmatpush1.msra.mxu0 0.0
    %1285 = vmatprep.subr.mxu0 0.0
    %1286 = vmatpush1.msra.mxu0 0.0
    %1287 = vmatprep.subr.mxu0 0.0
    %1288 = vmatpush1.msra.mxu0 0.0
    %1289 = vmatprep.subr.mxu0 0.0
    %1290 = vmatpush1.msra.mxu0 0.0
    %1291 = vmatprep.subr.mxu0 0.0
    %1292 = vmatpush1.msra.mxu0 0.0
    %1293 = vmatprep.subr.mxu0 0.0
    %1294 = vmatpush1.msra.mxu0 0.0
    %1295 = vmatprep.subr.mxu0 0.0
    %1296 = vmatpush1.msra.mxu0 0.0
    %1297 = vmatprep.subr.mxu0 0.0
    %1298 = vmatpush1.msra.mxu0 0.0
    %1299 = vmatprep.subr.mxu0 0.0
    %1300 = vmatpush1.msra.mxu0 0.0
    %1301 = vmatprep.subr.mxu0 0.0
    %1302 = vmatpush1.msra.mxu0 0.0
    %1303 = vmatprep.subr.mxu0 0.0
    %1304 = vmatpush1.msra.mxu0 0.0
    %1305 = vmatprep.subr.mxu0 0.0
    %1306 = vmatpush1.msra.mxu0 0.0
    %1307 = vmatprep.subr.mxu0 0.0
    %1308 = vmatpush1.msra.mxu0 0.0
    %1309 = vmatprep.subr.mxu0 0.0
    %1310 = vmatpush1.msra.mxu0 0.0
    %1311 = vmatprep.subr.mxu0 0.0
    %1312 = vmatpush1.msra.mxu0 0.0
    %1313 = vmatprep.subr.mxu0 0.0
    %1314 = vmatpush1.msra.mxu0 0.0
    %1315 = vmatprep.subr.mxu0 0.0
    %1316 = vmatpush1.msra.mxu0 0.0
    %1317 = vmatprep.mubr.f32.mxu0 0.0
    %1318 = vmatmul.mubr.f32.gmra.mrb[0].mxu0 %v1251
    %v1319 = vpop.f32.mrb[0].mxu0
    %v1320 = vadd.f32 %v78, %v1319
    %v1321 = vpop.f32.mrb[0].mxu0
    %v1322 = vadd.f32 %v82, %v1321
    %1323 = vdwg.mxu0
    %1324 = vmatprep.subr.mxu0 %v64
    %1325 = vmatpush1.msra.mxu0 %v63
    %1326 = vmatprep.subr.mxu0 %v68
    %1327 = vmatpush1.msra.mxu0 %v67
    %1328 = vmatprep.subr.mxu0 0.0
    %1329 = vmatpush1.msra.mxu0 0.0
    %1330 = vmatprep.subr.mxu0 0.0
    %1331 = vmatpush1.msra.mxu0 0.0
    %1332 = vmatprep.subr.mxu0 0.0
    %1333 = vmatpush1.msra.mxu0 0.0
    %1334 = vmatprep.subr.mxu0 0.0
    %1335 = vmatpush1.msra.mxu0 0.0
    %1336 = vmatprep.subr.mxu0 0.0
    %1337 = vmatpush1.msra.mxu0 0.0
    %1338 = vmatprep.subr.mxu0 0.0
    %1339 = vmatpush1.msra.mxu0 0.0
    %1340 = vmatprep.subr.mxu0 0.0
    %1341 = vmatpush1.msra.mxu0 0.0
    %1342 = vmatprep.subr.mxu0 0.0
    %1343 = vmatpush1.msra.mxu0 0.0
    %1344 = vmatprep.subr.mxu0 0.0
    %1345 = vmatpush1.msra.mxu0 0.0
    %1346 = vmatprep.subr.mxu0 0.0
    %1347 = vmatpush1.msra.mxu0 0.0
    %1348 = vmatprep.subr.mxu0 0.0
    %1349 = vmatpush1.msra.mxu0 0.0
    %1350 = vmatprep.subr.mxu0 0.0
    %1351 = vmatpush1.msra.mxu0 0.0
    %1352 = vmatprep.subr.mxu0 0.0
    %1353 = vmatpush1.msra.mxu0 0.0
    %1354 = vmatprep.subr.mxu0 0.0
    %1355 = vmatpush1.msra.mxu0 0.0
    %1356 = vmatprep.subr.mxu0 0.0
    %1357 = vmatpush1.msra.mxu0 0.0
    %1358 = vmatprep.subr.mxu0 0.0
    %1359 = vmatpush1.msra.mxu0 0.0
    %1360 = vmatprep.subr.mxu0 0.0
    %1361 = vmatpush1.msra.mxu0 0.0
    %1362 = vmatprep.subr.mxu0 0.0
    %1363 = vmatpush1.msra.mxu0 0.0
    %1364 = vmatprep.subr.mxu0 0.0
    %1365 = vmatpush1.msra.mxu0 0.0
    %1366 = vmatprep.subr.mxu0 0.0
    %1367 = vmatpush1.msra.mxu0 0.0
    %1368 = vmatprep.subr.mxu0 0.0
    %1369 = vmatpush1.msra.mxu0 0.0
    %1370 = vmatprep.subr.mxu0 0.0
    %1371 = vmatpush1.msra.mxu0 0.0
    %1372 = vmatprep.subr.mxu0 0.0
    %1373 = vmatpush1.msra.mxu0 0.0
    %1374 = vmatprep.subr.mxu0 0.0
    %1375 = vmatpush1.msra.mxu0 0.0
    %1376 = vmatprep.subr.mxu0 0.0
    %1377 = vmatpush1.msra.mxu0 0.0
    %1378 = vmatprep.subr.mxu0 0.0
    %1379 = vmatpush1.msra.mxu0 0.0
    %1380 = vmatprep.subr.mxu0 0.0
    %1381 = vmatpush1.msra.mxu0 0.0
    %1382 = vmatprep.subr.mxu0 0.0
    %1383 = vmatpush1.msra.mxu0 0.0
    %1384 = vmatprep.subr.mxu0 0.0
    %1385 = vmatpush1.msra.mxu0 0.0
    %1386 = vmatprep.subr.mxu0 0.0
    %1387 = vmatpush1.msra.mxu0 0.0
    %1388 = vmatprep.mubr.f32.mxu0 0.0
    %1389 = vmatmul.mubr.f32.gmra.mrb[0].mxu0 %v1251
    %v1390 = vpop.f32.mrb[0].mxu0
    %v1391 = vadd.f32 %v86, %v1390
    %v1392 = vpop.f32.mrb[0].mxu0
    %v1393 = vadd.f32 %v90, %v1392
    %1394 = vdwg.mxu0
    %v1395 = vadd.f32 %v1320, %v1070
    %v1396 = vadd.f32 %v1322, %v1072
    %v1397 = vadd.f32 %v1391, %v1111
    %v1398 = vadd.f32 %v1393, %v1113
    %v1399 = vxor.u32 %v1395, 2147483648
    %v1400 = vmul.f32 %v1399, 1.442695
    %v1401 = vpow.pop %v1400
    %v1402 = vadd.f32 %v1401, 1.0
    %v1403 = vrcp.pop %v1402
    %v1404 = vmul.f32 1.0, %v1403
    %v1405 = vxor.u32 %v1396, 2147483648
    %v1406 = vmul.f32 %v1405, 1.442695
    %v1407 = vpow.pop %v1406
    %v1408 = vadd.f32 %v1407, 1.0
    %v1409 = vrcp.pop %v1408
    %v1410 = vmul.f32 1.0, %v1409
    %v1411 = vtanh.pop %v1397
    %v1412 = vxor.u32 %v1398, 2147483648
    %v1413 = vmul.f32 %v1412, 1.442695
    %v1414 = vpow.pop %v1413
    %v1415 = vadd.f32 %v1414, 1.0
    %v1416 = vrcp.pop %v1415
    %v1417 = vmul.f32 1.0, %v1416
    %v1418 = vmul.f32 %v1410, %v262
    %v1419 = vmul.f32 %v1404, %v1411
    %v1420 = vadd.f32 %v1418, %v1419
    %v1421 = vtanh.pop %v1420
    %v1422 = vmul.f32 %v1417, %v1421
    %v1423 = vpack.c.bf16 %v1422, %v1422
    %v1424 = vpack.c.bf16 %v1247, %v1247
    %1425 = vmatprep.subr.bf16.mxu0 %v780
    %1426 = vmatpush1.bf16.msra.mxu0 %v779
    %1427 = vmatprep.subr.bf16.mxu0 %v788
    %1428 = vmatpush1.bf16.msra.mxu0 %v787
    %1429 = vmatprep.subr.bf16.mxu0 %v796
    %1430 = vmatpush1.bf16.msra.mxu0 %v795
    %1431 = vmatprep.subr.bf16.mxu0 %v804
    %1432 = vmatpush1.bf16.msra.mxu0 %v803
    %1433 = vmatprep.subr.bf16.mxu0 %v812
    %1434 = vmatpush1.bf16.msra.mxu0 %v811
    %1435 = vmatprep.subr.bf16.mxu0 %v820
    %1436 = vmatpush1.bf16.msra.mxu0 %v819
    %1437 = vmatprep.subr.bf16.mxu0 %v828
    %1438 = vmatpush1.bf16.msra.mxu0 %v827
    %1439 = vmatprep.subr.bf16.mxu0 %v836
    %1440 = vmatpush1.bf16.msra.mxu0 %v835
    %1441 = vmatprep.subr.bf16.mxu0 %v844
    %1442 = vmatpush1.bf16.msra.mxu0 %v843
    %1443 = vmatprep.subr.bf16.mxu0 %v852
    %1444 = vmatpush1.bf16.msra.mxu0 %v851
    %1445 = vmatprep.subr.bf16.mxu0 %v860
    %1446 = vmatpush1.bf16.msra.mxu0 %v859
    %1447 = vmatprep.subr.bf16.mxu0 %v868
    %1448 = vmatpush1.bf16.msra.mxu0 %v867
    %1449 = vmatprep.subr.bf16.mxu0 %v876
    %1450 = vmatpush1.bf16.msra.mxu0 %v875
    %1451 = vmatprep.subr.bf16.mxu0 %v884
    %1452 = vmatpush1.bf16.msra.mxu0 %v883
    %1453 = vmatprep.subr.bf16.mxu0 %v892
    %1454 = vmatpush1.bf16.msra.mxu0 %v891
    %1455 = vmatprep.subr.bf16.mxu0 %v900
    %1456 = vmatpush1.bf16.msra.mxu0 %v899
    %1457 = vmatprep.mubr.bf16.mxu0 %v1424
    %1458 = vmatmul.mubr.bf16.gmra.mrb[0].mxu0 %v1423
    %v1459 = vpop.f32.mrb[0].mxu0
    %v1460 = vadd.f32 0.0, %v1459
    %v1461 = vpop.f32.mrb[0].mxu0
    %v1462 = vadd.f32 0.0, %v1461
    %v1463 = vpop.f32.mrb[0].mxu0
    %v1464 = vpop.f32.mrb[0].mxu0
    %1465 = vdwg.mxu0
    %1466 = vmatprep.subr.bf16.mxu0 %v782
    %1467 = vmatpush1.bf16.msra.mxu0 %v781
    %1468 = vmatprep.subr.bf16.mxu0 %v790
    %1469 = vmatpush1.bf16.msra.mxu0 %v789
    %1470 = vmatprep.subr.bf16.mxu0 %v798
    %1471 = vmatpush1.bf16.msra.mxu0 %v797
    %1472 = vmatprep.subr.bf16.mxu0 %v806
    %1473 = vmatpush1.bf16.msra.mxu0 %v805
    %1474 = vmatprep.subr.bf16.mxu0 %v814
    %1475 = vmatpush1.bf16.msra.mxu0 %v813
    %1476 = vmatprep.subr.bf16.mxu0 %v822
    %1477 = vmatpush1.bf16.msra.mxu0 %v821
    %1478 = vmatprep.subr.bf16.mxu0 %v830
    %1479 = vmatpush1.bf16.msra.mxu0 %v829
    %1480 = vmatprep.subr.bf16.mxu0 %v838
    %1481 = vmatpush1.bf16.msra.mxu0 %v837
    %1482 = vmatprep.subr.bf16.mxu0 %v846
    %1483 = vmatpush1.bf16.msra.mxu0 %v845
    %1484 = vmatprep.subr.bf16.mxu0 %v854
    %1485 = vmatpush1.bf16.msra.mxu0 %v853
    %1486 = vmatprep.subr.bf16.mxu0 %v862
    %1487 = vmatpush1.bf16.msra.mxu0 %v861
    %1488 = vmatprep.subr.bf16.mxu0 %v870
    %1489 = vmatpush1.bf16.msra.mxu0 %v869
    %1490 = vmatprep.subr.bf16.mxu0 %v878
    %1491 = vmatpush1.bf16.msra.mxu0 %v877
    %1492 = vmatprep.subr.bf16.mxu0 %v886
    %1493 = vmatpush1.bf16.msra.mxu0 %v885
    %1494 = vmatprep.subr.bf16.mxu0 %v894
    %1495 = vmatpush1.bf16.msra.mxu0 %v893
    %1496 = vmatprep.subr.bf16.mxu0 %v902
    %1497 = vmatpush1.bf16.msra.mxu0 %v901
    %1498 = vmatprep.mubr.bf16.mxu0 %v1424
    %1499 = vmatmul.mubr.bf16.gmra.mrb[0].mxu0 %v1423
    %v1500 = vpop.f32.mrb[0].mxu0
    %v1501 = vadd.f32 0.0, %v1500
    %v1502 = vpop.f32.mrb[0].mxu0
    %v1503 = vadd.f32 0.0, %v1502
    %v1504 = vpop.f32.mrb[0].mxu0
    %v1505 = vpop.f32.mrb[0].mxu0
    %1506 = vdwg.mxu0
    %1507 = vmatprep.subr.bf16.mxu0 %v784
    %1508 = vmatpush1.bf16.msra.mxu0 %v783
    %1509 = vmatprep.subr.bf16.mxu0 %v792
    %1510 = vmatpush1.bf16.msra.mxu0 %v791
    %1511 = vmatprep.subr.bf16.mxu0 %v800
    %1512 = vmatpush1.bf16.msra.mxu0 %v799
    %1513 = vmatprep.subr.bf16.mxu0 %v808
    %1514 = vmatpush1.bf16.msra.mxu0 %v807
    %1515 = vmatprep.subr.bf16.mxu0 %v816
    %1516 = vmatpush1.bf16.msra.mxu0 %v815
    %1517 = vmatprep.subr.bf16.mxu0 %v824
    %1518 = vmatpush1.bf16.msra.mxu0 %v823
    %1519 = vmatprep.subr.bf16.mxu0 %v832
    %1520 = vmatpush1.bf16.msra.mxu0 %v831
    %1521 = vmatprep.subr.bf16.mxu0 %v840
    %1522 = vmatpush1.bf16.msra.mxu0 %v839
    %1523 = vmatprep.subr.bf16.mxu0 %v848
    %1524 = vmatpush1.bf16.msra.mxu0 %v847
    %1525 = vmatprep.subr.bf16.mxu0 %v856
    %1526 = vmatpush1.bf16.msra.mxu0 %v855
    %1527 = vmatprep.subr.bf16.mxu0 %v864
    %1528 = vmatpush1.bf16.msra.mxu0 %v863
    %1529 = vmatprep.subr.bf16.mxu0 %v872
    %1530 = vmatpush1.bf16.msra.mxu0 %v871
    %1531 = vmatprep.subr.bf16.mxu0 %v880
    %1532 = vmatpush1.bf16.msra.mxu0 %v879
    %1533 = vmatprep.subr.bf16.mxu0 %v888
    %1534 = vmatpush1.bf16.msra.mxu0 %v887
    %1535 = vmatprep.subr.bf16.mxu0 %v896
    %1536 = vmatpush1.bf16.msra.mxu0 %v895
    %1537 = vmatprep.subr.bf16.mxu0 %v904
    %1538 = vmatpush1.bf16.msra.mxu0 %v903
    %1539 = vmatprep.mubr.bf16.mxu0 %v1424
    %1540 = vmatmul.mubr.bf16.gmra.mrb[0].mxu0 %v1423
    %v1541 = vpop.f32.mrb[0].mxu0
    %v1542 = vadd.f32 0.0, %v1541
    %v1543 = vpop.f32.mrb[0].mxu0
    %v1544 = vadd.f32 0.0, %v1543
    %v1545 = vpop.f32.mrb[0].mxu0
    %v1546 = vpop.f32.mrb[0].mxu0
    %1547 = vdwg.mxu0
    %1548 = vmatprep.subr.bf16.mxu0 %v786
    %1549 = vmatpush1.bf16.msra.mxu0 %v785
    %1550 = vmatprep.subr.bf16.mxu0 %v794
    %1551 = vmatpush1.bf16.msra.mxu0 %v793
    %1552 = vmatprep.subr.bf16.mxu0 %v802
    %1553 = vmatpush1.bf16.msra.mxu0 %v801
    %1554 = vmatprep.subr.bf16.mxu0 %v810
    %1555 = vmatpush1.bf16.msra.mxu0 %v809
    %1556 = vmatprep.subr.bf16.mxu0 %v818
    %1557 = vmatpush1.bf16.msra.mxu0 %v817
    %1558 = vmatprep.subr.bf16.mxu0 %v826
    %1559 = vmatpush1.bf16.msra.mxu0 %v825
    %1560 = vmatprep.subr.bf16.mxu0 %v834
    %1561 = vmatpush1.bf16.msra.mxu0 %v833
    %1562 = vmatprep.subr.bf16.mxu0 %v842
    %1563 = vmatpush1.bf16.msra.mxu0 %v841
    %1564 = vmatprep.subr.bf16.mxu0 %v850
    %1565 = vmatpush1.bf16.msra.mxu0 %v849
    %1566 = vmatprep.subr.bf16.mxu0 %v858
    %1567 = vmatpush1.bf16.msra.mxu0 %v857
    %1568 = vmatprep.subr.bf16.mxu0 %v866
    %1569 = vmatpush1.bf16.msra.mxu0 %v865
    %1570 = vmatprep.subr.bf16.mxu0 %v874
    %1571 = vmatpush1.bf16.msra.mxu0 %v873
    %1572 = vmatprep.subr.bf16.mxu0 %v882
    %1573 = vmatpush1.bf16.msra.mxu0 %v881
    %1574 = vmatprep.subr.bf16.mxu0 %v890
    %1575 = vmatpush1.bf16.msra.mxu0 %v889
    %1576 = vmatprep.subr.bf16.mxu0 %v898
    %1577 = vmatpush1.bf16.msra.mxu0 %v897
    %1578 = vmatprep.subr.bf16.mxu0 %v906
    %1579 = vmatpush1.bf16.msra.mxu0 %v905
    %1580 = vmatprep.mubr.bf16.mxu0 %v1424
    %1581 = vmatmul.mubr.bf16.gmra.mrb[0].mxu0 %v1423
    %v1582 = vpop.f32.mrb[0].mxu0
    %v1583 = vadd.f32 0.0, %v1582
    %v1584 = vpop.f32.mrb[0].mxu0
    %v1585 = vadd.f32 0.0, %v1584
    %v1586 = vpop.f32.mrb[0].mxu0
    %v1587 = vpop.f32.mrb[0].mxu0
    %1588 = vdwg.mxu0
    %v1589 = vadd.f32 %v1542, %v1203
    %v1590 = vadd.f32 %v1544, %v1207
    %v1591 = vadd.f32 %v1583, %v1211
    %v1592 = vadd.f32 %v1585, %v1215
    %v1593 = vxor.u32 %v1589, 2147483648
    %v1594 = vmul.f32 %v1593, 1.442695
    %v1595 = vpow.pop %v1594
    %v1596 = vadd.f32 %v1595, 1.0
    %v1597 = vrcp.pop %v1596
    %v1598 = vmul.f32 1.0, %v1597
    %v1599 = vxor.u32 %v1590, 2147483648
    %v1600 = vmul.f32 %v1599, 1.442695
    %v1601 = vpow.pop %v1600
    %v1602 = vadd.f32 %v1601, 1.0
    %v1603 = vrcp.pop %v1602
    %v1604 = vmul.f32 1.0, %v1603
    %v1605 = vtanh.pop %v1591
    %v1606 = vxor.u32 %v1592, 2147483648
    %v1607 = vmul.f32 %v1606, 1.442695
    %v1608 = vpow.pop %v1607
    %v1609 = vadd.f32 %v1608, 1.0
    %v1610 = vrcp.pop %v1609
    %v1611 = vmul.f32 1.0, %v1610
    %v1612 = vmul.f32 %v1604, %v1245
    %v1613 = vmul.f32 %v1598, %v1605
    %v1614 = vadd.f32 %v1612, %v1613
    %v1615 = vtanh.pop %v1614
    %v1616 = vmul.f32 %v1611, %v1615
    %s1617 = scalar_lea.vmem %s0, 16
    %v1618 = vld [vmem:[%s1617] sm:$0xff]
    %v1620 = vsel %vm95, %v1618, 0
    %1622 = vmatprep.subr.mxu0 %v62
    %1623 = vmatpush1.msra.mxu0 %v61
    %1624 = vmatprep.subr.mxu0 %v66
    %1625 = vmatpush1.msra.mxu0 %v65
    %1626 = vmatprep.subr.mxu0 0.0
    %1627 = vmatpush1.msra.mxu0 0.0
    %1628 = vmatprep.subr.mxu0 0.0
    %1629 = vmatpush1.msra.mxu0 0.0
    %1630 = vmatprep.subr.mxu0 0.0
    %1631 = vmatpush1.msra.mxu0 0.0
    %1632 = vmatprep.subr.mxu0 0.0
    %1633 = vmatpush1.msra.mxu0 0.0
    %1634 = vmatprep.subr.mxu0 0.0
    %1635 = vmatpush1.msra.mxu0 0.0
    %1636 = vmatprep.subr.mxu0 0.0
    %1637 = vmatpush1.msra.mxu0 0.0
    %1638 = vmatprep.subr.mxu0 0.0
    %1639 = vmatpush1.msra.mxu0 0.0
    %1640 = vmatprep.subr.mxu0 0.0
    %1641 = vmatpush1.msra.mxu0 0.0
    %1642 = vmatprep.subr.mxu0 0.0
    %1643 = vmatpush1.msra.mxu0 0.0
    %1644 = vmatprep.subr.mxu0 0.0
    %1645 = vmatpush1.msra.mxu0 0.0
    %1646 = vmatprep.subr.mxu0 0.0
    %1647 = vmatpush1.msra.mxu0 0.0
    %1648 = vmatprep.subr.mxu0 0.0
    %1649 = vmatpush1.msra.mxu0 0.0
    %1650 = vmatprep.subr.mxu0 0.0
    %1651 = vmatpush1.msra.mxu0 0.0
    %1652 = vmatprep.subr.mxu0 0.0
    %1653 = vmatpush1.msra.mxu0 0.0
    %1654 = vmatprep.subr.mxu0 0.0
    %1655 = vmatpush1.msra.mxu0 0.0
    %1656 = vmatprep.subr.mxu0 0.0
    %1657 = vmatpush1.msra.mxu0 0.0
    %1658 = vmatprep.subr.mxu0 0.0
    %1659 = vmatpush1.msra.mxu0 0.0
    %1660 = vmatprep.subr.mxu0 0.0
    %1661 = vmatpush1.msra.mxu0 0.0
    %1662 = vmatprep.subr.mxu0 0.0
    %1663 = vmatpush1.msra.mxu0 0.0
    %1664 = vmatprep.subr.mxu0 0.0
    %1665 = vmatpush1.msra.mxu0 0.0
    %1666 = vmatprep.subr.mxu0 0.0
    %1667 = vmatpush1.msra.mxu0 0.0
    %1668 = vmatprep.subr.mxu0 0.0
    %1669 = vmatpush1.msra.mxu0 0.0
    %1670 = vmatprep.subr.mxu0 0.0
    %1671 = vmatpush1.msra.mxu0 0.0
    %1672 = vmatprep.subr.mxu0 0.0
    %1673 = vmatpush1.msra.mxu0 0.0
    %1674 = vmatprep.subr.mxu0 0.0
    %1675 = vmatpush1.msra.mxu0 0.0
    %1676 = vmatprep.subr.mxu0 0.0
    %1677 = vmatpush1.msra.mxu0 0.0
    %1678 = vmatprep.subr.mxu0 0.0
    %1679 = vmatpush1.msra.mxu0 0.0
    %1680 = vmatprep.subr.mxu0 0.0
    %1681 = vmatpush1.msra.mxu0 0.0
    %1682 = vmatprep.subr.mxu0 0.0
    %1683 = vmatpush1.msra.mxu0 0.0
    %1684 = vmatprep.subr.mxu0 0.0
    %1685 = vmatpush1.msra.mxu0 0.0
    %1686 = vmatprep.mubr.f32.mxu0 0.0
    %1687 = vmatmul.mubr.f32.gmra.mrb[0].mxu0 %v1620
    %v1688 = vpop.f32.mrb[0].mxu0
    %v1689 = vadd.f32 %v78, %v1688
    %v1690 = vpop.f32.mrb[0].mxu0
    %v1691 = vadd.f32 %v82, %v1690
    %1692 = vdwg.mxu0
    %1693 = vmatprep.subr.mxu0 %v64
    %1694 = vmatpush1.msra.mxu0 %v63
    %1695 = vmatprep.subr.mxu0 %v68
    %1696 = vmatpush1.msra.mxu0 %v67
    %1697 = vmatprep.subr.mxu0 0.0
    %1698 = vmatpush1.msra.mxu0 0.0
    %1699 = vmatprep.subr.mxu0 0.0
    %1700 = vmatpush1.msra.mxu0 0.0
    %1701 = vmatprep.subr.mxu0 0.0
    %1702 = vmatpush1.msra.mxu0 0.0
    %1703 = vmatprep.subr.mxu0 0.0
    %1704 = vmatpush1.msra.mxu0 0.0
    %1705 = vmatprep.subr.mxu0 0.0
    %1706 = vmatpush1.msra.mxu0 0.0
    %1707 = vmatprep.subr.mxu0 0.0
    %1708 = vmatpush1.msra.mxu0 0.0
    %1709 = vmatprep.subr.mxu0 0.0
    %1710 = vmatpush1.msra.mxu0 0.0
    %1711 = vmatprep.subr.mxu0 0.0
    %1712 = vmatpush1.msra.mxu0 0.0
    %1713 = vmatprep.subr.mxu0 0.0
    %1714 = vmatpush1.msra.mxu0 0.0
    %1715 = vmatprep.subr.mxu0 0.0
    %1716 = vmatpush1.msra.mxu0 0.0
    %1717 = vmatprep.subr.mxu0 0.0
    %1718 = vmatpush1.msra.mxu0 0.0
    %1719 = vmatprep.subr.mxu0 0.0
    %1720 = vmatpush1.msra.mxu0 0.0
    %1721 = vmatprep.subr.mxu0 0.0
    %1722 = vmatpush1.msra.mxu0 0.0
    %1723 = vmatprep.subr.mxu0 0.0
    %1724 = vmatpush1.msra.mxu0 0.0
    %1725 = vmatprep.subr.mxu0 0.0
    %1726 = vmatpush1.msra.mxu0 0.0
    %1727 = vmatprep.subr.mxu0 0.0
    %1728 = vmatpush1.msra.mxu0 0.0
    %1729 = vmatprep.subr.mxu0 0.0
    %1730 = vmatpush1.msra.mxu0 0.0
    %1731 = vmatprep.subr.mxu0 0.0
    %1732 = vmatpush1.msra.mxu0 0.0
    %1733 = vmatprep.subr.mxu0 0.0
    %1734 = vmatpush1.msra.mxu0 0.0
    %1735 = vmatprep.subr.mxu0 0.0
    %1736 = vmatpush1.msra.mxu0 0.0
    %1737 = vmatprep.subr.mxu0 0.0
    %1738 = vmatpush1.msra.mxu0 0.0
    %1739 = vmatprep.subr.mxu0 0.0
    %1740 = vmatpush1.msra.mxu0 0.0
    %1741 = vmatprep.subr.mxu0 0.0
    %1742 = vmatpush1.msra.mxu0 0.0
    %1743 = vmatprep.subr.mxu0 0.0
    %1744 = vmatpush1.msra.mxu0 0.0
    %1745 = vmatprep.subr.mxu0 0.0
    %1746 = vmatpush1.msra.mxu0 0.0
    %1747 = vmatprep.subr.mxu0 0.0
    %1748 = vmatpush1.msra.mxu0 0.0
    %1749 = vmatprep.subr.mxu0 0.0
    %1750 = vmatpush1.msra.mxu0 0.0
    %1751 = vmatprep.subr.mxu0 0.0
    %1752 = vmatpush1.msra.mxu0 0.0
    %1753 = vmatprep.subr.mxu0 0.0
    %1754 = vmatpush1.msra.mxu0 0.0
    %1755 = vmatprep.subr.mxu0 0.0
    %1756 = vmatpush1.msra.mxu0 0.0
    %1757 = vmatprep.mubr.f32.mxu0 0.0
    %1758 = vmatmul.mubr.f32.gmra.mrb[0].mxu0 %v1620
    %v1759 = vpop.f32.mrb[0].mxu0
    %v1760 = vadd.f32 %v86, %v1759
    %v1761 = vpop.f32.mrb[0].mxu0
    %v1762 = vadd.f32 %v90, %v1761
    %1763 = vdwg.mxu0
    %v1764 = vadd.f32 %v1689, %v1460
    %v1765 = vadd.f32 %v1691, %v1462
    %v1766 = vadd.f32 %v1760, %v1501
    %v1767 = vadd.f32 %v1762, %v1503
    %v1768 = vxor.u32 %v1764, 2147483648
    %v1769 = vmul.f32 %v1768, 1.442695
    %v1770 = vpow.pop %v1769
    %v1771 = vadd.f32 %v1770, 1.0
    %v1772 = vrcp.pop %v1771
    %v1773 = vmul.f32 1.0, %v1772
    %v1774 = vxor.u32 %v1765, 2147483648
    %v1775 = vmul.f32 %v1774, 1.442695
    %v1776 = vpow.pop %v1775
    %v1777 = vadd.f32 %v1776, 1.0
    %v1778 = vrcp.pop %v1777
    %v1779 = vmul.f32 1.0, %v1778
    %v1780 = vtanh.pop %v1766
    %v1781 = vxor.u32 %v1767, 2147483648
    %v1782 = vmul.f32 %v1781, 1.442695
    %v1783 = vpow.pop %v1782
    %v1784 = vadd.f32 %v1783, 1.0
    %v1785 = vrcp.pop %v1784
    %v1786 = vmul.f32 1.0, %v1785
    %v1787 = vmul.f32 %v1779, %v1420
    %v1788 = vmul.f32 %v1773, %v1780
    %v1789 = vadd.f32 %v1787, %v1788
    %v1790 = vtanh.pop %v1789
    %v1791 = vmul.f32 %v1786, %v1790
    %v1792 = vpack.c.bf16 %v1791, %v1791
    %v1793 = vpack.c.bf16 %v1616, %v1616
    %1794 = vmatprep.subr.bf16.mxu0 %v780
    %1795 = vmatpush1.bf16.msra.mxu0 %v779
    %1796 = vmatprep.subr.bf16.mxu0 %v788
    %1797 = vmatpush1.bf16.msra.mxu0 %v787
    %1798 = vmatprep.subr.bf16.mxu0 %v796
    %1799 = vmatpush1.bf16.msra.mxu0 %v795
    %1800 = vmatprep.subr.bf16.mxu0 %v804
    %1801 = vmatpush1.bf16.msra.mxu0 %v803
    %1802 = vmatprep.subr.bf16.mxu0 %v812
    %1803 = vmatpush1.bf16.msra.mxu0 %v811
    %1804 = vmatprep.subr.bf16.mxu0 %v820
    %1805 = vmatpush1.bf16.msra.mxu0 %v819
    %1806 = vmatprep.subr.bf16.mxu0 %v828
    %1807 = vmatpush1.bf16.msra.mxu0 %v827
    %1808 = vmatprep.subr.bf16.mxu0 %v836
    %1809 = vmatpush1.bf16.msra.mxu0 %v835
    %1810 = vmatprep.subr.bf16.mxu0 %v844
    %1811 = vmatpush1.bf16.msra.mxu0 %v843
    %1812 = vmatprep.subr.bf16.mxu0 %v852
    %1813 = vmatpush1.bf16.msra.mxu0 %v851
    %1814 = vmatprep.subr.bf16.mxu0 %v860
    %1815 = vmatpush1.bf16.msra.mxu0 %v859
    %1816 = vmatprep.subr.bf16.mxu0 %v868
    %1817 = vmatpush1.bf16.msra.mxu0 %v867
    %1818 = vmatprep.subr.bf16.mxu0 %v876
    %1819 = vmatpush1.bf16.msra.mxu0 %v875
    %1820 = vmatprep.subr.bf16.mxu0 %v884
    %1821 = vmatpush1.bf16.msra.mxu0 %v883
    %1822 = vmatprep.subr.bf16.mxu0 %v892
    %1823 = vmatpush1.bf16.msra.mxu0 %v891
    %1824 = vmatprep.subr.bf16.mxu0 %v900
    %1825 = vmatpush1.bf16.msra.mxu0 %v899
    %1826 = vmatprep.mubr.bf16.mxu0 %v1793
    %1827 = vmatmul.mubr.bf16.gmra.mrb[0].mxu0 %v1792
    %v1828 = vpop.f32.mrb[0].mxu0
    %v1829 = vadd.f32 0.0, %v1828
    %v1830 = vpop.f32.mrb[0].mxu0
    %v1831 = vadd.f32 0.0, %v1830
    %v1832 = vpop.f32.mrb[0].mxu0
    %v1833 = vpop.f32.mrb[0].mxu0
    %1834 = vdwg.mxu0
    %1835 = vmatprep.subr.bf16.mxu0 %v782
    %1836 = vmatpush1.bf16.msra.mxu0 %v781
    %1837 = vmatprep.subr.bf16.mxu0 %v790
    %1838 = vmatpush1.bf16.msra.mxu0 %v789
    %1839 = vmatprep.subr.bf16.mxu0 %v798
    %1840 = vmatpush1.bf16.msra.mxu0 %v797
    %1841 = vmatprep.subr.bf16.mxu0 %v806
    %1842 = vmatpush1.bf16.msra.mxu0 %v805
    %1843 = vmatprep.subr.bf16.mxu0 %v814
    %1844 = vmatpush1.bf16.msra.mxu0 %v813
    %1845 = vmatprep.subr.bf16.mxu0 %v822
    %1846 = vmatpush1.bf16.msra.mxu0 %v821
    %1847 = vmatprep.subr.bf16.mxu0 %v830
    %1848 = vmatpush1.bf16.msra.mxu0 %v829
    %1849 = vmatprep.subr.bf16.mxu0 %v838
    %1850 = vmatpush1.bf16.msra.mxu0 %v837
    %1851 = vmatprep.subr.bf16.mxu0 %v846
    %1852 = vmatpush1.bf16.msra.mxu0 %v845
    %1853 = vmatprep.subr.bf16.mxu0 %v854
    %1854 = vmatpush1.bf16.msra.mxu0 %v853
    %1855 = vmatprep.subr.bf16.mxu0 %v862
    %1856 = vmatpush1.bf16.msra.mxu0 %v861
    %1857 = vmatprep.subr.bf16.mxu0 %v870
    %1858 = vmatpush1.bf16.msra.mxu0 %v869
    %1859 = vmatprep.subr.bf16.mxu0 %v878
    %1860 = vmatpush1.bf16.msra.mxu0 %v877
    %1861 = vmatprep.subr.bf16.mxu0 %v886
    %1862 = vmatpush1.bf16.msra.mxu0 %v885
    %1863 = vmatprep.subr.bf16.mxu0 %v894
    %1864 = vmatpush1.bf16.msra.mxu0 %v893
    %1865 = vmatprep.subr.bf16.mxu0 %v902
    %1866 = vmatpush1.bf16.msra.mxu0 %v901
    %1867 = vmatprep.mubr.bf16.mxu0 %v1793
    %1868 = vmatmul.mubr.bf16.gmra.mrb[0].mxu0 %v1792
    %v1869 = vpop.f32.mrb[0].mxu0
    %v1870 = vadd.f32 0.0, %v1869
    %v1871 = vpop.f32.mrb[0].mxu0
    %v1872 = vadd.f32 0.0, %v1871
    %v1873 = vpop.f32.mrb[0].mxu0
    %v1874 = vpop.f32.mrb[0].mxu0
    %1875 = vdwg.mxu0
    %1876 = vmatprep.subr.bf16.mxu0 %v784
    %1877 = vmatpush1.bf16.msra.mxu0 %v783
    %1878 = vmatprep.subr.bf16.mxu0 %v792
    %1879 = vmatpush1.bf16.msra.mxu0 %v791
    %1880 = vmatprep.subr.bf16.mxu0 %v800
    %1881 = vmatpush1.bf16.msra.mxu0 %v799
    %1882 = vmatprep.subr.bf16.mxu0 %v808
    %1883 = vmatpush1.bf16.msra.mxu0 %v807
    %1884 = vmatprep.subr.bf16.mxu0 %v816
    %1885 = vmatpush1.bf16.msra.mxu0 %v815
    %1886 = vmatprep.subr.bf16.mxu0 %v824
    %1887 = vmatpush1.bf16.msra.mxu0 %v823
    %1888 = vmatprep.subr.bf16.mxu0 %v832
    %1889 = vmatpush1.bf16.msra.mxu0 %v831
    %1890 = vmatprep.subr.bf16.mxu0 %v840
    %1891 = vmatpush1.bf16.msra.mxu0 %v839
    %1892 = vmatprep.subr.bf16.mxu0 %v848
    %1893 = vmatpush1.bf16.msra.mxu0 %v847
    %1894 = vmatprep.subr.bf16.mxu0 %v856
    %1895 = vmatpush1.bf16.msra.mxu0 %v855
    %1896 = vmatprep.subr.bf16.mxu0 %v864
    %1897 = vmatpush1.bf16.msra.mxu0 %v863
    %1898 = vmatprep.subr.bf16.mxu0 %v872
    %1899 = vmatpush1.bf16.msra.mxu0 %v871
    %1900 = vmatprep.subr.bf16.mxu0 %v880
    %1901 = vmatpush1.bf16.msra.mxu0 %v879
    %1902 = vmatprep.subr.bf16.mxu0 %v888
    %1903 = vmatpush1.bf16.msra.mxu0 %v887
    %1904 = vmatprep.subr.bf16.mxu0 %v896
    %1905 = vmatpush1.bf16.msra.mxu0 %v895
    %1906 = vmatprep.subr.bf16.mxu0 %v904
    %1907 = vmatpush1.bf16.msra.mxu0 %v903
    %1908 = vmatprep.mubr.bf16.mxu0 %v1793
    %1909 = vmatmul.mubr.bf16.gmra.mrb[0].mxu0 %v1792
    %v1910 = vpop.f32.mrb[0].mxu0
    %v1911 = vadd.f32 0.0, %v1910
    %v1912 = vpop.f32.mrb[0].mxu0
    %v1913 = vadd.f32 0.0, %v1912
    %v1914 = vpop.f32.mrb[0].mxu0
    %v1915 = vpop.f32.mrb[0].mxu0
    %1916 = vdwg.mxu0
    %1917 = vmatprep.subr.bf16.mxu0 %v786
    %1918 = vmatpush1.bf16.msra.mxu0 %v785
    %1919 = vmatprep.subr.bf16.mxu0 %v794
    %1920 = vmatpush1.bf16.msra.mxu0 %v793
    %1921 = vmatprep.subr.bf16.mxu0 %v802
    %1922 = vmatpush1.bf16.msra.mxu0 %v801
    %1923 = vmatprep.subr.bf16.mxu0 %v810
    %1924 = vmatpush1.bf16.msra.mxu0 %v809
    %1925 = vmatprep.subr.bf16.mxu0 %v818
    %1926 = vmatpush1.bf16.msra.mxu0 %v817
    %1927 = vmatprep.subr.bf16.mxu0 %v826
    %1928 = vmatpush1.bf16.msra.mxu0 %v825
    %1929 = vmatprep.subr.bf16.mxu0 %v834
    %1930 = vmatpush1.bf16.msra.mxu0 %v833
    %1931 = vmatprep.subr.bf16.mxu0 %v842
    %1932 = vmatpush1.bf16.msra.mxu0 %v841
    %1933 = vmatprep.subr.bf16.mxu0 %v850
    %1934 = vmatpush1.bf16.msra.mxu0 %v849
    %1935 = vmatprep.subr.bf16.mxu0 %v858
    %1936 = vmatpush1.bf16.msra.mxu0 %v857
    %1937 = vmatprep.subr.bf16.mxu0 %v866
    %1938 = vmatpush1.bf16.msra.mxu0 %v865
    %1939 = vmatprep.subr.bf16.mxu0 %v874
    %1940 = vmatpush1.bf16.msra.mxu0 %v873
    %1941 = vmatprep.subr.bf16.mxu0 %v882
    %1942 = vmatpush1.bf16.msra.mxu0 %v881
    %1943 = vmatprep.subr.bf16.mxu0 %v890
    %1944 = vmatpush1.bf16.msra.mxu0 %v889
    %1945 = vmatprep.subr.bf16.mxu0 %v898
    %1946 = vmatpush1.bf16.msra.mxu0 %v897
    %1947 = vmatprep.subr.bf16.mxu0 %v906
    %1948 = vmatpush1.bf16.msra.mxu0 %v905
    %1949 = vmatprep.mubr.bf16.mxu0 %v1793
    %1950 = vmatmul.mubr.bf16.gmra.mrb[0].mxu0 %v1792
    %v1951 = vpop.f32.mrb[0].mxu0
    %v1952 = vadd.f32 0.0, %v1951
    %v1953 = vpop.f32.mrb[0].mxu0
    %v1954 = vadd.f32 0.0, %v1953
    %v1955 = vpop.f32.mrb[0].mxu0
    %v1956 = vpop.f32.mrb[0].mxu0
    %1957 = vdwg.mxu0
    %v1958 = vadd.f32 %v1911, %v1203
    %v1959 = vadd.f32 %v1913, %v1207
    %v1960 = vadd.f32 %v1952, %v1211
    %v1961 = vadd.f32 %v1954, %v1215
    %v1962 = vxor.u32 %v1958, 2147483648
    %v1963 = vmul.f32 %v1962, 1.442695
    %v1964 = vpow.pop %v1963
    %v1965 = vadd.f32 %v1964, 1.0
    %v1966 = vrcp.pop %v1965
    %v1967 = vmul.f32 1.0, %v1966
    %v1968 = vxor.u32 %v1959, 2147483648
    %v1969 = vmul.f32 %v1968, 1.442695
    %v1970 = vpow.pop %v1969
    %v1971 = vadd.f32 %v1970, 1.0
    %v1972 = vrcp.pop %v1971
    %v1973 = vmul.f32 1.0, %v1972
    %v1974 = vtanh.pop %v1960
    %v1975 = vxor.u32 %v1961, 2147483648
    %v1976 = vmul.f32 %v1975, 1.442695
    %v1977 = vpow.pop %v1976
    %v1978 = vadd.f32 %v1977, 1.0
    %v1979 = vrcp.pop %v1978
    %v1980 = vmul.f32 1.0, %v1979
    %v1981 = vmul.f32 %v1973, %v1614
    %v1982 = vmul.f32 %v1967, %v1974
    %v1983 = vadd.f32 %v1981, %v1982
    %v1984 = vtanh.pop %v1983
    %v1985 = vmul.f32 %v1980, %v1984
    %s1986 = scalar_lea.vmem %s0, 24
    %v1987 = vld [vmem:[%s1986] sm:$0xff]
    %v1989 = vsel %vm95, %v1987, 0
    %1991 = vmatprep.subr.mxu0 %v62
    %1992 = vmatpush1.msra.mxu0 %v61
    %1993 = vmatprep.subr.mxu0 %v66
    %1994 = vmatpush1.msra.mxu0 %v65
    %1995 = vmatprep.subr.mxu0 0.0
    %1996 = vmatpush1.msra.mxu0 0.0
    %1997 = vmatprep.subr.mxu0 0.0
    %1998 = vmatpush1.msra.mxu0 0.0
    %1999 = vmatprep.subr.mxu0 0.0
    %2000 = vmatpush1.msra.mxu0 0.0
    %2001 = vmatprep.subr.mxu0 0.0
    %2002 = vmatpush1.msra.mxu0 0.0
    %2003 = vmatprep.subr.mxu0 0.0
    %2004 = vmatpush1.msra.mxu0 0.0
    %2005 = vmatprep.subr.mxu0 0.0
    %2006 = vmatpush1.msra.mxu0 0.0
    %2007 = vmatprep.subr.mxu0 0.0
    %2008 = vmatpush1.msra.mxu0 0.0
    %2009 = vmatprep.subr.mxu0 0.0
    %2010 = vmatpush1.msra.mxu0 0.0
    %2011 = vmatprep.subr.mxu0 0.0
    %2012 = vmatpush1.msra.mxu0 0.0
    %2013 = vmatprep.subr.mxu0 0.0
    %2014 = vmatpush1.msra.mxu0 0.0
    %2015 = vmatprep.subr.mxu0 0.0
    %2016 = vmatpush1.msra.mxu0 0.0
    %2017 = vmatprep.subr.mxu0 0.0
    %2018 = vmatpush1.msra.mxu0 0.0
    %2019 = vmatprep.subr.mxu0 0.0
    %2020 = vmatpush1.msra.mxu0 0.0
    %2021 = vmatprep.subr.mxu0 0.0
    %2022 = vmatpush1.msra.mxu0 0.0
    %2023 = vmatprep.subr.mxu0 0.0
    %2024 = vmatpush1.msra.mxu0 0.0
    %2025 = vmatprep.subr.mxu0 0.0
    %2026 = vmatpush1.msra.mxu0 0.0
    %2027 = vmatprep.subr.mxu0 0.0
    %2028 = vmatpush1.msra.mxu0 0.0
    %2029 = vmatprep.subr.mxu0 0.0
    %2030 = vmatpush1.msra.mxu0 0.0
    %2031 = vmatprep.subr.mxu0 0.0
    %2032 = vmatpush1.msra.mxu0 0.0
    %2033 = vmatprep.subr.mxu0 0.0
    %2034 = vmatpush1.msra.mxu0 0.0
    %2035 = vmatprep.subr.mxu0 0.0
    %2036 = vmatpush1.msra.mxu0 0.0
    %2037 = vmatprep.subr.mxu0 0.0
    %2038 = vmatpush1.msra.mxu0 0.0
    %2039 = vmatprep.subr.mxu0 0.0
    %2040 = vmatpush1.msra.mxu0 0.0
    %2041 = vmatprep.subr.mxu0 0.0
    %2042 = vmatpush1.msra.mxu0 0.0
    %2043 = vmatprep.subr.mxu0 0.0
    %2044 = vmatpush1.msra.mxu0 0.0
    %2045 = vmatprep.subr.mxu0 0.0
    %2046 = vmatpush1.msra.mxu0 0.0
    %2047 = vmatprep.subr.mxu0 0.0
    %2048 = vmatpush1.msra.mxu0 0.0
    %2049 = vmatprep.subr.mxu0 0.0
    %2050 = vmatpush1.msra.mxu0 0.0
    %2051 = vmatprep.subr.mxu0 0.0
    %2052 = vmatpush1.msra.mxu0 0.0
    %2053 = vmatprep.subr.mxu0 0.0
    %2054 = vmatpush1.msra.mxu0 0.0
    %2055 = vmatprep.mubr.f32.mxu0 0.0
    %2056 = vmatmul.mubr.f32.gmra.mrb[0].mxu0 %v1989
    %v2057 = vpop.f32.mrb[0].mxu0
    %v2058 = vadd.f32 %v78, %v2057
    %v2059 = vpop.f32.mrb[0].mxu0
    %v2060 = vadd.f32 %v82, %v2059
    %2061 = vdwg.mxu0
    %2062 = vmatprep.subr.mxu0 %v64
    %2063 = vmatpush1.msra.mxu0 %v63
    %2064 = vmatprep.subr.mxu0 %v68
    %2065 = vmatpush1.msra.mxu0 %v67
    %2066 = vmatprep.subr.mxu0 0.0
    %2067 = vmatpush1.msra.mxu0 0.0
    %2068 = vmatprep.subr.mxu0 0.0
    %2069 = vmatpush1.msra.mxu0 0.0
    %2070 = vmatprep.subr.mxu0 0.0
    %2071 = vmatpush1.msra.mxu0 0.0
    %2072 = vmatprep.subr.mxu0 0.0
    %2073 = vmatpush1.msra.mxu0 0.0
    %2074 = vmatprep.subr.mxu0 0.0
    %2075 = vmatpush1.msra.mxu0 0.0
    %2076 = vmatprep.subr.mxu0 0.0
    %2077 = vmatpush1.msra.mxu0 0.0
    %2078 = vmatprep.subr.mxu0 0.0
    %2079 = vmatpush1.msra.mxu0 0.0
    %2080 = vmatprep.subr.mxu0 0.0
    %2081 = vmatpush1.msra.mxu0 0.0
    %2082 = vmatprep.subr.mxu0 0.0
    %2083 = vmatpush1.msra.mxu0 0.0
    %2084 = vmatprep.subr.mxu0 0.0
    %2085 = vmatpush1.msra.mxu0 0.0
    %2086 = vmatprep.subr.mxu0 0.0
    %2087 = vmatpush1.msra.mxu0 0.0
    %2088 = vmatprep.subr.mxu0 0.0
    %2089 = vmatpush1.msra.mxu0 0.0
    %2090 = vmatprep.subr.mxu0 0.0
    %2091 = vmatpush1.msra.mxu0 0.0
    %2092 = vmatprep.subr.mxu0 0.0
    %2093 = vmatpush1.msra.mxu0 0.0
    %2094 = vmatprep.subr.mxu0 0.0
    %2095 = vmatpush1.msra.mxu0 0.0
    %2096 = vmatprep.subr.mxu0 0.0
    %2097 = vmatpush1.msra.mxu0 0.0
    %2098 = vmatprep.subr.mxu0 0.0
    %2099 = vmatpush1.msra.mxu0 0.0
    %2100 = vmatprep.subr.mxu0 0.0
    %2101 = vmatpush1.msra.mxu0 0.0
    %2102 = vmatprep.subr.mxu0 0.0
    %2103 = vmatpush1.msra.mxu0 0.0
    %2104 = vmatprep.subr.mxu0 0.0
    %2105 = vmatpush1.msra.mxu0 0.0
    %2106 = vmatprep.subr.mxu0 0.0
    %2107 = vmatpush1.msra.mxu0 0.0
    %2108 = vmatprep.subr.mxu0 0.0
    %2109 = vmatpush1.msra.mxu0 0.0
    %2110 = vmatprep.subr.mxu0 0.0
    %2111 = vmatpush1.msra.mxu0 0.0
    %2112 = vmatprep.subr.mxu0 0.0
    %2113 = vmatpush1.msra.mxu0 0.0
    %2114 = vmatprep.subr.mxu0 0.0
    %2115 = vmatpush1.msra.mxu0 0.0
    %2116 = vmatprep.subr.mxu0 0.0
    %2117 = vmatpush1.msra.mxu0 0.0
    %2118 = vmatprep.subr.mxu0 0.0
    %2119 = vmatpush1.msra.mxu0 0.0
    %2120 = vmatprep.subr.mxu0 0.0
    %2121 = vmatpush1.msra.mxu0 0.0
    %2122 = vmatprep.subr.mxu0 0.0
    %2123 = vmatpush1.msra.mxu0 0.0
    %2124 = vmatprep.subr.mxu0 0.0
    %2125 = vmatpush1.msra.mxu0 0.0
    %2126 = vmatprep.mubr.f32.mxu0 0.0
    %2127 = vmatmul.mubr.f32.gmra.mrb[0].mxu0 %v1989
    %v2128 = vpop.f32.mrb[0].mxu0
    %v2129 = vadd.f32 %v86, %v2128
    %v2130 = vpop.f32.mrb[0].mxu0
    %v2131 = vadd.f32 %v90, %v2130
    %2132 = vdwg.mxu0
    %v2133 = vadd.f32 %v2058, %v1829
    %v2134 = vadd.f32 %v2060, %v1831
    %v2135 = vadd.f32 %v2129, %v1870
    %v2136 = vadd.f32 %v2131, %v1872
    %v2137 = vxor.u32 %v2133, 2147483648
    %v2138 = vmul.f32 %v2137, 1.442695
    %v2139 = vpow.pop %v2138
    %v2140 = vadd.f32 %v2139, 1.0
    %v2141 = vrcp.pop %v2140
    %v2142 = vmul.f32 1.0, %v2141
    %v2143 = vxor.u32 %v2134, 2147483648
    %v2144 = vmul.f32 %v2143, 1.442695
    %v2145 = vpow.pop %v2144
    %v2146 = vadd.f32 %v2145, 1.0
    %v2147 = vrcp.pop %v2146
    %v2148 = vmul.f32 1.0, %v2147
    %v2149 = vtanh.pop %v2135
    %v2150 = vxor.u32 %v2136, 2147483648
    %v2151 = vmul.f32 %v2150, 1.442695
    %v2152 = vpow.pop %v2151
    %v2153 = vadd.f32 %v2152, 1.0
    %v2154 = vrcp.pop %v2153
    %v2155 = vmul.f32 1.0, %v2154
    %v2156 = vmul.f32 %v2148, %v1789
    %v2157 = vmul.f32 %v2142, %v2149
    %v2158 = vadd.f32 %v2156, %v2157
    %v2159 = vtanh.pop %v2158
    %v2160 = vmul.f32 %v2155, %v2159
    %v2161 = vpack.c.bf16 %v2160, %v2160
    %v2162 = vpack.c.bf16 %v1985, %v1985
    %2163 = vmatprep.subr.bf16.mxu0 %v780
    %2164 = vmatpush1.bf16.msra.mxu0 %v779
    %2165 = vmatprep.subr.bf16.mxu0 %v788
    %2166 = vmatpush1.bf16.msra.mxu0 %v787
    %2167 = vmatprep.subr.bf16.mxu0 %v796
    %2168 = vmatpush1.bf16.msra.mxu0 %v795
    %2169 = vmatprep.subr.bf16.mxu0 %v804
    %2170 = vmatpush1.bf16.msra.mxu0 %v803
    %2171 = vmatprep.subr.bf16.mxu0 %v812
    %2172 = vmatpush1.bf16.msra.mxu0 %v811
    %2173 = vmatprep.subr.bf16.mxu0 %v820
    %2174 = vmatpush1.bf16.msra.mxu0 %v819
    %2175 = vmatprep.subr.bf16.mxu0 %v828
    %2176 = vmatpush1.bf16.msra.mxu0 %v827
    %2177 = vmatprep.subr.bf16.mxu0 %v836
    %2178 = vmatpush1.bf16.msra.mxu0 %v835
    %2179 = vmatprep.subr.bf16.mxu0 %v844
    %2180 = vmatpush1.bf16.msra.mxu0 %v843
    %2181 = vmatprep.subr.bf16.mxu0 %v852
    %2182 = vmatpush1.bf16.msra.mxu0 %v851
    %2183 = vmatprep.subr.bf16.mxu0 %v860
    %2184 = vmatpush1.bf16.msra.mxu0 %v859
    %2185 = vmatprep.subr.bf16.mxu0 %v868
    %2186 = vmatpush1.bf16.msra.mxu0 %v867
    %2187 = vmatprep.subr.bf16.mxu0 %v876
    %2188 = vmatpush1.bf16.msra.mxu0 %v875
    %2189 = vmatprep.subr.bf16.mxu0 %v884
    %2190 = vmatpush1.bf16.msra.mxu0 %v883
    %2191 = vmatprep.subr.bf16.mxu0 %v892
    %2192 = vmatpush1.bf16.msra.mxu0 %v891
    %2193 = vmatprep.subr.bf16.mxu0 %v900
    %2194 = vmatpush1.bf16.msra.mxu0 %v899
    %2195 = vmatprep.mubr.bf16.mxu0 %v2162
    %2196 = vmatmul.mubr.bf16.gmra.mrb[0].mxu0 %v2161
    %v2197 = vpop.f32.mrb[0].mxu0
    %v2198 = vadd.f32 0.0, %v2197
    %v2199 = vpop.f32.mrb[0].mxu0
    %v2200 = vadd.f32 0.0, %v2199
    %v2201 = vpop.f32.mrb[0].mxu0
    %v2202 = vpop.f32.mrb[0].mxu0
    %2203 = vdwg.mxu0
    %2204 = vmatprep.subr.bf16.mxu0 %v782
    %2205 = vmatpush1.bf16.msra.mxu0 %v781
    %2206 = vmatprep.subr.bf16.mxu0 %v790
    %2207 = vmatpush1.bf16.msra.mxu0 %v789
    %2208 = vmatprep.subr.bf16.mxu0 %v798
    %2209 = vmatpush1.bf16.msra.mxu0 %v797
    %2210 = vmatprep.subr.bf16.mxu0 %v806
    %2211 = vmatpush1.bf16.msra.mxu0 %v805
    %2212 = vmatprep.subr.bf16.mxu0 %v814
    %2213 = vmatpush1.bf16.msra.mxu0 %v813
    %2214 = vmatprep.subr.bf16.mxu0 %v822
    %2215 = vmatpush1.bf16.msra.mxu0 %v821
    %2216 = vmatprep.subr.bf16.mxu0 %v830
    %2217 = vmatpush1.bf16.msra.mxu0 %v829
    %2218 = vmatprep.subr.bf16.mxu0 %v838
    %2219 = vmatpush1.bf16.msra.mxu0 %v837
    %2220 = vmatprep.subr.bf16.mxu0 %v846
    %2221 = vmatpush1.bf16.msra.mxu0 %v845
    %2222 = vmatprep.subr.bf16.mxu0 %v854
    %2223 = vmatpush1.bf16.msra.mxu0 %v853
    %2224 = vmatprep.subr.bf16.mxu0 %v862
    %2225 = vmatpush1.bf16.msra.mxu0 %v861
    %2226 = vmatprep.subr.bf16.mxu0 %v870
    %2227 = vmatpush1.bf16.msra.mxu0 %v869
    %2228 = vmatprep.subr.bf16.mxu0 %v878
    %2229 = vmatpush1.bf16.msra.mxu0 %v877
    %2230 = vmatprep.subr.bf16.mxu0 %v886
    %2231 = vmatpush1.bf16.msra.mxu0 %v885
    %2232 = vmatprep.subr.bf16.mxu0 %v894
    %2233 = vmatpush1.bf16.msra.mxu0 %v893
    %2234 = vmatprep.subr.bf16.mxu0 %v902
    %2235 = vmatpush1.bf16.msra.mxu0 %v901
    %2236 = vmatprep.mubr.bf16.mxu0 %v2162
    %2237 = vmatmul.mubr.bf16.gmra.mrb[0].mxu0 %v2161
    %v2238 = vpop.f32.mrb[0].mxu0
    %v2239 = vadd.f32 0.0, %v2238
    %v2240 = vpop.f32.mrb[0].mxu0
    %v2241 = vadd.f32 0.0, %v2240
    %v2242 = vpop.f32.mrb[0].mxu0
    %v2243 = vpop.f32.mrb[0].mxu0
    %2244 = vdwg.mxu0
    %2245 = vmatprep.subr.bf16.mxu0 %v784
    %2246 = vmatpush1.bf16.msra.mxu0 %v783
    %2247 = vmatprep.subr.bf16.mxu0 %v792
    %2248 = vmatpush1.bf16.msra.mxu0 %v791
    %2249 = vmatprep.subr.bf16.mxu0 %v800
    %2250 = vmatpush1.bf16.msra.mxu0 %v799
    %2251 = vmatprep.subr.bf16.mxu0 %v808
    %2252 = vmatpush1.bf16.msra.mxu0 %v807
    %2253 = vmatprep.subr.bf16.mxu0 %v816
    %2254 = vmatpush1.bf16.msra.mxu0 %v815
    %2255 = vmatprep.subr.bf16.mxu0 %v824
    %2256 = vmatpush1.bf16.msra.mxu0 %v823
    %2257 = vmatprep.subr.bf16.mxu0 %v832
    %2258 = vmatpush1.bf16.msra.mxu0 %v831
    %2259 = vmatprep.subr.bf16.mxu0 %v840
    %2260 = vmatpush1.bf16.msra.mxu0 %v839
    %2261 = vmatprep.subr.bf16.mxu0 %v848
    %2262 = vmatpush1.bf16.msra.mxu0 %v847
    %2263 = vmatprep.subr.bf16.mxu0 %v856
    %2264 = vmatpush1.bf16.msra.mxu0 %v855
    %2265 = vmatprep.subr.bf16.mxu0 %v864
    %2266 = vmatpush1.bf16.msra.mxu0 %v863
    %2267 = vmatprep.subr.bf16.mxu0 %v872
    %2268 = vmatpush1.bf16.msra.mxu0 %v871
    %2269 = vmatprep.subr.bf16.mxu0 %v880
    %2270 = vmatpush1.bf16.msra.mxu0 %v879
    %2271 = vmatprep.subr.bf16.mxu0 %v888
    %2272 = vmatpush1.bf16.msra.mxu0 %v887
    %2273 = vmatprep.subr.bf16.mxu0 %v896
    %2274 = vmatpush1.bf16.msra.mxu0 %v895
    %2275 = vmatprep.subr.bf16.mxu0 %v904
    %2276 = vmatpush1.bf16.msra.mxu0 %v903
    %2277 = vmatprep.mubr.bf16.mxu0 %v2162
    %2278 = vmatmul.mubr.bf16.gmra.mrb[0].mxu0 %v2161
    %v2279 = vpop.f32.mrb[0].mxu0
    %v2280 = vadd.f32 0.0, %v2279
    %v2281 = vpop.f32.mrb[0].mxu0
    %v2282 = vadd.f32 0.0, %v2281
    %v2283 = vpop.f32.mrb[0].mxu0
    %v2284 = vpop.f32.mrb[0].mxu0
    %2285 = vdwg.mxu0
    %2286 = vmatprep.subr.bf16.mxu0 %v786
    %2287 = vmatpush1.bf16.msra.mxu0 %v785
    %2288 = vmatprep.subr.bf16.mxu0 %v794
    %2289 = vmatpush1.bf16.msra.mxu0 %v793
    %2290 = vmatprep.subr.bf16.mxu0 %v802
    %2291 = vmatpush1.bf16.msra.mxu0 %v801
    %2292 = vmatprep.subr.bf16.mxu0 %v810
    %2293 = vmatpush1.bf16.msra.mxu0 %v809
    %2294 = vmatprep.subr.bf16.mxu0 %v818
    %2295 = vmatpush1.bf16.msra.mxu0 %v817
    %2296 = vmatprep.subr.bf16.mxu0 %v826
    %2297 = vmatpush1.bf16.msra.mxu0 %v825
    %2298 = vmatprep.subr.bf16.mxu0 %v834
    %2299 = vmatpush1.bf16.msra.mxu0 %v833
    %2300 = vmatprep.subr.bf16.mxu0 %v842
    %2301 = vmatpush1.bf16.msra.mxu0 %v841
    %2302 = vmatprep.subr.bf16.mxu0 %v850
    %2303 = vmatpush1.bf16.msra.mxu0 %v849
    %2304 = vmatprep.subr.bf16.mxu0 %v858
    %2305 = vmatpush1.bf16.msra.mxu0 %v857
    %2306 = vmatprep.subr.bf16.mxu0 %v866
    %2307 = vmatpush1.bf16.msra.mxu0 %v865
    %2308 = vmatprep.subr.bf16.mxu0 %v874
    %2309 = vmatpush1.bf16.msra.mxu0 %v873
    %2310 = vmatprep.subr.bf16.mxu0 %v882
    %2311 = vmatpush1.bf16.msra.mxu0 %v881
    %2312 = vmatprep.subr.bf16.mxu0 %v890
    %2313 = vmatpush1.bf16.msra.mxu0 %v889
    %2314 = vmatprep.subr.bf16.mxu0 %v898
    %2315 = vmatpush1.bf16.msra.mxu0 %v897
    %2316 = vmatprep.subr.bf16.mxu0 %v906
    %2317 = vmatpush1.bf16.msra.mxu0 %v905
    %2318 = vmatprep.mubr.bf16.mxu0 %v2162
    %2319 = vmatmul.mubr.bf16.gmra.mrb[0].mxu0 %v2161
    %v2320 = vpop.f32.mrb[0].mxu0
    %v2321 = vadd.f32 0.0, %v2320
    %v2322 = vpop.f32.mrb[0].mxu0
    %v2323 = vadd.f32 0.0, %v2322
    %v2324 = vpop.f32.mrb[0].mxu0
    %v2325 = vpop.f32.mrb[0].mxu0
    %2326 = vdwg.mxu0
    %v2327 = vadd.f32 %v2280, %v1203
    %v2328 = vadd.f32 %v2282, %v1207
    %v2329 = vadd.f32 %v2321, %v1211
    %v2330 = vadd.f32 %v2323, %v1215
    %v2331 = vxor.u32 %v2327, 2147483648
    %v2332 = vmul.f32 %v2331, 1.442695
    %v2333 = vpow.pop %v2332
    %v2334 = vadd.f32 %v2333, 1.0
    %v2335 = vrcp.pop %v2334
    %v2336 = vmul.f32 1.0, %v2335
    %v2337 = vxor.u32 %v2328, 2147483648
    %v2338 = vmul.f32 %v2337, 1.442695
    %v2339 = vpow.pop %v2338
    %v2340 = vadd.f32 %v2339, 1.0
    %v2341 = vrcp.pop %v2340
    %v2342 = vmul.f32 1.0, %v2341
    %v2343 = vtanh.pop %v2329
    %v2344 = vxor.u32 %v2330, 2147483648
    %v2345 = vmul.f32 %v2344, 1.442695
    %v2346 = vpow.pop %v2345
    %v2347 = vadd.f32 %v2346, 1.0
    %v2348 = vrcp.pop %v2347
    %v2349 = vmul.f32 1.0, %v2348
    %v2350 = vmul.f32 %v2342, %v1983
    %v2351 = vmul.f32 %v2336, %v2343
    %v2352 = vadd.f32 %v2350, %v2351
    %v2353 = vtanh.pop %v2352
    %v2354 = vmul.f32 %v2349, %v2353
    %s2355 = scalar_lea.vmem %s0, 32
    %v2356 = vld [vmem:[%s2355] sm:$0xff]
    %v2358 = vsel %vm95, %v2356, 0
    %2360 = vmatprep.subr.mxu0 %v62
    %2361 = vmatpush1.msra.mxu0 %v61
    %2362 = vmatprep.subr.mxu0 %v66
    %2363 = vmatpush1.msra.mxu0 %v65
    %2364 = vmatprep.subr.mxu0 0.0
    %2365 = vmatpush1.msra.mxu0 0.0
    %2366 = vmatprep.subr.mxu0 0.0
    %2367 = vmatpush1.msra.mxu0 0.0
    %2368 = vmatprep.subr.mxu0 0.0
    %2369 = vmatpush1.msra.mxu0 0.0
    %2370 = vmatprep.subr.mxu0 0.0
    %2371 = vmatpush1.msra.mxu0 0.0
    %2372 = vmatprep.subr.mxu0 0.0
    %2373 = vmatpush1.msra.mxu0 0.0
    %2374 = vmatprep.subr.mxu0 0.0
    %2375 = vmatpush1.msra.mxu0 0.0
    %2376 = vmatprep.subr.mxu0 0.0
    %2377 = vmatpush1.msra.mxu0 0.0
    %2378 = vmatprep.subr.mxu0 0.0
    %2379 = vmatpush1.msra.mxu0 0.0
    %2380 = vmatprep.subr.mxu0 0.0
    %2381 = vmatpush1.msra.mxu0 0.0
    %2382 = vmatprep.subr.mxu0 0.0
    %2383 = vmatpush1.msra.mxu0 0.0
    %2384 = vmatprep.subr.mxu0 0.0
    %2385 = vmatpush1.msra.mxu0 0.0
    %2386 = vmatprep.subr.mxu0 0.0
    %2387 = vmatpush1.msra.mxu0 0.0
    %2388 = vmatprep.subr.mxu0 0.0
    %2389 = vmatpush1.msra.mxu0 0.0
    %2390 = vmatprep.subr.mxu0 0.0
    %2391 = vmatpush1.msra.mxu0 0.0
    %2392 = vmatprep.subr.mxu0 0.0
    %2393 = vmatpush1.msra.mxu0 0.0
    %2394 = vmatprep.subr.mxu0 0.0
    %2395 = vmatpush1.msra.mxu0 0.0
    %2396 = vmatprep.subr.mxu0 0.0
    %2397 = vmatpush1.msra.mxu0 0.0
    %2398 = vmatprep.subr.mxu0 0.0
    %2399 = vmatpush1.msra.mxu0 0.0
    %2400 = vmatprep.subr.mxu0 0.0
    %2401 = vmatpush1.msra.mxu0 0.0
    %2402 = vmatprep.subr.mxu0 0.0
    %2403 = vmatpush1.msra.mxu0 0.0
    %2404 = vmatprep.subr.mxu0 0.0
    %2405 = vmatpush1.msra.mxu0 0.0
    %2406 = vmatprep.subr.mxu0 0.0
    %2407 = vmatpush1.msra.mxu0 0.0
    %2408 = vmatprep.subr.mxu0 0.0
    %2409 = vmatpush1.msra.mxu0 0.0
    %2410 = vmatprep.subr.mxu0 0.0
    %2411 = vmatpush1.msra.mxu0 0.0
    %2412 = vmatprep.subr.mxu0 0.0
    %2413 = vmatpush1.msra.mxu0 0.0
    %2414 = vmatprep.subr.mxu0 0.0
    %2415 = vmatpush1.msra.mxu0 0.0
    %2416 = vmatprep.subr.mxu0 0.0
    %2417 = vmatpush1.msra.mxu0 0.0
    %2418 = vmatprep.subr.mxu0 0.0
    %2419 = vmatpush1.msra.mxu0 0.0
    %2420 = vmatprep.subr.mxu0 0.0
    %2421 = vmatpush1.msra.mxu0 0.0
    %2422 = vmatprep.subr.mxu0 0.0
    %2423 = vmatpush1.msra.mxu0 0.0
    %2424 = vmatprep.mubr.f32.mxu0 0.0
    %2425 = vmatmul.mubr.f32.gmra.mrb[0].mxu0 %v2358
    %v2426 = vpop.f32.mrb[0].mxu0
    %v2427 = vadd.f32 %v78, %v2426
    %v2428 = vpop.f32.mrb[0].mxu0
    %v2429 = vadd.f32 %v82, %v2428
    %2430 = vdwg.mxu0
    %2431 = vmatprep.subr.mxu0 %v64
    %2432 = vmatpush1.msra.mxu0 %v63
    %2433 = vmatprep.subr.mxu0 %v68
    %2434 = vmatpush1.msra.mxu0 %v67
    %2435 = vmatprep.subr.mxu0 0.0
    %2436 = vmatpush1.msra.mxu0 0.0
    %2437 = vmatprep.subr.mxu0 0.0
    %2438 = vmatpush1.msra.mxu0 0.0
    %2439 = vmatprep.subr.mxu0 0.0
    %2440 = vmatpush1.msra.mxu0 0.0
    %2441 = vmatprep.subr.mxu0 0.0
    %2442 = vmatpush1.msra.mxu0 0.0
    %2443 = vmatprep.subr.mxu0 0.0
    %2444 = vmatpush1.msra.mxu0 0.0
    %2445 = vmatprep.subr.mxu0 0.0
    %2446 = vmatpush1.msra.mxu0 0.0
    %2447 = vmatprep.subr.mxu0 0.0
    %2448 = vmatpush1.msra.mxu0 0.0
    %2449 = vmatprep.subr.mxu0 0.0
    %2450 = vmatpush1.msra.mxu0 0.0
    %2451 = vmatprep.subr.mxu0 0.0
    %2452 = vmatpush1.msra.mxu0 0.0
    %2453 = vmatprep.subr.mxu0 0.0
    %2454 = vmatpush1.msra.mxu0 0.0
    %2455 = vmatprep.subr.mxu0 0.0
    %2456 = vmatpush1.msra.mxu0 0.0
    %2457 = vmatprep.subr.mxu0 0.0
    %2458 = vmatpush1.msra.mxu0 0.0
    %2459 = vmatprep.subr.mxu0 0.0
    %2460 = vmatpush1.msra.mxu0 0.0
    %2461 = vmatprep.subr.mxu0 0.0
    %2462 = vmatpush1.msra.mxu0 0.0
    %2463 = vmatprep.subr.mxu0 0.0
    %2464 = vmatpush1.msra.mxu0 0.0
    %2465 = vmatprep.subr.mxu0 0.0
    %2466 = vmatpush1.msra.mxu0 0.0
    %2467 = vmatprep.subr.mxu0 0.0
    %2468 = vmatpush1.msra.mxu0 0.0
    %2469 = vmatprep.subr.mxu0 0.0
    %2470 = vmatpush1.msra.mxu0 0.0
    %2471 = vmatprep.subr.mxu0 0.0
    %2472 = vmatpush1.msra.mxu0 0.0
    %2473 = vmatprep.subr.mxu0 0.0
    %2474 = vmatpush1.msra.mxu0 0.0
    %2475 = vmatprep.subr.mxu0 0.0
    %2476 = vmatpush1.msra.mxu0 0.0
    %2477 = vmatprep.subr.mxu0 0.0
    %2478 = vmatpush1.msra.mxu0 0.0
    %2479 = vmatprep.subr.mxu0 0.0
    %2480 = vmatpush1.msra.mxu0 0.0
    %2481 = vmatprep.subr.mxu0 0.0
    %2482 = vmatpush1.msra.mxu0 0.0
    %2483 = vmatprep.subr.mxu0 0.0
    %2484 = vmatpush1.msra.mxu0 0.0
    %2485 = vmatprep.subr.mxu0 0.0
    %2486 = vmatpush1.msra.mxu0 0.0
    %2487 = vmatprep.subr.mxu0 0.0
    %2488 = vmatpush1.msra.mxu0 0.0
    %2489 = vmatprep.subr.mxu0 0.0
    %2490 = vmatpush1.msra.mxu0 0.0
    %2491 = vmatprep.subr.mxu0 0.0
    %2492 = vmatpush1.msra.mxu0 0.0
    %2493 = vmatprep.subr.mxu0 0.0
    %2494 = vmatpush1.msra.mxu0 0.0
    %2495 = vmatprep.mubr.f32.mxu0 0.0
    %2496 = vmatmul.mubr.f32.gmra.mrb[0].mxu0 %v2358
    %v2497 = vpop.f32.mrb[0].mxu0
    %v2498 = vadd.f32 %v86, %v2497
    %v2499 = vpop.f32.mrb[0].mxu0
    %v2500 = vadd.f32 %v90, %v2499
    %2501 = vdwg.mxu0
    %v2502 = vadd.f32 %v2427, %v2198
    %v2503 = vadd.f32 %v2429, %v2200
    %v2504 = vadd.f32 %v2498, %v2239
    %v2505 = vadd.f32 %v2500, %v2241
    %v2506 = vxor.u32 %v2502, 2147483648
    %v2507 = vmul.f32 %v2506, 1.442695
    %v2508 = vpow.pop %v2507
    %v2509 = vadd.f32 %v2508, 1.0
    %v2510 = vrcp.pop %v2509
    %v2511 = vmul.f32 1.0, %v2510
    %v2512 = vxor.u32 %v2503, 2147483648
    %v2513 = vmul.f32 %v2512, 1.442695
    %v2514 = vpow.pop %v2513
    %v2515 = vadd.f32 %v2514, 1.0
    %v2516 = vrcp.pop %v2515
    %v2517 = vmul.f32 1.0, %v2516
    %v2518 = vtanh.pop %v2504
    %v2519 = vxor.u32 %v2505, 2147483648
    %v2520 = vmul.f32 %v2519, 1.442695
    %v2521 = vpow.pop %v2520
    %v2522 = vadd.f32 %v2521, 1.0
    %v2523 = vrcp.pop %v2522
    %v2524 = vmul.f32 1.0, %v2523
    %v2525 = vmul.f32 %v2517, %v2158
    %v2526 = vmul.f32 %v2511, %v2518
    %v2527 = vadd.f32 %v2525, %v2526
    %v2528 = vtanh.pop %v2527
    %v2529 = vmul.f32 %v2524, %v2528
    %v2530 = vpack.c.bf16 %v2529, %v2529
    %v2531 = vpack.c.bf16 %v2354, %v2354
    %2532 = vmatprep.subr.bf16.mxu0 %v780
    %2533 = vmatpush1.bf16.msra.mxu0 %v779
    %2534 = vmatprep.subr.bf16.mxu0 %v788
    %2535 = vmatpush1.bf16.msra.mxu0 %v787
    %2536 = vmatprep.subr.bf16.mxu0 %v796
    %2537 = vmatpush1.bf16.msra.mxu0 %v795
    %2538 = vmatprep.subr.bf16.mxu0 %v804
    %2539 = vmatpush1.bf16.msra.mxu0 %v803
    %2540 = vmatprep.subr.bf16.mxu0 %v812
    %2541 = vmatpush1.bf16.msra.mxu0 %v811
    %2542 = vmatprep.subr.bf16.mxu0 %v820
    %2543 = vmatpush1.bf16.msra.mxu0 %v819
    %2544 = vmatprep.subr.bf16.mxu0 %v828
    %2545 = vmatpush1.bf16.msra.mxu0 %v827
    %2546 = vmatprep.subr.bf16.mxu0 %v836
    %2547 = vmatpush1.bf16.msra.mxu0 %v835
    %2548 = vmatprep.subr.bf16.mxu0 %v844
    %2549 = vmatpush1.bf16.msra.mxu0 %v843
    %2550 = vmatprep.subr.bf16.mxu0 %v852
    %2551 = vmatpush1.bf16.msra.mxu0 %v851
    %2552 = vmatprep.subr.bf16.mxu0 %v860
    %2553 = vmatpush1.bf16.msra.mxu0 %v859
    %2554 = vmatprep.subr.bf16.mxu0 %v868
    %2555 = vmatpush1.bf16.msra.mxu0 %v867
    %2556 = vmatprep.subr.bf16.mxu0 %v876
    %2557 = vmatpush1.bf16.msra.mxu0 %v875
    %2558 = vmatprep.subr.bf16.mxu0 %v884
    %2559 = vmatpush1.bf16.msra.mxu0 %v883
    %2560 = vmatprep.subr.bf16.mxu0 %v892
    %2561 = vmatpush1.bf16.msra.mxu0 %v891
    %2562 = vmatprep.subr.bf16.mxu0 %v900
    %2563 = vmatpush1.bf16.msra.mxu0 %v899
    %2564 = vmatprep.mubr.bf16.mxu0 %v2531
    %2565 = vmatmul.mubr.bf16.gmra.mrb[0].mxu0 %v2530
    %v2566 = vpop.f32.mrb[0].mxu0
    %v2567 = vadd.f32 0.0, %v2566
    %v2568 = vpop.f32.mrb[0].mxu0
    %v2569 = vadd.f32 0.0, %v2568
    %v2570 = vpop.f32.mrb[0].mxu0
    %v2571 = vpop.f32.mrb[0].mxu0
    %2572 = vdwg.mxu0
    %2573 = vmatprep.subr.bf16.mxu0 %v782
    %2574 = vmatpush1.bf16.msra.mxu0 %v781
    %2575 = vmatprep.subr.bf16.mxu0 %v790
    %2576 = vmatpush1.bf16.msra.mxu0 %v789
    %2577 = vmatprep.subr.bf16.mxu0 %v798
    %2578 = vmatpush1.bf16.msra.mxu0 %v797
    %2579 = vmatprep.subr.bf16.mxu0 %v806
    %2580 = vmatpush1.bf16.msra.mxu0 %v805
    %2581 = vmatprep.subr.bf16.mxu0 %v814
    %2582 = vmatpush1.bf16.msra.mxu0 %v813
    %2583 = vmatprep.subr.bf16.mxu0 %v822
    %2584 = vmatpush1.bf16.msra.mxu0 %v821
    %2585 = vmatprep.subr.bf16.mxu0 %v830
    %2586 = vmatpush1.bf16.msra.mxu0 %v829
    %2587 = vmatprep.subr.bf16.mxu0 %v838
    %2588 = vmatpush1.bf16.msra.mxu0 %v837
    %2589 = vmatprep.subr.bf16.mxu0 %v846
    %2590 = vmatpush1.bf16.msra.mxu0 %v845
    %2591 = vmatprep.subr.bf16.mxu0 %v854
    %2592 = vmatpush1.bf16.msra.mxu0 %v853
    %2593 = vmatprep.subr.bf16.mxu0 %v862
    %2594 = vmatpush1.bf16.msra.mxu0 %v861
    %2595 = vmatprep.subr.bf16.mxu0 %v870
    %2596 = vmatpush1.bf16.msra.mxu0 %v869
    %2597 = vmatprep.subr.bf16.mxu0 %v878
    %2598 = vmatpush1.bf16.msra.mxu0 %v877
    %2599 = vmatprep.subr.bf16.mxu0 %v886
    %2600 = vmatpush1.bf16.msra.mxu0 %v885
    %2601 = vmatprep.subr.bf16.mxu0 %v894
    %2602 = vmatpush1.bf16.msra.mxu0 %v893
    %2603 = vmatprep.subr.bf16.mxu0 %v902
    %2604 = vmatpush1.bf16.msra.mxu0 %v901
    %2605 = vmatprep.mubr.bf16.mxu0 %v2531
    %2606 = vmatmul.mubr.bf16.gmra.mrb[0].mxu0 %v2530
    %v2607 = vpop.f32.mrb[0].mxu0
    %v2608 = vadd.f32 0.0, %v2607
    %v2609 = vpop.f32.mrb[0].mxu0
    %v2610 = vadd.f32 0.0, %v2609
    %v2611 = vpop.f32.mrb[0].mxu0
    %v2612 = vpop.f32.mrb[0].mxu0
    %2613 = vdwg.mxu0
    %2614 = vmatprep.subr.bf16.mxu0 %v784
    %2615 = vmatpush1.bf16.msra.mxu0 %v783
    %2616 = vmatprep.subr.bf16.mxu0 %v792
    %2617 = vmatpush1.bf16.msra.mxu0 %v791
    %2618 = vmatprep.subr.bf16.mxu0 %v800
    %2619 = vmatpush1.bf16.msra.mxu0 %v799
    %2620 = vmatprep.subr.bf16.mxu0 %v808
    %2621 = vmatpush1.bf16.msra.mxu0 %v807
    %2622 = vmatprep.subr.bf16.mxu0 %v816
    %2623 = vmatpush1.bf16.msra.mxu0 %v815
    %2624 = vmatprep.subr.bf16.mxu0 %v824
    %2625 = vmatpush1.bf16.msra.mxu0 %v823
    %2626 = vmatprep.subr.bf16.mxu0 %v832
    %2627 = vmatpush1.bf16.msra.mxu0 %v831
    %2628 = vmatprep.subr.bf16.mxu0 %v840
    %2629 = vmatpush1.bf16.msra.mxu0 %v839
    %2630 = vmatprep.subr.bf16.mxu0 %v848
    %2631 = vmatpush1.bf16.msra.mxu0 %v847
    %2632 = vmatprep.subr.bf16.mxu0 %v856
    %2633 = vmatpush1.bf16.msra.mxu0 %v855
    %2634 = vmatprep.subr.bf16.mxu0 %v864
    %2635 = vmatpush1.bf16.msra.mxu0 %v863
    %2636 = vmatprep.subr.bf16.mxu0 %v872
    %2637 = vmatpush1.bf16.msra.mxu0 %v871
    %2638 = vmatprep.subr.bf16.mxu0 %v880
    %2639 = vmatpush1.bf16.msra.mxu0 %v879
    %2640 = vmatprep.subr.bf16.mxu0 %v888
    %2641 = vmatpush1.bf16.msra.mxu0 %v887
    %2642 = vmatprep.subr.bf16.mxu0 %v896
    %2643 = vmatpush1.bf16.msra.mxu0 %v895
    %2644 = vmatprep.subr.bf16.mxu0 %v904
    %2645 = vmatpush1.bf16.msra.mxu0 %v903
    %2646 = vmatprep.mubr.bf16.mxu0 %v2531
    %2647 = vmatmul.mubr.bf16.gmra.mrb[0].mxu0 %v2530
    %v2648 = vpop.f32.mrb[0].mxu0
    %v2649 = vadd.f32 0.0, %v2648
    %v2650 = vpop.f32.mrb[0].mxu0
    %v2651 = vadd.f32 0.0, %v2650
    %v2652 = vpop.f32.mrb[0].mxu0
    %v2653 = vpop.f32.mrb[0].mxu0
    %2654 = vdwg.mxu0
    %2655 = vmatprep.subr.bf16.mxu0 %v786
    %2656 = vmatpush1.bf16.msra.mxu0 %v785
    %2657 = vmatprep.subr.bf16.mxu0 %v794
    %2658 = vmatpush1.bf16.msra.mxu0 %v793
    %2659 = vmatprep.subr.bf16.mxu0 %v802
    %2660 = vmatpush1.bf16.msra.mxu0 %v801
    %2661 = vmatprep.subr.bf16.mxu0 %v810
    %2662 = vmatpush1.bf16.msra.mxu0 %v809
    %2663 = vmatprep.subr.bf16.mxu0 %v818
    %2664 = vmatpush1.bf16.msra.mxu0 %v817
    %2665 = vmatprep.subr.bf16.mxu0 %v826
    %2666 = vmatpush1.bf16.msra.mxu0 %v825
    %2667 = vmatprep.subr.bf16.mxu0 %v834
    %2668 = vmatpush1.bf16.msra.mxu0 %v833
    %2669 = vmatprep.subr.bf16.mxu0 %v842
    %2670 = vmatpush1.bf16.msra.mxu0 %v841
    %2671 = vmatprep.subr.bf16.mxu0 %v850
    %2672 = vmatpush1.bf16.msra.mxu0 %v849
    %2673 = vmatprep.subr.bf16.mxu0 %v858
    %2674 = vmatpush1.bf16.msra.mxu0 %v857
    %2675 = vmatprep.subr.bf16.mxu0 %v866
    %2676 = vmatpush1.bf16.msra.mxu0 %v865
    %2677 = vmatprep.subr.bf16.mxu0 %v874
    %2678 = vmatpush1.bf16.msra.mxu0 %v873
    %2679 = vmatprep.subr.bf16.mxu0 %v882
    %2680 = vmatpush1.bf16.msra.mxu0 %v881
    %2681 = vmatprep.subr.bf16.mxu0 %v890
    %2682 = vmatpush1.bf16.msra.mxu0 %v889
    %2683 = vmatprep.subr.bf16.mxu0 %v898
    %2684 = vmatpush1.bf16.msra.mxu0 %v897
    %2685 = vmatprep.subr.bf16.mxu0 %v906
    %2686 = vmatpush1.bf16.msra.mxu0 %v905
    %2687 = vmatprep.mubr.bf16.mxu0 %v2531
    %2688 = vmatmul.mubr.bf16.gmra.mrb[0].mxu0 %v2530
    %v2689 = vpop.f32.mrb[0].mxu0
    %v2690 = vadd.f32 0.0, %v2689
    %v2691 = vpop.f32.mrb[0].mxu0
    %v2692 = vadd.f32 0.0, %v2691
    %v2693 = vpop.f32.mrb[0].mxu0
    %v2694 = vpop.f32.mrb[0].mxu0
    %2695 = vdwg.mxu0
    %v2696 = vadd.f32 %v2649, %v1203
    %v2697 = vadd.f32 %v2651, %v1207
    %v2698 = vadd.f32 %v2690, %v1211
    %v2699 = vadd.f32 %v2692, %v1215
    %v2700 = vxor.u32 %v2696, 2147483648
    %v2701 = vmul.f32 %v2700, 1.442695
    %v2702 = vpow.pop %v2701
    %v2703 = vadd.f32 %v2702, 1.0
    %v2704 = vrcp.pop %v2703
    %v2705 = vmul.f32 1.0, %v2704
    %v2706 = vxor.u32 %v2697, 2147483648
    %v2707 = vmul.f32 %v2706, 1.442695
    %v2708 = vpow.pop %v2707
    %v2709 = vadd.f32 %v2708, 1.0
    %v2710 = vrcp.pop %v2709
    %v2711 = vmul.f32 1.0, %v2710
    %v2712 = vtanh.pop %v2698
    %v2713 = vxor.u32 %v2699, 2147483648
    %v2714 = vmul.f32 %v2713, 1.442695
    %v2715 = vpow.pop %v2714
    %v2716 = vadd.f32 %v2715, 1.0
    %v2717 = vrcp.pop %v2716
    %v2718 = vmul.f32 1.0, %v2717
    %v2719 = vmul.f32 %v2711, %v2352
    %v2720 = vmul.f32 %v2705, %v2712
    %v2721 = vadd.f32 %v2719, %v2720
    %v2722 = vtanh.pop %v2721
    %v2723 = vmul.f32 %v2718, %v2722
    %s2724 = scalar_lea.vmem %s0, 40
    %v2725 = vld [vmem:[%s2724] sm:$0xff]
    %v2727 = vsel %vm95, %v2725, 0
    %2729 = vmatprep.subr.mxu0 %v62
    %2730 = vmatpush1.msra.mxu0 %v61
    %2731 = vmatprep.subr.mxu0 %v66
    %2732 = vmatpush1.msra.mxu0 %v65
    %2733 = vmatprep.subr.mxu0 0.0
    %2734 = vmatpush1.msra.mxu0 0.0
    %2735 = vmatprep.subr.mxu0 0.0
    %2736 = vmatpush1.msra.mxu0 0.0
    %2737 = vmatprep.subr.mxu0 0.0
    %2738 = vmatpush1.msra.mxu0 0.0
    %2739 = vmatprep.subr.mxu0 0.0
    %2740 = vmatpush1.msra.mxu0 0.0
    %2741 = vmatprep.subr.mxu0 0.0
    %2742 = vmatpush1.msra.mxu0 0.0
    %2743 = vmatprep.subr.mxu0 0.0
    %2744 = vmatpush1.msra.mxu0 0.0
    %2745 = vmatprep.subr.mxu0 0.0
    %2746 = vmatpush1.msra.mxu0 0.0
    %2747 = vmatprep.subr.mxu0 0.0
    %2748 = vmatpush1.msra.mxu0 0.0
    %2749 = vmatprep.subr.mxu0 0.0
    %2750 = vmatpush1.msra.mxu0 0.0
    %2751 = vmatprep.subr.mxu0 0.0
    %2752 = vmatpush1.msra.mxu0 0.0
    %2753 = vmatprep.subr.mxu0 0.0
    %2754 = vmatpush1.msra.mxu0 0.0
    %2755 = vmatprep.subr.mxu0 0.0
    %2756 = vmatpush1.msra.mxu0 0.0
    %2757 = vmatprep.subr.mxu0 0.0
    %2758 = vmatpush1.msra.mxu0 0.0
    %2759 = vmatprep.subr.mxu0 0.0
    %2760 = vmatpush1.msra.mxu0 0.0
    %2761 = vmatprep.subr.mxu0 0.0
    %2762 = vmatpush1.msra.mxu0 0.0
    %2763 = vmatprep.subr.mxu0 0.0
    %2764 = vmatpush1.msra.mxu0 0.0
    %2765 = vmatprep.subr.mxu0 0.0
    %2766 = vmatpush1.msra.mxu0 0.0
    %2767 = vmatprep.subr.mxu0 0.0
    %2768 = vmatpush1.msra.mxu0 0.0
    %2769 = vmatprep.subr.mxu0 0.0
    %2770 = vmatpush1.msra.mxu0 0.0
    %2771 = vmatprep.subr.mxu0 0.0
    %2772 = vmatpush1.msra.mxu0 0.0
    %2773 = vmatprep.subr.mxu0 0.0
    %2774 = vmatpush1.msra.mxu0 0.0
    %2775 = vmatprep.subr.mxu0 0.0
    %2776 = vmatpush1.msra.mxu0 0.0
    %2777 = vmatprep.subr.mxu0 0.0
    %2778 = vmatpush1.msra.mxu0 0.0
    %2779 = vmatprep.subr.mxu0 0.0
    %2780 = vmatpush1.msra.mxu0 0.0
    %2781 = vmatprep.subr.mxu0 0.0
    %2782 = vmatpush1.msra.mxu0 0.0
    %2783 = vmatprep.subr.mxu0 0.0
    %2784 = vmatpush1.msra.mxu0 0.0
    %2785 = vmatprep.subr.mxu0 0.0
    %2786 = vmatpush1.msra.mxu0 0.0
    %2787 = vmatprep.subr.mxu0 0.0
    %2788 = vmatpush1.msra.mxu0 0.0
    %2789 = vmatprep.subr.mxu0 0.0
    %2790 = vmatpush1.msra.mxu0 0.0
    %2791 = vmatprep.subr.mxu0 0.0
    %2792 = vmatpush1.msra.mxu0 0.0
    %2793 = vmatprep.mubr.f32.mxu0 0.0
    %2794 = vmatmul.mubr.f32.gmra.mrb[0].mxu0 %v2727
    %v2795 = vpop.f32.mrb[0].mxu0
    %v2796 = vadd.f32 %v78, %v2795
    %v2797 = vpop.f32.mrb[0].mxu0
    %v2798 = vadd.f32 %v82, %v2797
    %2799 = vdwg.mxu0
    %2800 = vmatprep.subr.mxu0 %v64
    %2801 = vmatpush1.msra.mxu0 %v63
    %2802 = vmatprep.subr.mxu0 %v68
    %2803 = vmatpush1.msra.mxu0 %v67
    %2804 = vmatprep.subr.mxu0 0.0
    %2805 = vmatpush1.msra.mxu0 0.0
    %2806 = vmatprep.subr.mxu0 0.0
    %2807 = vmatpush1.msra.mxu0 0.0
    %2808 = vmatprep.subr.mxu0 0.0
    %2809 = vmatpush1.msra.mxu0 0.0
    %2810 = vmatprep.subr.mxu0 0.0
    %2811 = vmatpush1.msra.mxu0 0.0
    %2812 = vmatprep.subr.mxu0 0.0
    %2813 = vmatpush1.msra.mxu0 0.0
    %2814 = vmatprep.subr.mxu0 0.0
    %2815 = vmatpush1.msra.mxu0 0.0
    %2816 = vmatprep.subr.mxu0 0.0
    %2817 = vmatpush1.msra.mxu0 0.0
    %2818 = vmatprep.subr.mxu0 0.0
    %2819 = vmatpush1.msra.mxu0 0.0
    %2820 = vmatprep.subr.mxu0 0.0
    %2821 = vmatpush1.msra.mxu0 0.0
    %2822 = vmatprep.subr.mxu0 0.0
    %2823 = vmatpush1.msra.mxu0 0.0
    %2824 = vmatprep.subr.mxu0 0.0
    %2825 = vmatpush1.msra.mxu0 0.0
    %2826 = vmatprep.subr.mxu0 0.0
    %2827 = vmatpush1.msra.mxu0 0.0
    %2828 = vmatprep.subr.mxu0 0.0
    %2829 = vmatpush1.msra.mxu0 0.0
    %2830 = vmatprep.subr.mxu0 0.0
    %2831 = vmatpush1.msra.mxu0 0.0
    %2832 = vmatprep.subr.mxu0 0.0
    %2833 = vmatpush1.msra.mxu0 0.0
    %2834 = vmatprep.subr.mxu0 0.0
    %2835 = vmatpush1.msra.mxu0 0.0
    %2836 = vmatprep.subr.mxu0 0.0
    %2837 = vmatpush1.msra.mxu0 0.0
    %2838 = vmatprep.subr.mxu0 0.0
    %2839 = vmatpush1.msra.mxu0 0.0
    %2840 = vmatprep.subr.mxu0 0.0
    %2841 = vmatpush1.msra.mxu0 0.0
    %2842 = vmatprep.subr.mxu0 0.0
    %2843 = vmatpush1.msra.mxu0 0.0
    %2844 = vmatprep.subr.mxu0 0.0
    %2845 = vmatpush1.msra.mxu0 0.0
    %2846 = vmatprep.subr.mxu0 0.0
    %2847 = vmatpush1.msra.mxu0 0.0
    %2848 = vmatprep.subr.mxu0 0.0
    %2849 = vmatpush1.msra.mxu0 0.0
    %2850 = vmatprep.subr.mxu0 0.0
    %2851 = vmatpush1.msra.mxu0 0.0
    %2852 = vmatprep.subr.mxu0 0.0
    %2853 = vmatpush1.msra.mxu0 0.0
    %2854 = vmatprep.subr.mxu0 0.0
    %2855 = vmatpush1.msra.mxu0 0.0
    %2856 = vmatprep.subr.mxu0 0.0
    %2857 = vmatpush1.msra.mxu0 0.0
    %2858 = vmatprep.subr.mxu0 0.0
    %2859 = vmatpush1.msra.mxu0 0.0
    %2860 = vmatprep.subr.mxu0 0.0
    %2861 = vmatpush1.msra.mxu0 0.0
    %2862 = vmatprep.subr.mxu0 0.0
    %2863 = vmatpush1.msra.mxu0 0.0
    %2864 = vmatprep.mubr.f32.mxu0 0.0
    %2865 = vmatmul.mubr.f32.gmra.mrb[0].mxu0 %v2727
    %v2866 = vpop.f32.mrb[0].mxu0
    %v2867 = vadd.f32 %v86, %v2866
    %v2868 = vpop.f32.mrb[0].mxu0
    %v2869 = vadd.f32 %v90, %v2868
    %2870 = vdwg.mxu0
    %v2871 = vadd.f32 %v2796, %v2567
    %v2872 = vadd.f32 %v2798, %v2569
    %v2873 = vadd.f32 %v2867, %v2608
    %v2874 = vadd.f32 %v2869, %v2610
    %v2875 = vxor.u32 %v2871, 2147483648
    %v2876 = vmul.f32 %v2875, 1.442695
    %v2877 = vpow.pop %v2876
    %v2878 = vadd.f32 %v2877, 1.0
    %v2879 = vrcp.pop %v2878
    %v2880 = vmul.f32 1.0, %v2879
    %v2881 = vxor.u32 %v2872, 2147483648
    %v2882 = vmul.f32 %v2881, 1.442695
    %v2883 = vpow.pop %v2882
    %v2884 = vadd.f32 %v2883, 1.0
    %v2885 = vrcp.pop %v2884
    %v2886 = vmul.f32 1.0, %v2885
    %v2887 = vtanh.pop %v2873
    %v2888 = vxor.u32 %v2874, 2147483648
    %v2889 = vmul.f32 %v2888, 1.442695
    %v2890 = vpow.pop %v2889
    %v2891 = vadd.f32 %v2890, 1.0
    %v2892 = vrcp.pop %v2891
    %v2893 = vmul.f32 1.0, %v2892
    %v2894 = vmul.f32 %v2886, %v2527
    %v2895 = vmul.f32 %v2880, %v2887
    %v2896 = vadd.f32 %v2894, %v2895
    %v2897 = vtanh.pop %v2896
    %v2898 = vmul.f32 %v2893, %v2897
    %v2899 = vpack.c.bf16 %v2898, %v2898
    %v2900 = vpack.c.bf16 %v2723, %v2723
    %2901 = vmatprep.subr.bf16.mxu0 %v780
    %2902 = vmatpush1.bf16.msra.mxu0 %v779
    %2903 = vmatprep.subr.bf16.mxu0 %v788
    %2904 = vmatpush1.bf16.msra.mxu0 %v787
    %2905 = vmatprep.subr.bf16.mxu0 %v796
    %2906 = vmatpush1.bf16.msra.mxu0 %v795
    %2907 = vmatprep.subr.bf16.mxu0 %v804
    %2908 = vmatpush1.bf16.msra.mxu0 %v803
    %2909 = vmatprep.subr.bf16.mxu0 %v812
    %2910 = vmatpush1.bf16.msra.mxu0 %v811
    %2911 = vmatprep.subr.bf16.mxu0 %v820
    %2912 = vmatpush1.bf16.msra.mxu0 %v819
    %2913 = vmatprep.subr.bf16.mxu0 %v828
    %2914 = vmatpush1.bf16.msra.mxu0 %v827
    %2915 = vmatprep.subr.bf16.mxu0 %v836
    %2916 = vmatpush1.bf16.msra.mxu0 %v835
    %2917 = vmatprep.subr.bf16.mxu0 %v844
    %2918 = vmatpush1.bf16.msra.mxu0 %v843
    %2919 = vmatprep.subr.bf16.mxu0 %v852
    %2920 = vmatpush1.bf16.msra.mxu0 %v851
    %2921 = vmatprep.subr.bf16.mxu0 %v860
    %2922 = vmatpush1.bf16.msra.mxu0 %v859
    %2923 = vmatprep.subr.bf16.mxu0 %v868
    %2924 = vmatpush1.bf16.msra.mxu0 %v867
    %2925 = vmatprep.subr.bf16.mxu0 %v876
    %2926 = vmatpush1.bf16.msra.mxu0 %v875
    %2927 = vmatprep.subr.bf16.mxu0 %v884
    %2928 = vmatpush1.bf16.msra.mxu0 %v883
    %2929 = vmatprep.subr.bf16.mxu0 %v892
    %2930 = vmatpush1.bf16.msra.mxu0 %v891
    %2931 = vmatprep.subr.bf16.mxu0 %v900
    %2932 = vmatpush1.bf16.msra.mxu0 %v899
    %2933 = vmatprep.mubr.bf16.mxu0 %v2900
    %2934 = vmatmul.mubr.bf16.gmra.mrb[0].mxu0 %v2899
    %v2935 = vpop.f32.mrb[0].mxu0
    %v2936 = vadd.f32 0.0, %v2935
    %v2937 = vpop.f32.mrb[0].mxu0
    %v2938 = vadd.f32 0.0, %v2937
    %v2939 = vpop.f32.mrb[0].mxu0
    %v2940 = vpop.f32.mrb[0].mxu0
    %2941 = vdwg.mxu0
    %2942 = vmatprep.subr.bf16.mxu0 %v782
    %2943 = vmatpush1.bf16.msra.mxu0 %v781
    %2944 = vmatprep.subr.bf16.mxu0 %v790
    %2945 = vmatpush1.bf16.msra.mxu0 %v789
    %2946 = vmatprep.subr.bf16.mxu0 %v798
    %2947 = vmatpush1.bf16.msra.mxu0 %v797
    %2948 = vmatprep.subr.bf16.mxu0 %v806
    %2949 = vmatpush1.bf16.msra.mxu0 %v805
    %2950 = vmatprep.subr.bf16.mxu0 %v814
    %2951 = vmatpush1.bf16.msra.mxu0 %v813
    %2952 = vmatprep.subr.bf16.mxu0 %v822
    %2953 = vmatpush1.bf16.msra.mxu0 %v821
    %2954 = vmatprep.subr.bf16.mxu0 %v830
    %2955 = vmatpush1.bf16.msra.mxu0 %v829
    %2956 = vmatprep.subr.bf16.mxu0 %v838
    %2957 = vmatpush1.bf16.msra.mxu0 %v837
    %2958 = vmatprep.subr.bf16.mxu0 %v846
    %2959 = vmatpush1.bf16.msra.mxu0 %v845
    %2960 = vmatprep.subr.bf16.mxu0 %v854
    %2961 = vmatpush1.bf16.msra.mxu0 %v853
    %2962 = vmatprep.subr.bf16.mxu0 %v862
    %2963 = vmatpush1.bf16.msra.mxu0 %v861
    %2964 = vmatprep.subr.bf16.mxu0 %v870
    %2965 = vmatpush1.bf16.msra.mxu0 %v869
    %2966 = vmatprep.subr.bf16.mxu0 %v878
    %2967 = vmatpush1.bf16.msra.mxu0 %v877
    %2968 = vmatprep.subr.bf16.mxu0 %v886
    %2969 = vmatpush1.bf16.msra.mxu0 %v885
    %2970 = vmatprep.subr.bf16.mxu0 %v894
    %2971 = vmatpush1.bf16.msra.mxu0 %v893
    %2972 = vmatprep.subr.bf16.mxu0 %v902
    %2973 = vmatpush1.bf16.msra.mxu0 %v901
    %2974 = vmatprep.mubr.bf16.mxu0 %v2900
    %2975 = vmatmul.mubr.bf16.gmra.mrb[0].mxu0 %v2899
    %v2976 = vpop.f32.mrb[0].mxu0
    %v2977 = vadd.f32 0.0, %v2976
    %v2978 = vpop.f32.mrb[0].mxu0
    %v2979 = vadd.f32 0.0, %v2978
    %v2980 = vpop.f32.mrb[0].mxu0
    %v2981 = vpop.f32.mrb[0].mxu0
    %2982 = vdwg.mxu0
    %2983 = vmatprep.subr.bf16.mxu0 %v784
    %2984 = vmatpush1.bf16.msra.mxu0 %v783
    %2985 = vmatprep.subr.bf16.mxu0 %v792
    %2986 = vmatpush1.bf16.msra.mxu0 %v791
    %2987 = vmatprep.subr.bf16.mxu0 %v800
    %2988 = vmatpush1.bf16.msra.mxu0 %v799
    %2989 = vmatprep.subr.bf16.mxu0 %v808
    %2990 = vmatpush1.bf16.msra.mxu0 %v807
    %2991 = vmatprep.subr.bf16.mxu0 %v816
    %2992 = vmatpush1.bf16.msra.mxu0 %v815
    %2993 = vmatprep.subr.bf16.mxu0 %v824
    %2994 = vmatpush1.bf16.msra.mxu0 %v823
    %2995 = vmatprep.subr.bf16.mxu0 %v832
    %2996 = vmatpush1.bf16.msra.mxu0 %v831
    %2997 = vmatprep.subr.bf16.mxu0 %v840
    %2998 = vmatpush1.bf16.msra.mxu0 %v839
    %2999 = vmatprep.subr.bf16.mxu0 %v848
    %3000 = vmatpush1.bf16.msra.mxu0 %v847
    %3001 = vmatprep.subr.bf16.mxu0 %v856
    %3002 = vmatpush1.bf16.msra.mxu0 %v855
    %3003 = vmatprep.subr.bf16.mxu0 %v864
    %3004 = vmatpush1.bf16.msra.mxu0 %v863
    %3005 = vmatprep.subr.bf16.mxu0 %v872
    %3006 = vmatpush1.bf16.msra.mxu0 %v871
    %3007 = vmatprep.subr.bf16.mxu0 %v880
    %3008 = vmatpush1.bf16.msra.mxu0 %v879
    %3009 = vmatprep.subr.bf16.mxu0 %v888
    %3010 = vmatpush1.bf16.msra.mxu0 %v887
    %3011 = vmatprep.subr.bf16.mxu0 %v896
    %3012 = vmatpush1.bf16.msra.mxu0 %v895
    %3013 = vmatprep.subr.bf16.mxu0 %v904
    %3014 = vmatpush1.bf16.msra.mxu0 %v903
    %3015 = vmatprep.mubr.bf16.mxu0 %v2900
    %3016 = vmatmul.mubr.bf16.gmra.mrb[0].mxu0 %v2899
    %v3017 = vpop.f32.mrb[0].mxu0
    %v3018 = vadd.f32 0.0, %v3017
    %v3019 = vpop.f32.mrb[0].mxu0
    %v3020 = vadd.f32 0.0, %v3019
    %v3021 = vpop.f32.mrb[0].mxu0
    %v3022 = vpop.f32.mrb[0].mxu0
    %3023 = vdwg.mxu0
    %3024 = vmatprep.subr.bf16.mxu0 %v786
    %3025 = vmatpush1.bf16.msra.mxu0 %v785
    %3026 = vmatprep.subr.bf16.mxu0 %v794
    %3027 = vmatpush1.bf16.msra.mxu0 %v793
    %3028 = vmatprep.subr.bf16.mxu0 %v802
    %3029 = vmatpush1.bf16.msra.mxu0 %v801
    %3030 = vmatprep.subr.bf16.mxu0 %v810
    %3031 = vmatpush1.bf16.msra.mxu0 %v809
    %3032 = vmatprep.subr.bf16.mxu0 %v818
    %3033 = vmatpush1.bf16.msra.mxu0 %v817
    %3034 = vmatprep.subr.bf16.mxu0 %v826
    %3035 = vmatpush1.bf16.msra.mxu0 %v825
    %3036 = vmatprep.subr.bf16.mxu0 %v834
    %3037 = vmatpush1.bf16.msra.mxu0 %v833
    %3038 = vmatprep.subr.bf16.mxu0 %v842
    %3039 = vmatpush1.bf16.msra.mxu0 %v841
    %3040 = vmatprep.subr.bf16.mxu0 %v850
    %3041 = vmatpush1.bf16.msra.mxu0 %v849
    %3042 = vmatprep.subr.bf16.mxu0 %v858
    %3043 = vmatpush1.bf16.msra.mxu0 %v857
    %3044 = vmatprep.subr.bf16.mxu0 %v866
    %3045 = vmatpush1.bf16.msra.mxu0 %v865
    %3046 = vmatprep.subr.bf16.mxu0 %v874
    %3047 = vmatpush1.bf16.msra.mxu0 %v873
    %3048 = vmatprep.subr.bf16.mxu0 %v882
    %3049 = vmatpush1.bf16.msra.mxu0 %v881
    %3050 = vmatprep.subr.bf16.mxu0 %v890
    %3051 = vmatpush1.bf16.msra.mxu0 %v889
    %3052 = vmatprep.subr.bf16.mxu0 %v898
    %3053 = vmatpush1.bf16.msra.mxu0 %v897
    %3054 = vmatprep.subr.bf16.mxu0 %v906
    %3055 = vmatpush1.bf16.msra.mxu0 %v905
    %3056 = vmatprep.mubr.bf16.mxu0 %v2900
    %3057 = vmatmul.mubr.bf16.gmra.mrb[0].mxu0 %v2899
    %v3058 = vpop.f32.mrb[0].mxu0
    %v3059 = vadd.f32 0.0, %v3058
    %v3060 = vpop.f32.mrb[0].mxu0
    %v3061 = vadd.f32 0.0, %v3060
    %v3062 = vpop.f32.mrb[0].mxu0
    %v3063 = vpop.f32.mrb[0].mxu0
    %3064 = vdwg.mxu0
    %v3065 = vadd.f32 %v3018, %v1203
    %v3066 = vadd.f32 %v3020, %v1207
    %v3067 = vadd.f32 %v3059, %v1211
    %v3068 = vadd.f32 %v3061, %v1215
    %v3069 = vxor.u32 %v3065, 2147483648
    %v3070 = vmul.f32 %v3069, 1.442695
    %v3071 = vpow.pop %v3070
    %v3072 = vadd.f32 %v3071, 1.0
    %v3073 = vrcp.pop %v3072
    %v3074 = vmul.f32 1.0, %v3073
    %v3075 = vxor.u32 %v3066, 2147483648
    %v3076 = vmul.f32 %v3075, 1.442695
    %v3077 = vpow.pop %v3076
    %v3078 = vadd.f32 %v3077, 1.0
    %v3079 = vrcp.pop %v3078
    %v3080 = vmul.f32 1.0, %v3079
    %v3081 = vtanh.pop %v3067
    %v3082 = vxor.u32 %v3068, 2147483648
    %v3083 = vmul.f32 %v3082, 1.442695
    %v3084 = vpow.pop %v3083
    %v3085 = vadd.f32 %v3084, 1.0
    %v3086 = vrcp.pop %v3085
    %v3087 = vmul.f32 1.0, %v3086
    %v3088 = vmul.f32 %v3080, %v2721
    %v3089 = vmul.f32 %v3074, %v3081
    %v3090 = vadd.f32 %v3088, %v3089
    %v3091 = vtanh.pop %v3090
    %v3092 = vmul.f32 %v3087, %v3091
    %s3093 = scalar_lea.vmem %s0, 48
    %v3094 = vld [vmem:[%s3093] sm:$0xff]
    %v3096 = vsel %vm95, %v3094, 0
    %3098 = vmatprep.subr.mxu0 %v62
    %3099 = vmatpush1.msra.mxu0 %v61
    %3100 = vmatprep.subr.mxu0 %v66
    %3101 = vmatpush1.msra.mxu0 %v65
    %3102 = vmatprep.subr.mxu0 0.0
    %3103 = vmatpush1.msra.mxu0 0.0
    %3104 = vmatprep.subr.mxu0 0.0
    %3105 = vmatpush1.msra.mxu0 0.0
    %3106 = vmatprep.subr.mxu0 0.0
    %3107 = vmatpush1.msra.mxu0 0.0
    %3108 = vmatprep.subr.mxu0 0.0
    %3109 = vmatpush1.msra.mxu0 0.0
    %3110 = vmatprep.subr.mxu0 0.0
    %3111 = vmatpush1.msra.mxu0 0.0
    %3112 = vmatprep.subr.mxu0 0.0
    %3113 = vmatpush1.msra.mxu0 0.0
    %3114 = vmatprep.subr.mxu0 0.0
    %3115 = vmatpush1.msra.mxu0 0.0
    %3116 = vmatprep.subr.mxu0 0.0
    %3117 = vmatpush1.msra.mxu0 0.0
    %3118 = vmatprep.subr.mxu0 0.0
    %3119 = vmatpush1.msra.mxu0 0.0
    %3120 = vmatprep.subr.mxu0 0.0
    %3121 = vmatpush1.msra.mxu0 0.0
    %3122 = vmatprep.subr.mxu0 0.0
    %3123 = vmatpush1.msra.mxu0 0.0
    %3124 = vmatprep.subr.mxu0 0.0
    %3125 = vmatpush1.msra.mxu0 0.0
    %3126 = vmatprep.subr.mxu0 0.0
    %3127 = vmatpush1.msra.mxu0 0.0
    %3128 = vmatprep.subr.mxu0 0.0
    %3129 = vmatpush1.msra.mxu0 0.0
    %3130 = vmatprep.subr.mxu0 0.0
    %3131 = vmatpush1.msra.mxu0 0.0
    %3132 = vmatprep.subr.mxu0 0.0
    %3133 = vmatpush1.msra.mxu0 0.0
    %3134 = vmatprep.subr.mxu0 0.0
    %3135 = vmatpush1.msra.mxu0 0.0
    %3136 = vmatprep.subr.mxu0 0.0
    %3137 = vmatpush1.msra.mxu0 0.0
    %3138 = vmatprep.subr.mxu0 0.0
    %3139 = vmatpush1.msra.mxu0 0.0
    %3140 = vmatprep.subr.mxu0 0.0
    %3141 = vmatpush1.msra.mxu0 0.0
    %3142 = vmatprep.subr.mxu0 0.0
    %3143 = vmatpush1.msra.mxu0 0.0
    %3144 = vmatprep.subr.mxu0 0.0
    %3145 = vmatpush1.msra.mxu0 0.0
    %3146 = vmatprep.subr.mxu0 0.0
    %3147 = vmatpush1.msra.mxu0 0.0
    %3148 = vmatprep.subr.mxu0 0.0
    %3149 = vmatpush1.msra.mxu0 0.0
    %3150 = vmatprep.subr.mxu0 0.0
    %3151 = vmatpush1.msra.mxu0 0.0
    %3152 = vmatprep.subr.mxu0 0.0
    %3153 = vmatpush1.msra.mxu0 0.0
    %3154 = vmatprep.subr.mxu0 0.0
    %3155 = vmatpush1.msra.mxu0 0.0
    %3156 = vmatprep.subr.mxu0 0.0
    %3157 = vmatpush1.msra.mxu0 0.0
    %3158 = vmatprep.subr.mxu0 0.0
    %3159 = vmatpush1.msra.mxu0 0.0
    %3160 = vmatprep.subr.mxu0 0.0
    %3161 = vmatpush1.msra.mxu0 0.0
    %3162 = vmatprep.mubr.f32.mxu0 0.0
    %3163 = vmatmul.mubr.f32.gmra.mrb[0].mxu0 %v3096
    %v3164 = vpop.f32.mrb[0].mxu0
    %v3165 = vadd.f32 %v78, %v3164
    %v3166 = vpop.f32.mrb[0].mxu0
    %v3167 = vadd.f32 %v82, %v3166
    %3168 = vdwg.mxu0
    %3169 = vmatprep.subr.mxu0 %v64
    %3170 = vmatpush1.msra.mxu0 %v63
    %3171 = vmatprep.subr.mxu0 %v68
    %3172 = vmatpush1.msra.mxu0 %v67
    %3173 = vmatprep.subr.mxu0 0.0
    %3174 = vmatpush1.msra.mxu0 0.0
    %3175 = vmatprep.subr.mxu0 0.0
    %3176 = vmatpush1.msra.mxu0 0.0
    %3177 = vmatprep.subr.mxu0 0.0
    %3178 = vmatpush1.msra.mxu0 0.0
    %3179 = vmatprep.subr.mxu0 0.0
    %3180 = vmatpush1.msra.mxu0 0.0
    %3181 = vmatprep.subr.mxu0 0.0
    %3182 = vmatpush1.msra.mxu0 0.0
    %3183 = vmatprep.subr.mxu0 0.0
    %3184 = vmatpush1.msra.mxu0 0.0
    %3185 = vmatprep.subr.mxu0 0.0
    %3186 = vmatpush1.msra.mxu0 0.0
    %3187 = vmatprep.subr.mxu0 0.0
    %3188 = vmatpush1.msra.mxu0 0.0
    %3189 = vmatprep.subr.mxu0 0.0
    %3190 = vmatpush1.msra.mxu0 0.0
    %3191 = vmatprep.subr.mxu0 0.0
    %3192 = vmatpush1.msra.mxu0 0.0
    %3193 = vmatprep.subr.mxu0 0.0
    %3194 = vmatpush1.msra.mxu0 0.0
    %3195 = vmatprep.subr.mxu0 0.0
    %3196 = vmatpush1.msra.mxu0 0.0
    %3197 = vmatprep.subr.mxu0 0.0
    %3198 = vmatpush1.msra.mxu0 0.0
    %3199 = vmatprep.subr.mxu0 0.0
    %3200 = vmatpush1.msra.mxu0 0.0
    %3201 = vmatprep.subr.mxu0 0.0
    %3202 = vmatpush1.msra.mxu0 0.0
    %3203 = vmatprep.subr.mxu0 0.0
    %3204 = vmatpush1.msra.mxu0 0.0
    %3205 = vmatprep.subr.mxu0 0.0
    %3206 = vmatpush1.msra.mxu0 0.0
    %3207 = vmatprep.subr.mxu0 0.0
    %3208 = vmatpush1.msra.mxu0 0.0
    %3209 = vmatprep.subr.mxu0 0.0
    %3210 = vmatpush1.msra.mxu0 0.0
    %3211 = vmatprep.subr.mxu0 0.0
    %3212 = vmatpush1.msra.mxu0 0.0
    %3213 = vmatprep.subr.mxu0 0.0
    %3214 = vmatpush1.msra.mxu0 0.0
    %3215 = vmatprep.subr.mxu0 0.0
    %3216 = vmatpush1.msra.mxu0 0.0
    %3217 = vmatprep.subr.mxu0 0.0
    %3218 = vmatpush1.msra.mxu0 0.0
    %3219 = vmatprep.subr.mxu0 0.0
    %3220 = vmatpush1.msra.mxu0 0.0
    %3221 = vmatprep.subr.mxu0 0.0
    %3222 = vmatpush1.msra.mxu0 0.0
    %3223 = vmatprep.subr.mxu0 0.0
    %3224 = vmatpush1.msra.mxu0 0.0
    %3225 = vmatprep.subr.mxu0 0.0
    %3226 = vmatpush1.msra.mxu0 0.0
    %3227 = vmatprep.subr.mxu0 0.0
    %3228 = vmatpush1.msra.mxu0 0.0
    %3229 = vmatprep.subr.mxu0 0.0
    %3230 = vmatpush1.msra.mxu0 0.0
    %3231 = vmatprep.subr.mxu0 0.0
    %3232 = vmatpush1.msra.mxu0 0.0
    %3233 = vmatprep.mubr.f32.mxu0 0.0
    %3234 = vmatmul.mubr.f32.gmra.mrb[0].mxu0 %v3096
    %v3235 = vpop.f32.mrb[0].mxu0
    %v3236 = vadd.f32 %v86, %v3235
    %v3237 = vpop.f32.mrb[0].mxu0
    %v3238 = vadd.f32 %v90, %v3237
    %3239 = vdwg.mxu0
    %v3240 = vadd.f32 %v3165, %v2936
    %v3241 = vadd.f32 %v3167, %v2938
    %v3242 = vadd.f32 %v3236, %v2977
    %v3243 = vadd.f32 %v3238, %v2979
    %v3244 = vxor.u32 %v3240, 2147483648
    %v3245 = vmul.f32 %v3244, 1.442695
    %v3246 = vpow.pop %v3245
    %v3247 = vadd.f32 %v3246, 1.0
    %v3248 = vrcp.pop %v3247
    %v3249 = vmul.f32 1.0, %v3248
    %v3250 = vxor.u32 %v3241, 2147483648
    %v3251 = vmul.f32 %v3250, 1.442695
    %v3252 = vpow.pop %v3251
    %v3253 = vadd.f32 %v3252, 1.0
    %v3254 = vrcp.pop %v3253
    %v3255 = vmul.f32 1.0, %v3254
    %v3256 = vtanh.pop %v3242
    %v3257 = vxor.u32 %v3243, 2147483648
    %v3258 = vmul.f32 %v3257, 1.442695
    %v3259 = vpow.pop %v3258
    %v3260 = vadd.f32 %v3259, 1.0
    %v3261 = vrcp.pop %v3260
    %v3262 = vmul.f32 1.0, %v3261
    %v3263 = vmul.f32 %v3255, %v2896
    %v3264 = vmul.f32 %v3249, %v3256
    %v3265 = vadd.f32 %v3263, %v3264
    %v3266 = vtanh.pop %v3265
    %v3267 = vmul.f32 %v3262, %v3266
    %v3268 = vpack.c.bf16 %v3267, %v3267
    %v3269 = vpack.c.bf16 %v3092, %v3092
    %3270 = vmatprep.subr.bf16.mxu0 %v780
    %3271 = vmatpush1.bf16.msra.mxu0 %v779
    %3272 = vmatprep.subr.bf16.mxu0 %v788
    %3273 = vmatpush1.bf16.msra.mxu0 %v787
    %3274 = vmatprep.subr.bf16.mxu0 %v796
    %3275 = vmatpush1.bf16.msra.mxu0 %v795
    %3276 = vmatprep.subr.bf16.mxu0 %v804
    %3277 = vmatpush1.bf16.msra.mxu0 %v803
    %3278 = vmatprep.subr.bf16.mxu0 %v812
    %3279 = vmatpush1.bf16.msra.mxu0 %v811
    %3280 = vmatprep.subr.bf16.mxu0 %v820
    %3281 = vmatpush1.bf16.msra.mxu0 %v819
    %3282 = vmatprep.subr.bf16.mxu0 %v828
    %3283 = vmatpush1.bf16.msra.mxu0 %v827
    %3284 = vmatprep.subr.bf16.mxu0 %v836
    %3285 = vmatpush1.bf16.msra.mxu0 %v835
    %3286 = vmatprep.subr.bf16.mxu0 %v844
    %3287 = vmatpush1.bf16.msra.mxu0 %v843
    %3288 = vmatprep.subr.bf16.mxu0 %v852
    %3289 = vmatpush1.bf16.msra.mxu0 %v851
    %3290 = vmatprep.subr.bf16.mxu0 %v860
    %3291 = vmatpush1.bf16.msra.mxu0 %v859
    %3292 = vmatprep.subr.bf16.mxu0 %v868
    %3293 = vmatpush1.bf16.msra.mxu0 %v867
    %3294 = vmatprep.subr.bf16.mxu0 %v876
    %3295 = vmatpush1.bf16.msra.mxu0 %v875
    %3296 = vmatprep.subr.bf16.mxu0 %v884
    %3297 = vmatpush1.bf16.msra.mxu0 %v883
    %3298 = vmatprep.subr.bf16.mxu0 %v892
    %3299 = vmatpush1.bf16.msra.mxu0 %v891
    %3300 = vmatprep.subr.bf16.mxu0 %v900
    %3301 = vmatpush1.bf16.msra.mxu0 %v899
    %3302 = vmatprep.mubr.bf16.mxu0 %v3269
    %3303 = vmatmul.mubr.bf16.gmra.mrb[0].mxu0 %v3268
    %v3304 = vpop.f32.mrb[0].mxu0
    %v3305 = vadd.f32 0.0, %v3304
    %v3306 = vpop.f32.mrb[0].mxu0
    %v3307 = vadd.f32 0.0, %v3306
    %v3308 = vpop.f32.mrb[0].mxu0
    %v3309 = vpop.f32.mrb[0].mxu0
    %3310 = vdwg.mxu0
    %3311 = vmatprep.subr.bf16.mxu0 %v782
    %3312 = vmatpush1.bf16.msra.mxu0 %v781
    %3313 = vmatprep.subr.bf16.mxu0 %v790
    %3314 = vmatpush1.bf16.msra.mxu0 %v789
    %3315 = vmatprep.subr.bf16.mxu0 %v798
    %3316 = vmatpush1.bf16.msra.mxu0 %v797
    %3317 = vmatprep.subr.bf16.mxu0 %v806
    %3318 = vmatpush1.bf16.msra.mxu0 %v805
    %3319 = vmatprep.subr.bf16.mxu0 %v814
    %3320 = vmatpush1.bf16.msra.mxu0 %v813
    %3321 = vmatprep.subr.bf16.mxu0 %v822
    %3322 = vmatpush1.bf16.msra.mxu0 %v821
    %3323 = vmatprep.subr.bf16.mxu0 %v830
    %3324 = vmatpush1.bf16.msra.mxu0 %v829
    %3325 = vmatprep.subr.bf16.mxu0 %v838
    %3326 = vmatpush1.bf16.msra.mxu0 %v837
    %3327 = vmatprep.subr.bf16.mxu0 %v846
    %3328 = vmatpush1.bf16.msra.mxu0 %v845
    %3329 = vmatprep.subr.bf16.mxu0 %v854
    %3330 = vmatpush1.bf16.msra.mxu0 %v853
    %3331 = vmatprep.subr.bf16.mxu0 %v862
    %3332 = vmatpush1.bf16.msra.mxu0 %v861
    %3333 = vmatprep.subr.bf16.mxu0 %v870
    %3334 = vmatpush1.bf16.msra.mxu0 %v869
    %3335 = vmatprep.subr.bf16.mxu0 %v878
    %3336 = vmatpush1.bf16.msra.mxu0 %v877
    %3337 = vmatprep.subr.bf16.mxu0 %v886
    %3338 = vmatpush1.bf16.msra.mxu0 %v885
    %3339 = vmatprep.subr.bf16.mxu0 %v894
    %3340 = vmatpush1.bf16.msra.mxu0 %v893
    %3341 = vmatprep.subr.bf16.mxu0 %v902
    %3342 = vmatpush1.bf16.msra.mxu0 %v901
    %3343 = vmatprep.mubr.bf16.mxu0 %v3269
    %3344 = vmatmul.mubr.bf16.gmra.mrb[0].mxu0 %v3268
    %v3345 = vpop.f32.mrb[0].mxu0
    %v3346 = vadd.f32 0.0, %v3345
    %v3347 = vpop.f32.mrb[0].mxu0
    %v3348 = vadd.f32 0.0, %v3347
    %v3349 = vpop.f32.mrb[0].mxu0
    %v3350 = vpop.f32.mrb[0].mxu0
    %3351 = vdwg.mxu0
    %3352 = vmatprep.subr.bf16.mxu0 %v784
    %3353 = vmatpush1.bf16.msra.mxu0 %v783
    %3354 = vmatprep.subr.bf16.mxu0 %v792
    %3355 = vmatpush1.bf16.msra.mxu0 %v791
    %3356 = vmatprep.subr.bf16.mxu0 %v800
    %3357 = vmatpush1.bf16.msra.mxu0 %v799
    %3358 = vmatprep.subr.bf16.mxu0 %v808
    %3359 = vmatpush1.bf16.msra.mxu0 %v807
    %3360 = vmatprep.subr.bf16.mxu0 %v816
    %3361 = vmatpush1.bf16.msra.mxu0 %v815
    %3362 = vmatprep.subr.bf16.mxu0 %v824
    %3363 = vmatpush1.bf16.msra.mxu0 %v823
    %3364 = vmatprep.subr.bf16.mxu0 %v832
    %3365 = vmatpush1.bf16.msra.mxu0 %v831
    %3366 = vmatprep.subr.bf16.mxu0 %v840
    %3367 = vmatpush1.bf16.msra.mxu0 %v839
    %3368 = vmatprep.subr.bf16.mxu0 %v848
    %3369 = vmatpush1.bf16.msra.mxu0 %v847
    %3370 = vmatprep.subr.bf16.mxu0 %v856
    %3371 = vmatpush1.bf16.msra.mxu0 %v855
    %3372 = vmatprep.subr.bf16.mxu0 %v864
    %3373 = vmatpush1.bf16.msra.mxu0 %v863
    %3374 = vmatprep.subr.bf16.mxu0 %v872
    %3375 = vmatpush1.bf16.msra.mxu0 %v871
    %3376 = vmatprep.subr.bf16.mxu0 %v880
    %3377 = vmatpush1.bf16.msra.mxu0 %v879
    %3378 = vmatprep.subr.bf16.mxu0 %v888
    %3379 = vmatpush1.bf16.msra.mxu0 %v887
    %3380 = vmatprep.subr.bf16.mxu0 %v896
    %3381 = vmatpush1.bf16.msra.mxu0 %v895
    %3382 = vmatprep.subr.bf16.mxu0 %v904
    %3383 = vmatpush1.bf16.msra.mxu0 %v903
    %3384 = vmatprep.mubr.bf16.mxu0 %v3269
    %3385 = vmatmul.mubr.bf16.gmra.mrb[0].mxu0 %v3268
    %v3386 = vpop.f32.mrb[0].mxu0
    %v3387 = vadd.f32 0.0, %v3386
    %v3388 = vpop.f32.mrb[0].mxu0
    %v3389 = vadd.f32 0.0, %v3388
    %v3390 = vpop.f32.mrb[0].mxu0
    %v3391 = vpop.f32.mrb[0].mxu0
    %3392 = vdwg.mxu0
    %3393 = vmatprep.subr.bf16.mxu0 %v786
    %3394 = vmatpush1.bf16.msra.mxu0 %v785
    %3395 = vmatprep.subr.bf16.mxu0 %v794
    %3396 = vmatpush1.bf16.msra.mxu0 %v793
    %3397 = vmatprep.subr.bf16.mxu0 %v802
    %3398 = vmatpush1.bf16.msra.mxu0 %v801
    %3399 = vmatprep.subr.bf16.mxu0 %v810
    %3400 = vmatpush1.bf16.msra.mxu0 %v809
    %3401 = vmatprep.subr.bf16.mxu0 %v818
    %3402 = vmatpush1.bf16.msra.mxu0 %v817
    %3403 = vmatprep.subr.bf16.mxu0 %v826
    %3404 = vmatpush1.bf16.msra.mxu0 %v825
    %3405 = vmatprep.subr.bf16.mxu0 %v834
    %3406 = vmatpush1.bf16.msra.mxu0 %v833
    %3407 = vmatprep.subr.bf16.mxu0 %v842
    %3408 = vmatpush1.bf16.msra.mxu0 %v841
    %3409 = vmatprep.subr.bf16.mxu0 %v850
    %3410 = vmatpush1.bf16.msra.mxu0 %v849
    %3411 = vmatprep.subr.bf16.mxu0 %v858
    %3412 = vmatpush1.bf16.msra.mxu0 %v857
    %3413 = vmatprep.subr.bf16.mxu0 %v866
    %3414 = vmatpush1.bf16.msra.mxu0 %v865
    %3415 = vmatprep.subr.bf16.mxu0 %v874
    %3416 = vmatpush1.bf16.msra.mxu0 %v873
    %3417 = vmatprep.subr.bf16.mxu0 %v882
    %3418 = vmatpush1.bf16.msra.mxu0 %v881
    %3419 = vmatprep.subr.bf16.mxu0 %v890
    %3420 = vmatpush1.bf16.msra.mxu0 %v889
    %3421 = vmatprep.subr.bf16.mxu0 %v898
    %3422 = vmatpush1.bf16.msra.mxu0 %v897
    %3423 = vmatprep.subr.bf16.mxu0 %v906
    %3424 = vmatpush1.bf16.msra.mxu0 %v905
    %3425 = vmatprep.mubr.bf16.mxu0 %v3269
    %3426 = vmatmul.mubr.bf16.gmra.mrb[0].mxu0 %v3268
    %v3427 = vpop.f32.mrb[0].mxu0
    %v3428 = vadd.f32 0.0, %v3427
    %v3429 = vpop.f32.mrb[0].mxu0
    %v3430 = vadd.f32 0.0, %v3429
    %v3431 = vpop.f32.mrb[0].mxu0
    %v3432 = vpop.f32.mrb[0].mxu0
    %3433 = vdwg.mxu0
    %v3434 = vadd.f32 %v3387, %v1203
    %v3435 = vadd.f32 %v3389, %v1207
    %v3436 = vadd.f32 %v3428, %v1211
    %v3437 = vadd.f32 %v3430, %v1215
    %v3438 = vxor.u32 %v3434, 2147483648
    %v3439 = vmul.f32 %v3438, 1.442695
    %v3440 = vpow.pop %v3439
    %v3441 = vadd.f32 %v3440, 1.0
    %v3442 = vrcp.pop %v3441
    %v3443 = vmul.f32 1.0, %v3442
    %v3444 = vxor.u32 %v3435, 2147483648
    %v3445 = vmul.f32 %v3444, 1.442695
    %v3446 = vpow.pop %v3445
    %v3447 = vadd.f32 %v3446, 1.0
    %v3448 = vrcp.pop %v3447
    %v3449 = vmul.f32 1.0, %v3448
    %v3450 = vtanh.pop %v3436
    %v3451 = vxor.u32 %v3437, 2147483648
    %v3452 = vmul.f32 %v3451, 1.442695
    %v3453 = vpow.pop %v3452
    %v3454 = vadd.f32 %v3453, 1.0
    %v3455 = vrcp.pop %v3454
    %v3456 = vmul.f32 1.0, %v3455
    %v3457 = vmul.f32 %v3449, %v3090
    %v3458 = vmul.f32 %v3443, %v3450
    %v3459 = vadd.f32 %v3457, %v3458
    %v3460 = vtanh.pop %v3459
    %v3461 = vmul.f32 %v3456, %v3460
    %s3462 = scalar_lea.vmem %s0, 56
    %v3463 = vld [vmem:[%s3462] sm:$0xff]
    %v3465 = vsel %vm95, %v3463, 0
    %3467 = vmatprep.subr.mxu0 %v62
    %3468 = vmatpush1.msra.mxu0 %v61
    %3469 = vmatprep.subr.mxu0 %v66
    %3470 = vmatpush1.msra.mxu0 %v65
    %3471 = vmatprep.subr.mxu0 0.0
    %3472 = vmatpush1.msra.mxu0 0.0
    %3473 = vmatprep.subr.mxu0 0.0
    %3474 = vmatpush1.msra.mxu0 0.0
    %3475 = vmatprep.subr.mxu0 0.0
    %3476 = vmatpush1.msra.mxu0 0.0
    %3477 = vmatprep.subr.mxu0 0.0
    %3478 = vmatpush1.msra.mxu0 0.0
    %3479 = vmatprep.subr.mxu0 0.0
    %3480 = vmatpush1.msra.mxu0 0.0
    %3481 = vmatprep.subr.mxu0 0.0
    %3482 = vmatpush1.msra.mxu0 0.0
    %3483 = vmatprep.subr.mxu0 0.0
    %3484 = vmatpush1.msra.mxu0 0.0
    %3485 = vmatprep.subr.mxu0 0.0
    %3486 = vmatpush1.msra.mxu0 0.0
    %3487 = vmatprep.subr.mxu0 0.0
    %3488 = vmatpush1.msra.mxu0 0.0
    %3489 = vmatprep.subr.mxu0 0.0
    %3490 = vmatpush1.msra.mxu0 0.0
    %3491 = vmatprep.subr.mxu0 0.0
    %3492 = vmatpush1.msra.mxu0 0.0
    %3493 = vmatprep.subr.mxu0 0.0
    %3494 = vmatpush1.msra.mxu0 0.0
    %3495 = vmatprep.subr.mxu0 0.0
    %3496 = vmatpush1.msra.mxu0 0.0
    %3497 = vmatprep.subr.mxu0 0.0
    %3498 = vmatpush1.msra.mxu0 0.0
    %3499 = vmatprep.subr.mxu0 0.0
    %3500 = vmatpush1.msra.mxu0 0.0
    %3501 = vmatprep.subr.mxu0 0.0
    %3502 = vmatpush1.msra.mxu0 0.0
    %3503 = vmatprep.subr.mxu0 0.0
    %3504 = vmatpush1.msra.mxu0 0.0
    %3505 = vmatprep.subr.mxu0 0.0
    %3506 = vmatpush1.msra.mxu0 0.0
    %3507 = vmatprep.subr.mxu0 0.0
    %3508 = vmatpush1.msra.mxu0 0.0
    %3509 = vmatprep.subr.mxu0 0.0
    %3510 = vmatpush1.msra.mxu0 0.0
    %3511 = vmatprep.subr.mxu0 0.0
    %3512 = vmatpush1.msra.mxu0 0.0
    %3513 = vmatprep.subr.mxu0 0.0
    %3514 = vmatpush1.msra.mxu0 0.0
    %3515 = vmatprep.subr.mxu0 0.0
    %3516 = vmatpush1.msra.mxu0 0.0
    %3517 = vmatprep.subr.mxu0 0.0
    %3518 = vmatpush1.msra.mxu0 0.0
    %3519 = vmatprep.subr.mxu0 0.0
    %3520 = vmatpush1.msra.mxu0 0.0
    %3521 = vmatprep.subr.mxu0 0.0
    %3522 = vmatpush1.msra.mxu0 0.0
    %3523 = vmatprep.subr.mxu0 0.0
    %3524 = vmatpush1.msra.mxu0 0.0
    %3525 = vmatprep.subr.mxu0 0.0
    %3526 = vmatpush1.msra.mxu0 0.0
    %3527 = vmatprep.subr.mxu0 0.0
    %3528 = vmatpush1.msra.mxu0 0.0
    %3529 = vmatprep.subr.mxu0 0.0
    %3530 = vmatpush1.msra.mxu0 0.0
    %3531 = vmatprep.mubr.f32.mxu0 0.0
    %3532 = vmatmul.mubr.f32.gmra.mrb[0].mxu0 %v3465
    %v3533 = vpop.f32.mrb[0].mxu0
    %v3534 = vadd.f32 %v78, %v3533
    %v3535 = vpop.f32.mrb[0].mxu0
    %v3536 = vadd.f32 %v82, %v3535
    %3537 = vdwg.mxu0
    %3538 = vmatprep.subr.mxu0 %v64
    %3539 = vmatpush1.msra.mxu0 %v63
    %3540 = vmatprep.subr.mxu0 %v68
    %3541 = vmatpush1.msra.mxu0 %v67
    %3542 = vmatprep.subr.mxu0 0.0
    %3543 = vmatpush1.msra.mxu0 0.0
    %3544 = vmatprep.subr.mxu0 0.0
    %3545 = vmatpush1.msra.mxu0 0.0
    %3546 = vmatprep.subr.mxu0 0.0
    %3547 = vmatpush1.msra.mxu0 0.0
    %3548 = vmatprep.subr.mxu0 0.0
    %3549 = vmatpush1.msra.mxu0 0.0
    %3550 = vmatprep.subr.mxu0 0.0
    %3551 = vmatpush1.msra.mxu0 0.0
    %3552 = vmatprep.subr.mxu0 0.0
    %3553 = vmatpush1.msra.mxu0 0.0
    %3554 = vmatprep.subr.mxu0 0.0
    %3555 = vmatpush1.msra.mxu0 0.0
    %3556 = vmatprep.subr.mxu0 0.0
    %3557 = vmatpush1.msra.mxu0 0.0
    %3558 = vmatprep.subr.mxu0 0.0
    %3559 = vmatpush1.msra.mxu0 0.0
    %3560 = vmatprep.subr.mxu0 0.0
    %3561 = vmatpush1.msra.mxu0 0.0
    %3562 = vmatprep.subr.mxu0 0.0
    %3563 = vmatpush1.msra.mxu0 0.0
    %3564 = vmatprep.subr.mxu0 0.0
    %3565 = vmatpush1.msra.mxu0 0.0
    %3566 = vmatprep.subr.mxu0 0.0
    %3567 = vmatpush1.msra.mxu0 0.0
    %3568 = vmatprep.subr.mxu0 0.0
    %3569 = vmatpush1.msra.mxu0 0.0
    %3570 = vmatprep.subr.mxu0 0.0
    %3571 = vmatpush1.msra.mxu0 0.0
    %3572 = vmatprep.subr.mxu0 0.0
    %3573 = vmatpush1.msra.mxu0 0.0
    %3574 = vmatprep.subr.mxu0 0.0
    %3575 = vmatpush1.msra.mxu0 0.0
    %3576 = vmatprep.subr.mxu0 0.0
    %3577 = vmatpush1.msra.mxu0 0.0
    %3578 = vmatprep.subr.mxu0 0.0
    %3579 = vmatpush1.msra.mxu0 0.0
    %3580 = vmatprep.subr.mxu0 0.0
    %3581 = vmatpush1.msra.mxu0 0.0
    %3582 = vmatprep.subr.mxu0 0.0
    %3583 = vmatpush1.msra.mxu0 0.0
    %3584 = vmatprep.subr.mxu0 0.0
    %3585 = vmatpush1.msra.mxu0 0.0
    %3586 = vmatprep.subr.mxu0 0.0
    %3587 = vmatpush1.msra.mxu0 0.0
    %3588 = vmatprep.subr.mxu0 0.0
    %3589 = vmatpush1.msra.mxu0 0.0
    %3590 = vmatprep.subr.mxu0 0.0
    %3591 = vmatpush1.msra.mxu0 0.0
    %3592 = vmatprep.subr.mxu0 0.0
    %3593 = vmatpush1.msra.mxu0 0.0
    %3594 = vmatprep.subr.mxu0 0.0
    %3595 = vmatpush1.msra.mxu0 0.0
    %3596 = vmatprep.subr.mxu0 0.0
    %3597 = vmatpush1.msra.mxu0 0.0
    %3598 = vmatprep.subr.mxu0 0.0
    %3599 = vmatpush1.msra.mxu0 0.0
    %3600 = vmatprep.subr.mxu0 0.0
    %3601 = vmatpush1.msra.mxu0 0.0
    %3602 = vmatprep.mubr.f32.mxu0 0.0
    %3603 = vmatmul.mubr.f32.gmra.mrb[0].mxu0 %v3465
    %v3604 = vpop.f32.mrb[0].mxu0
    %v3605 = vadd.f32 %v86, %v3604
    %v3606 = vpop.f32.mrb[0].mxu0
    %v3607 = vadd.f32 %v90, %v3606
    %3608 = vdwg.mxu0
    %v3609 = vadd.f32 %v3534, %v3305
    %v3610 = vadd.f32 %v3536, %v3307
    %v3611 = vadd.f32 %v3605, %v3346
    %v3612 = vadd.f32 %v3607, %v3348
    %v3613 = vxor.u32 %v3609, 2147483648
    %v3614 = vmul.f32 %v3613, 1.442695
    %v3615 = vpow.pop %v3614
    %v3616 = vadd.f32 %v3615, 1.0
    %v3617 = vrcp.pop %v3616
    %v3618 = vmul.f32 1.0, %v3617
    %v3619 = vxor.u32 %v3610, 2147483648
    %v3620 = vmul.f32 %v3619, 1.442695
    %v3621 = vpow.pop %v3620
    %v3622 = vadd.f32 %v3621, 1.0
    %v3623 = vrcp.pop %v3622
    %v3624 = vmul.f32 1.0, %v3623
    %v3625 = vtanh.pop %v3611
    %v3626 = vxor.u32 %v3612, 2147483648
    %v3627 = vmul.f32 %v3626, 1.442695
    %v3628 = vpow.pop %v3627
    %v3629 = vadd.f32 %v3628, 1.0
    %v3630 = vrcp.pop %v3629
    %v3631 = vmul.f32 1.0, %v3630
    %v3632 = vmul.f32 %v3624, %v3265
    %v3633 = vmul.f32 %v3618, %v3625
    %v3634 = vadd.f32 %v3632, %v3633
    %v3635 = vtanh.pop %v3634
    %v3636 = vmul.f32 %v3631, %v3635
    %v3637 = vpack.c.bf16 %v3636, %v3636
    %v3638 = vpack.c.bf16 %v3461, %v3461
    %3639 = vmatprep.subr.bf16.mxu0 %v784
    %3640 = vmatpush1.bf16.msra.mxu0 %v783
    %3641 = vmatprep.subr.bf16.mxu0 %v792
    %3642 = vmatpush1.bf16.msra.mxu0 %v791
    %3643 = vmatprep.subr.bf16.mxu0 %v800
    %3644 = vmatpush1.bf16.msra.mxu0 %v799
    %3645 = vmatprep.subr.bf16.mxu0 %v808
    %3646 = vmatpush1.bf16.msra.mxu0 %v807
    %3647 = vmatprep.subr.bf16.mxu0 %v816
    %3648 = vmatpush1.bf16.msra.mxu0 %v815
    %3649 = vmatprep.subr.bf16.mxu0 %v824
    %3650 = vmatpush1.bf16.msra.mxu0 %v823
    %3651 = vmatprep.subr.bf16.mxu0 %v832
    %3652 = vmatpush1.bf16.msra.mxu0 %v831
    %3653 = vmatprep.subr.bf16.mxu0 %v840
    %3654 = vmatpush1.bf16.msra.mxu0 %v839
    %3655 = vmatprep.subr.bf16.mxu0 %v848
    %3656 = vmatpush1.bf16.msra.mxu0 %v847
    %3657 = vmatprep.subr.bf16.mxu0 %v856
    %3658 = vmatpush1.bf16.msra.mxu0 %v855
    %3659 = vmatprep.subr.bf16.mxu0 %v864
    %3660 = vmatpush1.bf16.msra.mxu0 %v863
    %3661 = vmatprep.subr.bf16.mxu0 %v872
    %3662 = vmatpush1.bf16.msra.mxu0 %v871
    %3663 = vmatprep.subr.bf16.mxu0 %v880
    %3664 = vmatpush1.bf16.msra.mxu0 %v879
    %3665 = vmatprep.subr.bf16.mxu0 %v888
    %3666 = vmatpush1.bf16.msra.mxu0 %v887
    %3667 = vmatprep.subr.bf16.mxu0 %v896
    %3668 = vmatpush1.bf16.msra.mxu0 %v895
    %3669 = vmatprep.subr.bf16.mxu0 %v904
    %3670 = vmatpush1.bf16.msra.mxu0 %v903
    %3671 = vmatprep.mubr.bf16.mxu0 %v3638
    %3672 = vmatmul.mubr.bf16.gmra.mrb[0].mxu0 %v3637
    %v3673 = vpop.f32.mrb[0].mxu0
    %v3674 = vadd.f32 %v1203, %v3673
    %v3675 = vpop.f32.mrb[0].mxu0
    %v3676 = vadd.f32 %v1207, %v3675
    %v3677 = vpop.f32.mrb[0].mxu0
    %v3678 = vpop.f32.mrb[0].mxu0
    %3679 = vdwg.mxu0
    %3680 = vmatprep.subr.bf16.mxu0 %v786
    %3681 = vmatpush1.bf16.msra.mxu0 %v785
    %3682 = vmatprep.subr.bf16.mxu0 %v794
    %3683 = vmatpush1.bf16.msra.mxu0 %v793
    %3684 = vmatprep.subr.bf16.mxu0 %v802
    %3685 = vmatpush1.bf16.msra.mxu0 %v801
    %3686 = vmatprep.subr.bf16.mxu0 %v810
    %3687 = vmatpush1.bf16.msra.mxu0 %v809
    %3688 = vmatprep.subr.bf16.mxu0 %v818
    %3689 = vmatpush1.bf16.msra.mxu0 %v817
    %3690 = vmatprep.subr.bf16.mxu0 %v826
    %3691 = vmatpush1.bf16.msra.mxu0 %v825
    %3692 = vmatprep.subr.bf16.mxu0 %v834
    %3693 = vmatpush1.bf16.msra.mxu0 %v833
    %3694 = vmatprep.subr.bf16.mxu0 %v842
    %3695 = vmatpush1.bf16.msra.mxu0 %v841
    %3696 = vmatprep.subr.bf16.mxu0 %v850
    %3697 = vmatpush1.bf16.msra.mxu0 %v849
    %3698 = vmatprep.subr.bf16.mxu0 %v858
    %3699 = vmatpush1.bf16.msra.mxu0 %v857
    %3700 = vmatprep.subr.bf16.mxu0 %v866
    %3701 = vmatpush1.bf16.msra.mxu0 %v865
    %3702 = vmatprep.subr.bf16.mxu0 %v874
    %3703 = vmatpush1.bf16.msra.mxu0 %v873
    %3704 = vmatprep.subr.bf16.mxu0 %v882
    %3705 = vmatpush1.bf16.msra.mxu0 %v881
    %3706 = vmatprep.subr.bf16.mxu0 %v890
    %3707 = vmatpush1.bf16.msra.mxu0 %v889
    %3708 = vmatprep.subr.bf16.mxu0 %v898
    %3709 = vmatpush1.bf16.msra.mxu0 %v897
    %3710 = vmatprep.subr.bf16.mxu0 %v906
    %3711 = vmatpush1.bf16.msra.mxu0 %v905
    %3712 = vmatprep.mubr.bf16.mxu0 %v3638
    %3713 = vmatmul.mubr.bf16.gmra.mrb[0].mxu0 %v3637
    %v3714 = vpop.f32.mrb[0].mxu0
    %v3715 = vadd.f32 %v1211, %v3714
    %v3716 = vpop.f32.mrb[0].mxu0
    %v3717 = vadd.f32 %v1215, %v3716
    %v3718 = vpop.f32.mrb[0].mxu0
    %v3719 = vpop.f32.mrb[0].mxu0
    %3720 = vdwg.mxu0
    %v3721 = vxor.u32 %v3674, 2147483648
    %v3722 = vmul.f32 %v3721, 1.442695
    %v3723 = vpow.pop %v3722
    %v3724 = vadd.f32 %v3723, 1.0
    %v3725 = vrcp.pop %v3724
    %v3726 = vmul.f32 1.0, %v3725
    %v3727 = vxor.u32 %v3676, 2147483648
    %v3728 = vmul.f32 %v3727, 1.442695
    %v3729 = vpow.pop %v3728
    %v3730 = vadd.f32 %v3729, 1.0
    %v3731 = vrcp.pop %v3730
    %v3732 = vmul.f32 1.0, %v3731
    %v3733 = vtanh.pop %v3715
    %v3734 = vxor.u32 %v3717, 2147483648
    %v3735 = vmul.f32 %v3734, 1.442695
    %v3736 = vpow.pop %v3735
    %v3737 = vadd.f32 %v3736, 1.0
    %v3738 = vrcp.pop %v3737
    %v3739 = vmul.f32 1.0, %v3738
    %v3740 = vmul.f32 %v3732, %v3459
    %v3741 = vmul.f32 %v3726, %v3733
    %v3742 = vadd.f32 %v3740, %v3741
    %v3743 = vtanh.pop %v3742
    %v3744 = vmul.f32 %v3739, %v3743
    %v3745 = vld [vmem:[%s1] sm:$0xff]
    %v3746 = vld [vmem:[#allocation6] sm:$0xff]
    %v3747 = vld [vmem:[#allocation6 + $0x10] ss:$0 sm:$0xff]
    %vm3748 = vcmask 64512
    %v3750 = vsel %vm3748, %v3745, 0
    %3752 = vmatprep.subr.mxu0 0.0
    %3753 = vmatpush1.msra.mxu0 %v3746
    %3754 = vmatprep.subr.mxu0 0.0
    %3755 = vmatpush1.msra.mxu0 0.0
    %3756 = vmatprep.subr.mxu0 0.0
    %3757 = vmatpush1.msra.mxu0 0.0
    %3758 = vmatprep.subr.mxu0 0.0
    %3759 = vmatpush1.msra.mxu0 0.0
    %3760 = vmatprep.subr.mxu0 0.0
    %3761 = vmatpush1.msra.mxu0 0.0
    %3762 = vmatprep.subr.mxu0 0.0
    %3763 = vmatpush1.msra.mxu0 0.0
    %3764 = vmatprep.subr.mxu0 0.0
    %3765 = vmatpush1.msra.mxu0 0.0
    %3766 = vmatprep.subr.mxu0 0.0
    %3767 = vmatpush1.msra.mxu0 0.0
    %3768 = vmatprep.subr.mxu0 0.0
    %3769 = vmatpush1.msra.mxu0 0.0
    %3770 = vmatprep.subr.mxu0 0.0
    %3771 = vmatpush1.msra.mxu0 0.0
    %3772 = vmatprep.subr.mxu0 0.0
    %3773 = vmatpush1.msra.mxu0 0.0
    %3774 = vmatprep.subr.mxu0 0.0
    %3775 = vmatpush1.msra.mxu0 0.0
    %3776 = vmatprep.subr.mxu0 0.0
    %3777 = vmatpush1.msra.mxu0 0.0
    %3778 = vmatprep.subr.mxu0 0.0
    %3779 = vmatpush1.msra.mxu0 0.0
    %3780 = vmatprep.subr.mxu0 0.0
    %3781 = vmatpush1.msra.mxu0 0.0
    %3782 = vmatprep.subr.mxu0 0.0
    %3783 = vmatpush1.msra.mxu0 0.0
    %3784 = vmatprep.subr.mxu0 0.0
    %3785 = vmatpush1.msra.mxu0 0.0
    %3786 = vmatprep.subr.mxu0 0.0
    %3787 = vmatpush1.msra.mxu0 0.0
    %3788 = vmatprep.subr.mxu0 0.0
    %3789 = vmatpush1.msra.mxu0 0.0
    %3790 = vmatprep.subr.mxu0 0.0
    %3791 = vmatpush1.msra.mxu0 0.0
    %3792 = vmatprep.subr.mxu0 0.0
    %3793 = vmatpush1.msra.mxu0 0.0
    %3794 = vmatprep.subr.mxu0 0.0
    %3795 = vmatpush1.msra.mxu0 0.0
    %3796 = vmatprep.subr.mxu0 0.0
    %3797 = vmatpush1.msra.mxu0 0.0
    %3798 = vmatprep.subr.mxu0 0.0
    %3799 = vmatpush1.msra.mxu0 0.0
    %3800 = vmatprep.subr.mxu0 0.0
    %3801 = vmatpush1.msra.mxu0 0.0
    %3802 = vmatprep.subr.mxu0 0.0
    %3803 = vmatpush1.msra.mxu0 0.0
    %3804 = vmatprep.subr.mxu0 0.0
    %3805 = vmatpush1.msra.mxu0 0.0
    %3806 = vmatprep.subr.mxu0 0.0
    %3807 = vmatpush1.msra.mxu0 0.0
    %3808 = vmatprep.subr.mxu0 0.0
    %3809 = vmatpush1.msra.mxu0 0.0
    %3810 = vmatprep.subr.mxu0 0.0
    %3811 = vmatpush1.msra.mxu0 0.0
    %3812 = vmatprep.subr.mxu0 0.0
    %3813 = vmatpush1.msra.mxu0 0.0
    %3814 = vmatprep.subr.mxu0 0.0
    %3815 = vmatpush1.msra.mxu0 0.0
    %3816 = vmatprep.mubr.f32.mxu0 0.0
    %3817 = vmatmul.mubr.f32.gmra.mrb[0].mxu0 %v3750
    %v3818 = vpop.f32.mrb[0].mxu0
    %v3819 = vadd.f32 %v3747, %v3818
    %v3820 = vpop.f32.mrb[0].mxu0
    %3821 = vdwg.mxu0
    %v3822 = vmax.f32 %v3819, 0.0
    %v3823 = vld [vmem:[#allocation6 + $0x20] sm:$0xff]
    %v3824 = vld [vmem:[#allocation6 + $0x30] sm:$0xff]
    %v3825 = vld [vmem:[#allocation6 + $0x40] sm:$0xff]
    %v3826 = vld [vmem:[#allocation6 + $0x50] sm:$0xff]
    %v3827 = vld [vmem:[#allocation6 + $0x60] sm:$0xff]
    %v3828 = vld [vmem:[#allocation6 + $0x70] sm:$0xff]
    %v3829 = vld [vmem:[#allocation6 + $0x80] sm:$0xff]
    %v3830 = vld [vmem:[#allocation6 + $0x90] sm:$0xff]
    %v3831 = vld [vmem:[#allocation6 + $0xa0] sm:$0xff]
    %v3832 = vld [vmem:[#allocation6 + $0xb0] sm:$0xff]
    %v3833 = vld [vmem:[#allocation6 + $0xc0] sm:$0xff]
    %v3834 = vld [vmem:[#allocation6 + $0xd0] sm:$0xff]
    %v3835 = vld [vmem:[#allocation6 + $0xe0] sm:$0xff]
    %v3836 = vld [vmem:[#allocation6 + $0xf0] sm:$0xff]
    %v3837 = vld [vmem:[#allocation6 + $0x100] sm:$0xff]
    %v3838 = vld [vmem:[#allocation6 + $0x110] sm:$0xff]
    %v3839 = vld [vmem:[#allocation6 + $0x120] ss:$0 sm:$0xff]
    %3840 = vmatprep.subr.mxu0 0.0
    %3841 = vmatpush1.msra.mxu0 %v3823
    %3842 = vmatprep.subr.mxu0 0.0
    %3843 = vmatpush1.msra.mxu0 %v3824
    %3844 = vmatprep.subr.mxu0 0.0
    %3845 = vmatpush1.msra.mxu0 %v3825
    %3846 = vmatprep.subr.mxu0 0.0
    %3847 = vmatpush1.msra.mxu0 %v3826
    %3848 = vmatprep.subr.mxu0 0.0
    %3849 = vmatpush1.msra.mxu0 %v3827
    %3850 = vmatprep.subr.mxu0 0.0
    %3851 = vmatpush1.msra.mxu0 %v3828
    %3852 = vmatprep.subr.mxu0 0.0
    %3853 = vmatpush1.msra.mxu0 %v3829
    %3854 = vmatprep.subr.mxu0 0.0
    %3855 = vmatpush1.msra.mxu0 %v3830
    %3856 = vmatprep.subr.mxu0 0.0
    %3857 = vmatpush1.msra.mxu0 %v3831
    %3858 = vmatprep.subr.mxu0 0.0
    %3859 = vmatpush1.msra.mxu0 %v3832
    %3860 = vmatprep.subr.mxu0 0.0
    %3861 = vmatpush1.msra.mxu0 %v3833
    %3862 = vmatprep.subr.mxu0 0.0
    %3863 = vmatpush1.msra.mxu0 %v3834
    %3864 = vmatprep.subr.mxu0 0.0
    %3865 = vmatpush1.msra.mxu0 %v3835
    %3866 = vmatprep.subr.mxu0 0.0
    %3867 = vmatpush1.msra.mxu0 %v3836
    %3868 = vmatprep.subr.mxu0 0.0
    %3869 = vmatpush1.msra.mxu0 %v3837
    %3870 = vmatprep.subr.mxu0 0.0
    %3871 = vmatpush1.msra.mxu0 %v3838
    %3872 = vmatprep.subr.mxu0 0.0
    %3873 = vmatpush1.msra.mxu0 0.0
    %3874 = vmatprep.subr.mxu0 0.0
    %3875 = vmatpush1.msra.mxu0 0.0
    %3876 = vmatprep.subr.mxu0 0.0
    %3877 = vmatpush1.msra.mxu0 0.0
    %3878 = vmatprep.subr.mxu0 0.0
    %3879 = vmatpush1.msra.mxu0 0.0
    %3880 = vmatprep.subr.mxu0 0.0
    %3881 = vmatpush1.msra.mxu0 0.0
    %3882 = vmatprep.subr.mxu0 0.0
    %3883 = vmatpush1.msra.mxu0 0.0
    %3884 = vmatprep.subr.mxu0 0.0
    %3885 = vmatpush1.msra.mxu0 0.0
    %3886 = vmatprep.subr.mxu0 0.0
    %3887 = vmatpush1.msra.mxu0 0.0
    %3888 = vmatprep.subr.mxu0 0.0
    %3889 = vmatpush1.msra.mxu0 0.0
    %3890 = vmatprep.subr.mxu0 0.0
    %3891 = vmatpush1.msra.mxu0 0.0
    %3892 = vmatprep.subr.mxu0 0.0
    %3893 = vmatpush1.msra.mxu0 0.0
    %3894 = vmatprep.subr.mxu0 0.0
    %3895 = vmatpush1.msra.mxu0 0.0
    %3896 = vmatprep.subr.mxu0 0.0
    %3897 = vmatpush1.msra.mxu0 0.0
    %3898 = vmatprep.subr.mxu0 0.0
    %3899 = vmatpush1.msra.mxu0 0.0
    %3900 = vmatprep.subr.mxu0 0.0
    %3901 = vmatpush1.msra.mxu0 0.0
    %3902 = vmatprep.subr.mxu0 0.0
    %3903 = vmatpush1.msra.mxu0 0.0
    %3904 = vmatprep.mubr.f32.mxu0 0.0
    %3905 = vmatmul.mubr.f32.gmra.mrb[0].mxu0 %v3822
    %v3906 = vpop.f32.mrb[0].mxu0
    %v3907 = vadd.f32 %v3839, %v3906
    %v3908 = vpop.f32.mrb[0].mxu0
    %3909 = vdwg.mxu0
    %v3910 = vmax.f32 %v3907, 0.0
    %v3911 = vld [vmem:[#allocation6 + $0x130] sm:$0xff]
    %v3912 = vld [vmem:[#allocation6 + $0x138] sm:$0xff]
    %v3913 = vld [vmem:[#allocation6 + $0x140] sm:$0xff]
    %v3914 = vld [vmem:[#allocation6 + $0x148] sm:$0xff]
    %v3915 = vld [vmem:[#allocation6 + $0x150] sm:$0xff]
    %v3916 = vld [vmem:[#allocation6 + $0x158] sm:$0xff]
    %v3917 = vld [vmem:[#allocation6 + $0x160] sm:$0xff]
    %v3918 = vld [vmem:[#allocation6 + $0x168] sm:$0xff]
    %v3919 = vld [vmem:[#allocation6 + $0x170] sm:$0xff]
    %v3920 = vld [vmem:[#allocation6 + $0x178] sm:$0xff]
    %v3921 = vld [vmem:[#allocation6 + $0x180] sm:$0xff]
    %v3922 = vld [vmem:[#allocation6 + $0x188] sm:$0xff]
    %v3923 = vld [vmem:[#allocation6 + $0x190] sm:$0xff]
    %v3924 = vld [vmem:[#allocation6 + $0x198] sm:$0xff]
    %v3925 = vld [vmem:[#allocation6 + $0x1a0] sm:$0xff]
    %v3926 = vld [vmem:[#allocation6 + $0x1a8] sm:$0xff]
    %v3927 = vld [vmem:[#allocation6 + $0x1b0] sm:$0xff]
    %v3928 = vld [vmem:[#allocation6 + $0x1b8] sm:$0xff]
    %v3929 = vld [vmem:[#allocation6 + $0x1c0] sm:$0xff]
    %v3930 = vld [vmem:[#allocation6 + $0x1c8] sm:$0xff]
    %v3931 = vld [vmem:[#allocation6 + $0x1d0] sm:$0xff]
    %v3932 = vld [vmem:[#allocation6 + $0x1d8] sm:$0xff]
    %v3933 = vld [vmem:[#allocation6 + $0x1e0] sm:$0xff]
    %v3934 = vld [vmem:[#allocation6 + $0x1e8] sm:$0xff]
    %v3935 = vld [vmem:[#allocation6 + $0x1f0] sm:$0xff]
    %v3936 = vld [vmem:[#allocation6 + $0x1f8] sm:$0xff]
    %v3937 = vld [vmem:[#allocation6 + $0x200] sm:$0xff]
    %v3938 = vld [vmem:[#allocation6 + $0x208] sm:$0xff]
    %v3939 = vld [vmem:[#allocation6 + $0x210] sm:$0xff]
    %v3940 = vld [vmem:[#allocation6 + $0x218] sm:$0xff]
    %v3941 = vld [vmem:[#allocation6 + $0x220] sm:$0xff]
    %v3942 = vld [vmem:[#allocation6 + $0x228] sm:$0xff]
    %v3943 = vld [vmem:[#allocation6 + $0x230] sm:$0xff]
    %v3944 = vld [vmem:[#allocation6 + $0x238] sm:$0xff]
    %v3945 = vld [vmem:[#allocation6 + $0x240] sm:$0xff]
    %v3946 = vld [vmem:[#allocation6 + $0x248] sm:$0xff]
    %v3947 = vld [vmem:[#allocation6 + $0x250] sm:$0xff]
    %v3948 = vld [vmem:[#allocation6 + $0x258] sm:$0xff]
    %v3949 = vld [vmem:[#allocation6 + $0x260] sm:$0xff]
    %v3950 = vld [vmem:[#allocation6 + $0x268] sm:$0xff]
    %v3951 = vld [vmem:[#allocation6 + $0x270] sm:$0xff]
    %v3952 = vld [vmem:[#allocation6 + $0x278] sm:$0xff]
    %v3953 = vld [vmem:[#allocation6 + $0x280] sm:$0xff]
    %v3954 = vld [vmem:[#allocation6 + $0x288] sm:$0xff]
    %v3955 = vld [vmem:[#allocation6 + $0x290] sm:$0xff]
    %v3956 = vld [vmem:[#allocation6 + $0x298] sm:$0xff]
    %v3957 = vld [vmem:[#allocation6 + $0x2a0] sm:$0xff]
    %v3958 = vld [vmem:[#allocation6 + $0x2a8] sm:$0xff]
    %v3959 = vld [vmem:[#allocation6 + $0x2b0] sm:$0xff]
    %v3960 = vld [vmem:[#allocation6 + $0x2b8] sm:$0xff]
    %v3961 = vld [vmem:[#allocation6 + $0x2c0] sm:$0xff]
    %v3962 = vld [vmem:[#allocation6 + $0x2c8] sm:$0xff]
    %v3963 = vld [vmem:[#allocation6 + $0x2d0] sm:$0xff]
    %v3964 = vld [vmem:[#allocation6 + $0x2d8] sm:$0xff]
    %v3965 = vld [vmem:[#allocation6 + $0x2e0] sm:$0xff]
    %v3966 = vld [vmem:[#allocation6 + $0x2e8] sm:$0xff]
    %v3967 = vld [vmem:[#allocation6 + $0x2f0] sm:$0xff]
    %v3968 = vld [vmem:[#allocation6 + $0x2f8] sm:$0xff]
    %v3969 = vld [vmem:[#allocation6 + $0x300] sm:$0xff]
    %v3970 = vld [vmem:[#allocation6 + $0x308] sm:$0xff]
    %v3971 = vld [vmem:[#allocation6 + $0x310] sm:$0xff]
    %v3972 = vld [vmem:[#allocation6 + $0x318] sm:$0xff]
    %v3973 = vld [vmem:[#allocation6 + $0x320] sm:$0xff]
    %v3974 = vld [vmem:[#allocation6 + $0x328] sm:$0xff]
    %3975 = vmatprep.subr.mxu0 %v3944
    %3976 = vmatpush1.msra.mxu0 %v3943
    %3977 = vmatprep.subr.mxu0 %v3946
    %3978 = vmatpush1.msra.mxu0 %v3945
    %3979 = vmatprep.subr.mxu0 %v3948
    %3980 = vmatpush1.msra.mxu0 %v3947
    %3981 = vmatprep.subr.mxu0 %v3950
    %3982 = vmatpush1.msra.mxu0 %v3949
    %3983 = vmatprep.subr.mxu0 %v3952
    %3984 = vmatpush1.msra.mxu0 %v3951
    %3985 = vmatprep.subr.mxu0 %v3954
    %3986 = vmatpush1.msra.mxu0 %v3953
    %3987 = vmatprep.subr.mxu0 %v3956
    %3988 = vmatpush1.msra.mxu0 %v3955
    %3989 = vmatprep.subr.mxu0 %v3958
    %3990 = vmatpush1.msra.mxu0 %v3957
    %3991 = vmatprep.subr.mxu0 %v3960
    %3992 = vmatpush1.msra.mxu0 %v3959
    %3993 = vmatprep.subr.mxu0 %v3962
    %3994 = vmatpush1.msra.mxu0 %v3961
    %3995 = vmatprep.subr.mxu0 %v3964
    %3996 = vmatpush1.msra.mxu0 %v3963
    %3997 = vmatprep.subr.mxu0 %v3966
    %3998 = vmatpush1.msra.mxu0 %v3965
    %3999 = vmatprep.subr.mxu0 %v3968
    %4000 = vmatpush1.msra.mxu0 %v3967
    %4001 = vmatprep.subr.mxu0 %v3970
    %4002 = vmatpush1.msra.mxu0 %v3969
    %4003 = vmatprep.subr.mxu0 %v3972
    %4004 = vmatpush1.msra.mxu0 %v3971
    %4005 = vmatprep.subr.mxu0 %v3974
    %4006 = vmatpush1.msra.mxu0 %v3973
    %4007 = vmatprep.subr.mxu0 0.0
    %4008 = vmatpush1.msra.mxu0 0.0
    %4009 = vmatprep.subr.mxu0 0.0
    %4010 = vmatpush1.msra.mxu0 0.0
    %4011 = vmatprep.subr.mxu0 0.0
    %4012 = vmatpush1.msra.mxu0 0.0
    %4013 = vmatprep.subr.mxu0 0.0
    %4014 = vmatpush1.msra.mxu0 0.0
    %4015 = vmatprep.subr.mxu0 0.0
    %4016 = vmatpush1.msra.mxu0 0.0
    %4017 = vmatprep.subr.mxu0 0.0
    %4018 = vmatpush1.msra.mxu0 0.0
    %4019 = vmatprep.subr.mxu0 0.0
    %4020 = vmatpush1.msra.mxu0 0.0
    %4021 = vmatprep.subr.mxu0 0.0
    %4022 = vmatpush1.msra.mxu0 0.0
    %4023 = vmatprep.subr.mxu0 0.0
    %4024 = vmatpush1.msra.mxu0 0.0
    %4025 = vmatprep.subr.mxu0 0.0
    %4026 = vmatpush1.msra.mxu0 0.0
    %4027 = vmatprep.subr.mxu0 0.0
    %4028 = vmatpush1.msra.mxu0 0.0
    %4029 = vmatprep.subr.mxu0 0.0
    %4030 = vmatpush1.msra.mxu0 0.0
    %4031 = vmatprep.subr.mxu0 0.0
    %4032 = vmatpush1.msra.mxu0 0.0
    %4033 = vmatprep.subr.mxu0 0.0
    %4034 = vmatpush1.msra.mxu0 0.0
    %4035 = vmatprep.subr.mxu0 0.0
    %4036 = vmatpush1.msra.mxu0 0.0
    %4037 = vmatprep.subr.mxu0 0.0
    %4038 = vmatpush1.msra.mxu0 0.0
    %4039 = vmatprep.mubr.f32.mxu0 0.0
    %4040 = vmatmul.mubr.f32.gmra.mrb[0].mxu0 %v3910
    %v4041 = vpop.f32.mrb[0].mxu0
    %v4042 = vadd.f32 0.0, %v4041
    %v4043 = vpop.f32.mrb[0].mxu0
    %v4044 = vadd.f32 0.0, %v4043
    %4045 = vdwg.mxu0
    %4046 = vmatprep.subr.mxu0 %v3912
    %4047 = vmatpush1.msra.mxu0 %v3911
    %4048 = vmatprep.subr.mxu0 %v3914
    %4049 = vmatpush1.msra.mxu0 %v3913
    %4050 = vmatprep.subr.mxu0 %v3916
    %4051 = vmatpush1.msra.mxu0 %v3915
    %4052 = vmatprep.subr.mxu0 %v3918
    %4053 = vmatpush1.msra.mxu0 %v3917
    %4054 = vmatprep.subr.mxu0 %v3920
    %4055 = vmatpush1.msra.mxu0 %v3919
    %4056 = vmatprep.subr.mxu0 %v3922
    %4057 = vmatpush1.msra.mxu0 %v3921
    %4058 = vmatprep.subr.mxu0 %v3924
    %4059 = vmatpush1.msra.mxu0 %v3923
    %4060 = vmatprep.subr.mxu0 %v3926
    %4061 = vmatpush1.msra.mxu0 %v3925
    %4062 = vmatprep.subr.mxu0 %v3928
    %4063 = vmatpush1.msra.mxu0 %v3927
    %4064 = vmatprep.subr.mxu0 %v3930
    %4065 = vmatpush1.msra.mxu0 %v3929
    %4066 = vmatprep.subr.mxu0 %v3932
    %4067 = vmatpush1.msra.mxu0 %v3931
    %4068 = vmatprep.subr.mxu0 %v3934
    %4069 = vmatpush1.msra.mxu0 %v3933
    %4070 = vmatprep.subr.mxu0 %v3936
    %4071 = vmatpush1.msra.mxu0 %v3935
    %4072 = vmatprep.subr.mxu0 %v3938
    %4073 = vmatpush1.msra.mxu0 %v3937
    %4074 = vmatprep.subr.mxu0 %v3940
    %4075 = vmatpush1.msra.mxu0 %v3939
    %4076 = vmatprep.subr.mxu0 %v3942
    %4077 = vmatpush1.msra.mxu0 %v3941
    %4078 = vmatprep.subr.mxu0 0.0
    %4079 = vmatpush1.msra.mxu0 0.0
    %4080 = vmatprep.subr.mxu0 0.0
    %4081 = vmatpush1.msra.mxu0 0.0
    %4082 = vmatprep.subr.mxu0 0.0
    %4083 = vmatpush1.msra.mxu0 0.0
    %4084 = vmatprep.subr.mxu0 0.0
    %4085 = vmatpush1.msra.mxu0 0.0
    %4086 = vmatprep.subr.mxu0 0.0
    %4087 = vmatpush1.msra.mxu0 0.0
    %4088 = vmatprep.subr.mxu0 0.0
    %4089 = vmatpush1.msra.mxu0 0.0
    %4090 = vmatprep.subr.mxu0 0.0
    %4091 = vmatpush1.msra.mxu0 0.0
    %4092 = vmatprep.subr.mxu0 0.0
    %4093 = vmatpush1.msra.mxu0 0.0
    %4094 = vmatprep.subr.mxu0 0.0
    %4095 = vmatpush1.msra.mxu0 0.0
    %4096 = vmatprep.subr.mxu0 0.0
    %4097 = vmatpush1.msra.mxu0 0.0
    %4098 = vmatprep.subr.mxu0 0.0
    %4099 = vmatpush1.msra.mxu0 0.0
    %4100 = vmatprep.subr.mxu0 0.0
    %4101 = vmatpush1.msra.mxu0 0.0
    %4102 = vmatprep.subr.mxu0 0.0
    %4103 = vmatpush1.msra.mxu0 0.0
    %4104 = vmatprep.subr.mxu0 0.0
    %4105 = vmatpush1.msra.mxu0 0.0
    %4106 = vmatprep.subr.mxu0 0.0
    %4107 = vmatpush1.msra.mxu0 0.0
    %4108 = vmatprep.subr.mxu0 0.0
    %4109 = vmatpush1.msra.mxu0 0.0
    %4110 = vmatprep.mubr.f32.mxu0 0.0
    %4111 = vmatmul.mubr.f32.gmra.mrb[0].mxu0 %v3744
    %v4112 = vpop.f32.mrb[0].mxu0
    %v4113 = vadd.f32 %v4042, %v4112
    %v4114 = vpop.f32.mrb[0].mxu0
    %v4115 = vadd.f32 %v4044, %v4114
    %4116 = vdwg.mxu0
    %s4117 = scalar_lea.vmem [#allocation6], 816
    %v4118 = vld [vmem:[%s4117] ss:$8 sm:$0x3]
    %v4120 = vlaneseq
    %v4121 = vshrl.u32 %v4120, 7
    %v4122 = vsub.s32 0, %v4121
    %v4123 = vrot.slane %v4118, %v4122
    %v4124 = vlaneseq
    %v4125 = vshrl.u32 %v4124, 7
    %v4126 = vsub.s32 1, %v4125
    %v4127 = vrot.slane %v4118, %v4126
    %v4130 = vadd.f32 %v4113, %v4123
    %v4131 = vadd.f32 %v4115, %v4127
    %v4132 = vld [vmem:[#allocation6 + $0x340] sm:$0xff]
    %v4133 = vld [vmem:[#allocation6 + $0x348] sm:$0xff]
    %v4134 = vld [vmem:[#allocation6 + $0x350] sm:$0xff]
    %v4135 = vld [vmem:[#allocation6 + $0x358] sm:$0xff]
    %v4136 = vld [vmem:[#allocation6 + $0x360] sm:$0xff]
    %v4137 = vld [vmem:[#allocation6 + $0x368] sm:$0xff]
    %v4138 = vld [vmem:[#allocation6 + $0x370] sm:$0xff]
    %v4139 = vld [vmem:[#allocation6 + $0x378] sm:$0xff]
    %v4140 = vld [vmem:[#allocation6 + $0x380] sm:$0xff]
    %v4141 = vld [vmem:[#allocation6 + $0x388] sm:$0xff]
    %v4142 = vld [vmem:[#allocation6 + $0x390] sm:$0xff]
    %v4143 = vld [vmem:[#allocation6 + $0x398] sm:$0xff]
    %v4144 = vld [vmem:[#allocation6 + $0x3a0] sm:$0xff]
    %v4145 = vld [vmem:[#allocation6 + $0x3a8] sm:$0xff]
    %v4146 = vld [vmem:[#allocation6 + $0x3b0] sm:$0xff]
    %v4147 = vld [vmem:[#allocation6 + $0x3b8] sm:$0xff]
    %v4148 = vld [vmem:[#allocation6 + $0x3c0] sm:$0xff]
    %v4149 = vld [vmem:[#allocation6 + $0x3c8] sm:$0xff]
    %v4150 = vld [vmem:[#allocation6 + $0x3d0] sm:$0xff]
    %v4151 = vld [vmem:[#allocation6 + $0x3d8] sm:$0xff]
    %v4152 = vld [vmem:[#allocation6 + $0x3e0] sm:$0xff]
    %v4153 = vld [vmem:[#allocation6 + $0x3e8] sm:$0xff]
    %v4154 = vld [vmem:[#allocation6 + $0x3f0] sm:$0xff]
    %v4155 = vld [vmem:[#allocation6 + $0x3f8] sm:$0xff]
    %v4156 = vld [vmem:[#allocation6 + $0x400] sm:$0xff]
    %v4157 = vld [vmem:[#allocation6 + $0x408] sm:$0xff]
    %v4158 = vld [vmem:[#allocation6 + $0x410] sm:$0xff]
    %v4159 = vld [vmem:[#allocation6 + $0x418] sm:$0xff]
    %v4160 = vld [vmem:[#allocation6 + $0x420] sm:$0xff]
    %v4161 = vld [vmem:[#allocation6 + $0x428] sm:$0xff]
    %v4162 = vld [vmem:[#allocation6 + $0x430] sm:$0xff]
    %v4163 = vld [vmem:[#allocation6 + $0x438] sm:$0xff]
    %v4164 = vld [vmem:[#allocation6 + $0x440] sm:$0xff]
    %v4165 = vld [vmem:[#allocation6 + $0x448] sm:$0xff]
    %v4166 = vld [vmem:[#allocation6 + $0x450] sm:$0xff]
    %v4167 = vld [vmem:[#allocation6 + $0x458] sm:$0xff]
    %v4168 = vld [vmem:[#allocation6 + $0x460] sm:$0xff]
    %v4169 = vld [vmem:[#allocation6 + $0x468] sm:$0xff]
    %v4170 = vld [vmem:[#allocation6 + $0x470] sm:$0xff]
    %v4171 = vld [vmem:[#allocation6 + $0x478] sm:$0xff]
    %v4172 = vld [vmem:[#allocation6 + $0x480] sm:$0xff]
    %v4173 = vld [vmem:[#allocation6 + $0x488] sm:$0xff]
    %v4174 = vld [vmem:[#allocation6 + $0x490] sm:$0xff]
    %v4175 = vld [vmem:[#allocation6 + $0x498] sm:$0xff]
    %v4176 = vld [vmem:[#allocation6 + $0x4a0] sm:$0xff]
    %v4177 = vld [vmem:[#allocation6 + $0x4a8] sm:$0xff]
    %v4178 = vld [vmem:[#allocation6 + $0x4b0] sm:$0xff]
    %v4179 = vld [vmem:[#allocation6 + $0x4b8] sm:$0xff]
    %v4180 = vld [vmem:[#allocation6 + $0x4c0] sm:$0xff]
    %v4181 = vld [vmem:[#allocation6 + $0x4c8] sm:$0xff]
    %v4182 = vld [vmem:[#allocation6 + $0x4d0] sm:$0xff]
    %v4183 = vld [vmem:[#allocation6 + $0x4d8] sm:$0xff]
    %v4184 = vld [vmem:[#allocation6 + $0x4e0] sm:$0xff]
    %v4185 = vld [vmem:[#allocation6 + $0x4e8] sm:$0xff]
    %v4186 = vld [vmem:[#allocation6 + $0x4f0] sm:$0xff]
    %v4187 = vld [vmem:[#allocation6 + $0x4f8] sm:$0xff]
    %v4188 = vld [vmem:[#allocation6 + $0x500] sm:$0xff]
    %v4189 = vld [vmem:[#allocation6 + $0x508] sm:$0xff]
    %v4190 = vld [vmem:[#allocation6 + $0x510] sm:$0xff]
    %v4191 = vld [vmem:[#allocation6 + $0x518] sm:$0xff]
    %v4192 = vld [vmem:[#allocation6 + $0x520] sm:$0xff]
    %v4193 = vld [vmem:[#allocation6 + $0x528] sm:$0xff]
    %v4194 = vld [vmem:[#allocation6 + $0x530] sm:$0xff]
    %v4195 = vld [vmem:[#allocation6 + $0x538] sm:$0xff]
    %s4196 = scalar_lea.vmem [#allocation6], 1344
    %v4197 = vld [vmem:[%s4196] ss:$8 sm:$0x3]
    %v4199 = vlaneseq
    %v4200 = vshrl.u32 %v4199, 7
    %v4201 = vsub.s32 0, %v4200
    %v4202 = vrot.slane %v4197, %v4201
    %v4203 = vlaneseq
    %v4204 = vshrl.u32 %v4203, 7
    %v4205 = vsub.s32 1, %v4204
    %v4206 = vrot.slane %v4197, %v4205
    %4209 = vmatprep.subr.mxu0 %v4133
    %4210 = vmatpush1.msra.mxu0 %v4132
    %4211 = vmatprep.subr.mxu0 %v4135
    %4212 = vmatpush1.msra.mxu0 %v4134
    %4213 = vmatprep.subr.mxu0 %v4137
    %4214 = vmatpush1.msra.mxu0 %v4136
    %4215 = vmatprep.subr.mxu0 %v4139
    %4216 = vmatpush1.msra.mxu0 %v4138
    %4217 = vmatprep.subr.mxu0 %v4141
    %4218 = vmatpush1.msra.mxu0 %v4140
    %4219 = vmatprep.subr.mxu0 %v4143
    %4220 = vmatpush1.msra.mxu0 %v4142
    %4221 = vmatprep.subr.mxu0 %v4145
    %4222 = vmatpush1.msra.mxu0 %v4144
    %4223 = vmatprep.subr.mxu0 %v4147
    %4224 = vmatpush1.msra.mxu0 %v4146
    %4225 = vmatprep.subr.mxu0 %v4149
    %4226 = vmatpush1.msra.mxu0 %v4148
    %4227 = vmatprep.subr.mxu0 %v4151
    %4228 = vmatpush1.msra.mxu0 %v4150
    %4229 = vmatprep.subr.mxu0 %v4153
    %4230 = vmatpush1.msra.mxu0 %v4152
    %4231 = vmatprep.subr.mxu0 %v4155
    %4232 = vmatpush1.msra.mxu0 %v4154
    %4233 = vmatprep.subr.mxu0 %v4157
    %4234 = vmatpush1.msra.mxu0 %v4156
    %4235 = vmatprep.subr.mxu0 %v4159
    %4236 = vmatpush1.msra.mxu0 %v4158
    %4237 = vmatprep.subr.mxu0 %v4161
    %4238 = vmatpush1.msra.mxu0 %v4160
    %4239 = vmatprep.subr.mxu0 %v4163
    %4240 = vmatpush1.msra.mxu0 %v4162
    %4241 = vmatprep.subr.mxu0 %v4165
    %4242 = vmatpush1.msra.mxu0 %v4164
    %4243 = vmatprep.subr.mxu0 %v4167
    %4244 = vmatpush1.msra.mxu0 %v4166
    %4245 = vmatprep.subr.mxu0 %v4169
    %4246 = vmatpush1.msra.mxu0 %v4168
    %4247 = vmatprep.subr.mxu0 %v4171
    %4248 = vmatpush1.msra.mxu0 %v4170
    %4249 = vmatprep.subr.mxu0 %v4173
    %4250 = vmatpush1.msra.mxu0 %v4172
    %4251 = vmatprep.subr.mxu0 %v4175
    %4252 = vmatpush1.msra.mxu0 %v4174
    %4253 = vmatprep.subr.mxu0 %v4177
    %4254 = vmatpush1.msra.mxu0 %v4176
    %4255 = vmatprep.subr.mxu0 %v4179
    %4256 = vmatpush1.msra.mxu0 %v4178
    %4257 = vmatprep.subr.mxu0 %v4181
    %4258 = vmatpush1.msra.mxu0 %v4180
    %4259 = vmatprep.subr.mxu0 %v4183
    %4260 = vmatpush1.msra.mxu0 %v4182
    %4261 = vmatprep.subr.mxu0 %v4185
    %4262 = vmatpush1.msra.mxu0 %v4184
    %4263 = vmatprep.subr.mxu0 %v4187
    %4264 = vmatpush1.msra.mxu0 %v4186
    %4265 = vmatprep.subr.mxu0 %v4189
    %4266 = vmatpush1.msra.mxu0 %v4188
    %4267 = vmatprep.subr.mxu0 %v4191
    %4268 = vmatpush1.msra.mxu0 %v4190
    %4269 = vmatprep.subr.mxu0 %v4193
    %4270 = vmatpush1.msra.mxu0 %v4192
    %4271 = vmatprep.subr.mxu0 %v4195
    %4272 = vmatpush1.msra.mxu0 %v4194
    %4273 = vmatprep.mubr.f32.mxu0 %v4131
    %4274 = vmatmul.mubr.f32.gmra.mrb[0].mxu0 %v4130
    %v4275 = vpop.f32.mrb[0].mxu0
    %v4276 = vadd.f32 %v4202, %v4275
    %v4277 = vpop.f32.mrb[0].mxu0
    %v4278 = vadd.f32 %v4206, %v4277
    %4279 = vdwg.mxu0
    %v4280 = vmax.f32 %v4276, 0.0
    %v4281 = vmax.f32 %v4278, 0.0
    %v4282 = vld [vmem:[#allocation6 + $0x550] sm:$0xff]
    %v4283 = vld [vmem:[#allocation6 + $0x560] sm:$0xff]
    %v4284 = vld [vmem:[#allocation6 + $0x570] sm:$0xff]
    %v4285 = vld [vmem:[#allocation6 + $0x580] sm:$0xff]
    %v4286 = vld [vmem:[#allocation6 + $0x590] sm:$0xff]
    %v4287 = vld [vmem:[#allocation6 + $0x5a0] sm:$0xff]
    %v4288 = vld [vmem:[#allocation6 + $0x5b0] sm:$0xff]
    %v4289 = vld [vmem:[#allocation6 + $0x5c0] sm:$0xff]
    %v4290 = vld [vmem:[#allocation6 + $0x5d0] sm:$0xff]
    %v4291 = vld [vmem:[#allocation6 + $0x5e0] sm:$0xff]
    %v4292 = vld [vmem:[#allocation6 + $0x5f0] sm:$0xff]
    %v4293 = vld [vmem:[#allocation6 + $0x600] sm:$0xff]
    %v4294 = vld [vmem:[#allocation6 + $0x610] sm:$0xff]
    %v4295 = vld [vmem:[#allocation6 + $0x620] sm:$0xff]
    %v4296 = vld [vmem:[#allocation6 + $0x630] sm:$0xff]
    %v4297 = vld [vmem:[#allocation6 + $0x640] sm:$0xff]
    %v4298 = vld [vmem:[#allocation6 + $0x650] sm:$0xff]
    %v4299 = vld [vmem:[#allocation6 + $0x660] sm:$0xff]
    %v4300 = vld [vmem:[#allocation6 + $0x670] sm:$0xff]
    %v4301 = vld [vmem:[#allocation6 + $0x680] sm:$0xff]
    %v4302 = vld [vmem:[#allocation6 + $0x690] sm:$0xff]
    %v4303 = vld [vmem:[#allocation6 + $0x6a0] sm:$0xff]
    %v4304 = vld [vmem:[#allocation6 + $0x6b0] sm:$0xff]
    %v4305 = vld [vmem:[#allocation6 + $0x6c0] sm:$0xff]
    %v4306 = vld [vmem:[#allocation6 + $0x6d0] sm:$0xff]
    %v4307 = vld [vmem:[#allocation6 + $0x6e0] sm:$0xff]
    %v4308 = vld [vmem:[#allocation6 + $0x6f0] sm:$0xff]
    %v4309 = vld [vmem:[#allocation6 + $0x700] sm:$0xff]
    %v4310 = vld [vmem:[#allocation6 + $0x710] sm:$0xff]
    %v4311 = vld [vmem:[#allocation6 + $0x720] sm:$0xff]
    %v4312 = vld [vmem:[#allocation6 + $0x730] sm:$0xff]
    %v4313 = vld [vmem:[#allocation6 + $0x740] sm:$0xff]
    %v4314 = vld [vmem:[#allocation6 + $0x750] ss:$0 sm:$0xff]
    %4315 = vmatprep.subr.mxu0 0.0
    %4316 = vmatpush1.msra.mxu0 %v4282
    %4317 = vmatprep.subr.mxu0 0.0
    %4318 = vmatpush1.msra.mxu0 %v4283
    %4319 = vmatprep.subr.mxu0 0.0
    %4320 = vmatpush1.msra.mxu0 %v4284
    %4321 = vmatprep.subr.mxu0 0.0
    %4322 = vmatpush1.msra.mxu0 %v4285
    %4323 = vmatprep.subr.mxu0 0.0
    %4324 = vmatpush1.msra.mxu0 %v4286
    %4325 = vmatprep.subr.mxu0 0.0
    %4326 = vmatpush1.msra.mxu0 %v4287
    %4327 = vmatprep.subr.mxu0 0.0
    %4328 = vmatpush1.msra.mxu0 %v4288
    %4329 = vmatprep.subr.mxu0 0.0
    %4330 = vmatpush1.msra.mxu0 %v4289
    %4331 = vmatprep.subr.mxu0 0.0
    %4332 = vmatpush1.msra.mxu0 %v4290
    %4333 = vmatprep.subr.mxu0 0.0
    %4334 = vmatpush1.msra.mxu0 %v4291
    %4335 = vmatprep.subr.mxu0 0.0
    %4336 = vmatpush1.msra.mxu0 %v4292
    %4337 = vmatprep.subr.mxu0 0.0
    %4338 = vmatpush1.msra.mxu0 %v4293
    %4339 = vmatprep.subr.mxu0 0.0
    %4340 = vmatpush1.msra.mxu0 %v4294
    %4341 = vmatprep.subr.mxu0 0.0
    %4342 = vmatpush1.msra.mxu0 %v4295
    %4343 = vmatprep.subr.mxu0 0.0
    %4344 = vmatpush1.msra.mxu0 %v4296
    %4345 = vmatprep.subr.mxu0 0.0
    %4346 = vmatpush1.msra.mxu0 %v4297
    %4347 = vmatprep.subr.mxu0 0.0
    %4348 = vmatpush1.msra.mxu0 %v4298
    %4349 = vmatprep.subr.mxu0 0.0
    %4350 = vmatpush1.msra.mxu0 %v4299
    %4351 = vmatprep.subr.mxu0 0.0
    %4352 = vmatpush1.msra.mxu0 %v4300
    %4353 = vmatprep.subr.mxu0 0.0
    %4354 = vmatpush1.msra.mxu0 %v4301
    %4355 = vmatprep.subr.mxu0 0.0
    %4356 = vmatpush1.msra.mxu0 %v4302
    %4357 = vmatprep.subr.mxu0 0.0
    %4358 = vmatpush1.msra.mxu0 %v4303
    %4359 = vmatprep.subr.mxu0 0.0
    %4360 = vmatpush1.msra.mxu0 %v4304
    %4361 = vmatprep.subr.mxu0 0.0
    %4362 = vmatpush1.msra.mxu0 %v4305
    %4363 = vmatprep.subr.mxu0 0.0
    %4364 = vmatpush1.msra.mxu0 %v4306
    %4365 = vmatprep.subr.mxu0 0.0
    %4366 = vmatpush1.msra.mxu0 %v4307
    %4367 = vmatprep.subr.mxu0 0.0
    %4368 = vmatpush1.msra.mxu0 %v4308
    %4369 = vmatprep.subr.mxu0 0.0
    %4370 = vmatpush1.msra.mxu0 %v4309
    %4371 = vmatprep.subr.mxu0 0.0
    %4372 = vmatpush1.msra.mxu0 %v4310
    %4373 = vmatprep.subr.mxu0 0.0
    %4374 = vmatpush1.msra.mxu0 %v4311
    %4375 = vmatprep.subr.mxu0 0.0
    %4376 = vmatpush1.msra.mxu0 %v4312
    %4377 = vmatprep.subr.mxu0 0.0
    %4378 = vmatpush1.msra.mxu0 %v4313
    %4379 = vmatprep.mubr.f32.mxu0 %v4281
    %4380 = vmatmul.mubr.f32.gmra.mrb[0].mxu0 %v4280
    %v4381 = vpop.f32.mrb[0].mxu0
    %v4382 = vadd.f32 %v4314, %v4381
    %v4383 = vpop.f32.mrb[0].mxu0
    %4384 = vdwg.mxu0
    %v4385 = vmax.f32 %v4382, 0.0
    %v4386 = vld [vmem:[#allocation6 + $0x760] sm:$0xff]
    %v4387 = vld [vmem:[#allocation6 + $0x770] sm:$0xff]
    %v4388 = vld [vmem:[#allocation6 + $0x780] sm:$0xff]
    %v4389 = vld [vmem:[#allocation6 + $0x790] sm:$0xff]
    %v4390 = vld [vmem:[#allocation6 + $0x7a0] sm:$0xff]
    %v4391 = vld [vmem:[#allocation6 + $0x7b0] sm:$0xff]
    %v4392 = vld [vmem:[#allocation6 + $0x7c0] sm:$0xff]
    %v4393 = vld [vmem:[#allocation6 + $0x7d0] sm:$0xff]
    %v4394 = vld [vmem:[#allocation6 + $0x7e0] sm:$0xff]
    %v4395 = vld [vmem:[#allocation6 + $0x7f0] sm:$0xff]
    %v4396 = vld [vmem:[#allocation6 + $0x800] sm:$0xff]
    %v4397 = vld [vmem:[#allocation6 + $0x810] sm:$0xff]
    %v4398 = vld [vmem:[#allocation6 + $0x820] sm:$0xff]
    %v4399 = vld [vmem:[#allocation6 + $0x830] sm:$0xff]
    %v4400 = vld [vmem:[#allocation6 + $0x840] sm:$0xff]
    %v4401 = vld [vmem:[#allocation6 + $0x850] sm:$0xff]
    %v4402 = vld [vmem:[#allocation6 + $0x860] ss:$0 sm:$0xff]
    %4403 = vmatprep.subr.mxu0 0.0
    %4404 = vmatpush1.msra.mxu0 %v4386
    %4405 = vmatprep.subr.mxu0 0.0
    %4406 = vmatpush1.msra.mxu0 %v4387
    %4407 = vmatprep.subr.mxu0 0.0
    %4408 = vmatpush1.msra.mxu0 %v4388
    %4409 = vmatprep.subr.mxu0 0.0
    %4410 = vmatpush1.msra.mxu0 %v4389
    %4411 = vmatprep.subr.mxu0 0.0
    %4412 = vmatpush1.msra.mxu0 %v4390
    %4413 = vmatprep.subr.mxu0 0.0
    %4414 = vmatpush1.msra.mxu0 %v4391
    %4415 = vmatprep.subr.mxu0 0.0
    %4416 = vmatpush1.msra.mxu0 %v4392
    %4417 = vmatprep.subr.mxu0 0.0
    %4418 = vmatpush1.msra.mxu0 %v4393
    %4419 = vmatprep.subr.mxu0 0.0
    %4420 = vmatpush1.msra.mxu0 %v4394
    %4421 = vmatprep.subr.mxu0 0.0
    %4422 = vmatpush1.msra.mxu0 %v4395
    %4423 = vmatprep.subr.mxu0 0.0
    %4424 = vmatpush1.msra.mxu0 %v4396
    %4425 = vmatprep.subr.mxu0 0.0
    %4426 = vmatpush1.msra.mxu0 %v4397
    %4427 = vmatprep.subr.mxu0 0.0
    %4428 = vmatpush1.msra.mxu0 %v4398
    %4429 = vmatprep.subr.mxu0 0.0
    %4430 = vmatpush1.msra.mxu0 %v4399
    %4431 = vmatprep.subr.mxu0 0.0
    %4432 = vmatpush1.msra.mxu0 %v4400
    %4433 = vmatprep.subr.mxu0 0.0
    %4434 = vmatpush1.msra.mxu0 %v4401
    %4435 = vmatprep.subr.mxu0 0.0
    %4436 = vmatpush1.msra.mxu0 0.0
    %4437 = vmatprep.subr.mxu0 0.0
    %4438 = vmatpush1.msra.mxu0 0.0
    %4439 = vmatprep.subr.mxu0 0.0
    %4440 = vmatpush1.msra.mxu0 0.0
    %4441 = vmatprep.subr.mxu0 0.0
    %4442 = vmatpush1.msra.mxu0 0.0
    %4443 = vmatprep.subr.mxu0 0.0
    %4444 = vmatpush1.msra.mxu0 0.0
    %4445 = vmatprep.subr.mxu0 0.0
    %4446 = vmatpush1.msra.mxu0 0.0
    %4447 = vmatprep.subr.mxu0 0.0
    %4448 = vmatpush1.msra.mxu0 0.0
    %4449 = vmatprep.subr.mxu0 0.0
    %4450 = vmatpush1.msra.mxu0 0.0
    %4451 = vmatprep.subr.mxu0 0.0
    %4452 = vmatpush1.msra.mxu0 0.0
    %4453 = vmatprep.subr.mxu0 0.0
    %4454 = vmatpush1.msra.mxu0 0.0
    %4455 = vmatprep.subr.mxu0 0.0
    %4456 = vmatpush1.msra.mxu0 0.0
    %4457 = vmatprep.subr.mxu0 0.0
    %4458 = vmatpush1.msra.mxu0 0.0
    %4459 = vmatprep.subr.mxu0 0.0
    %4460 = vmatpush1.msra.mxu0 0.0
    %4461 = vmatprep.subr.mxu0 0.0
    %4462 = vmatpush1.msra.mxu0 0.0
    %4463 = vmatprep.subr.mxu0 0.0
    %4464 = vmatpush1.msra.mxu0 0.0
    %4465 = vmatprep.subr.mxu0 0.0
    %4466 = vmatpush1.msra.mxu0 0.0
    %4467 = vmatprep.mubr.f32.mxu0 0.0
    %4468 = vmatmul.mubr.f32.gmra.mrb[0].mxu0 %v4385
    %v4469 = vpop.f32.mrb[0].mxu0
    %v4470 = vadd.f32 %v4402, %v4469
    %v4471 = vpop.f32.mrb[0].mxu0
    %4472 = vdwg.mxu0
    %4473 = vst [vmem:[%s5] sm:$0xff] %v4470
    // Predicated region
    $region34: #{_forward_impl.1} parent=1 // pred_check
      _
    $region35: #{_forward_impl.1} parent=1 // pred_check_branch
      %4475 = sbr.rel (0) target = $region37
    $region36: #{_forward_impl.1} parent=1 // pred_region
      _
    $region37: #{_forward_impl.1} parent=1 // pred_fallthru
      _
    // Predicated region
    $region38: #{_forward_impl.1} parent=1 // pred_check
      _
    $region39: #{_forward_impl.1} parent=1 // pred_check_branch
      %4477 = sbr.rel (0) target = $region41
    $region40: #{_forward_impl.1} parent=1 // pred_region
      _
    $region41: #{_forward_impl.1} parent=1 // pred_fallthru
      _
    %4478 = vsyncpa [#allocation3], 1
    %4479 = vsyncpa [#allocation5], 1

</llo_original>
